<compile_context>
chip_gen: v7x
topology: tpu7x:2x2x1
jax: 0.10.0
libtpu: 0.0.40
codegen_flags: <defaults>
</compile_context>

<pallas_src>
import math

import jax
import jax.numpy as jnp
from jax import lax
from jax.experimental import pallas as pl
from jax.experimental.pallas import tpu as pltpu

GP = 128    # lane-padded per-gate width (each gate gets its own 128-lane slab)
VPAD = 128  # lane-padded vocab width for the output projection
KPAD = 128  # lane-padded one-hot / embedding-row (K) dimension


# ---------------------------------------------------------------------------
# Pallas kernel factory (num_layers is static)
# ---------------------------------------------------------------------------
def _build_gru_kernel(num_layers):
    def _sigmoid(x):
        # exp -> EUP; approximate reciprocal -> EUP vrcp (keeps the divide off
        # the VPU Newton-iteration path on the serial per-timestep chain).
        return pl.reciprocal(1.0 + jnp.exp(-x), approx=True)

    def kernel(*refs):
        # inputs
        tok_ref, mask_ref, h0_ref = refs[0:3]
        layer_refs = refs[3:3 + 4 * num_layers]
        wout_ref, bout_ref = refs[3 + 4 * num_layers:5 + 4 * num_layers]
        # outputs
        logits_ref, hid_ref = refs[5 + 4 * num_layers:7 + 4 * num_layers]
        # scratch
        seq_ref = refs[7 + 4 * num_layers]   # (T*B, GP)   current layer outputs
        gx_ref = refs[8 + 4 * num_layers]    # (T*B, 3*GP) input->gates projection

        TB = tok_ref.shape[0]
        LB = h0_ref.shape[0]
        B = LB // num_layers
        T = TB // B

        # ---- embedding folded into layer 0's W_ih: lane-padded bf16 one-hot.
        tok = tok_ref[...]                                            # (TB, 1) i32
        onehot = (tok == lax.broadcasted_iota(jnp.int32, (TB, KPAD), 1)
                  ).astype(jnp.bfloat16)                              # (TB, KPAD)

        # ---- GRU layers (Python-unrolled; num_layers is small/static) ----
        for l in range(num_layers):
            wih_ref, bih_ref, whh_ref, bhh_ref = layer_refs[4 * l:4 * l + 4]

            # Batched input->gates projection over ALL timesteps (M = T*B),
            # stored to VMEM scratch so the unrolled t-loop doesn't keep the
            # (TB, 3*GP) slab live in vregs.
            lhs = onehot if l == 0 else seq_ref[...].astype(jnp.bfloat16)
            gx_ref[...] = (jnp.dot(lhs, wih_ref[...],
                                   preferred_element_type=jnp.float32)
                           + bih_ref[...])                            # (TB, 3GP)

            whh = whh_ref[...]                                        # (GP, 3GP) bf16
            bhh = bhh_ref[...]                                        # (1, 3GP)  f32
            h = h0_ref[l * B:(l + 1) * B, :]                          # (B, GP)   f32

            # TODO(synk): hold whh in MXU weight registers across the T loop
            # (pltpu.matmul_push_rhs / matmul_acc_lhs) once staging-register
            # constraints for a (128, 384) RHS are pinned down.
            for t in range(T):
                r0 = t * B
                gx_t = gx_ref[r0:r0 + B, :]                           # (B, 3GP)
                gh = jnp.dot(h.astype(jnp.bfloat16), whh,
                             preferred_element_type=jnp.float32) + bhh
                # gate slices are whole 128-lane slabs (tile-aligned, no XLU)
                r = _sigmoid(gx_t[:, 0:GP] + gh[:, 0:GP])
                z = _sigmoid(gx_t[:, GP:2 * GP] + gh[:, GP:2 * GP])
                n = jnp.tanh(gx_t[:, 2 * GP:3 * GP] + r * gh[:, 2 * GP:3 * GP])
                h_new = (1.0 - z) * n + z * h
                m = mask_ref[r0:r0 + B, :]                            # (B, GP)
                h = m * h_new + (1.0 - m) * h      # freeze past sequence end
                seq_ref[r0:r0 + B, :] = m * h_new  # lane-dense (B, 128) store

            hid_ref[l * B:(l + 1) * B, :] = h      # packed-GRU h_n per layer

        # ---- lane-dense output projection: (T*B, GP) @ (GP, VPAD) ----
        logits_ref[...] = (jnp.dot(seq_ref[...].astype(jnp.bfloat16),
                                   wout_ref[...],
                                   preferred_element_type=jnp.float32)
                           + bout_ref[...])

    return kernel


# ---------------------------------------------------------------------------
# One-time parameter preparation (hoisted out of the forward path)
# ---------------------------------------------------------------------------
def prepare_params(params, num_layers, vpad=VPAD):
    H = params["W_hh_0"].shape[1]
    V, _E = params["W_emb"].shape
    assert H <= GP and V <= KPAD and V <= vpad

    def pad_gate_cols(w_t):          # (in, 3H) -> (in, 3*GP), one slab per gate
        out = jnp.zeros((w_t.shape[0], 3 * GP), jnp.float32)
        for g in range(3):
            out = out.at[:, g * GP:g * GP + H].set(w_t[:, g * H:(g + 1) * H])
        return out

    def pad_rows(w, rows):           # zero-pad the contraction (row) dim
        return jnp.zeros((rows, w.shape[1]), jnp.float32).at[:w.shape[0], :].set(w)

    def pad_gate_bias(b):
        out = jnp.zeros((1, 3 * GP), jnp.float32)
        for g in range(3):
            out = out.at[0, g * GP:g * GP + H].set(b[g * H:(g + 1) * H])
        return out

    prep = {}
    for l in range(num_layers):
        if l == 0:
            # Fold the embedding into the first input projection (both linear,
            # so exact): one-hot @ (W_emb @ W_ih_0^T) == (one-hot @ W_emb) @ W_ih_0^T
            w_in = params["W_emb"] @ params["W_ih_0"].T               # (V, 3H) f32
            w_in = pad_rows(pad_gate_cols(w_in), KPAD)                # (KPAD, 3GP)
        else:
            w_in = pad_rows(pad_gate_cols(params[f"W_ih_{l}"].T), GP)  # (GP, 3GP)
        prep[f"W_ih_{l}"] = w_in.astype(jnp.bfloat16)
        prep[f"b_ih_{l}"] = pad_gate_bias(params[f"b_ih_{l}"])
        prep[f"W_hh_{l}"] = pad_rows(pad_gate_cols(params[f"W_hh_{l}"].T), GP
                                     ).astype(jnp.bfloat16)
        prep[f"b_hh_{l}"] = pad_gate_bias(params[f"b_hh_{l}"])
    prep["W_out"] = jnp.zeros((GP, vpad), jnp.float32).at[:H, :V].set(
        params["W_lin"].T).astype(jnp.bfloat16)
    prep["b_out"] = jnp.zeros((1, vpad), jnp.float32).at[0, :V].set(
        params["b_lin"].astype(jnp.float32))
    return prep


# ---------------------------------------------------------------------------
# Forward wrapper (glue: flatten tokens, length mask, call kernel, un-pad)
# ---------------------------------------------------------------------------
def make_forward_fn(num_layers, vocab_size, hidden_size):
    kernel = _build_gru_kernel(num_layers)
    H = hidden_size

    @jax.jit
    def _forward(tokens, lengths, h0, prepared):
        T, B = tokens.shape

        tok_flat = tokens.reshape(T * B, 1).astype(jnp.int32)
        mask = (jnp.arange(T, dtype=jnp.int32)[:, None]
                < lengths.astype(jnp.int32)[None, :]).astype(jnp.float32)
        mask_flat = jnp.broadcast_to(mask.reshape(T * B, 1), (T * B, GP))
        h0_flat = jnp.zeros((num_layers * B, GP), jnp.float32).at[:, :H].set(
            h0.reshape(num_layers * B, H).astype(jnp.float32))

        args = [tok_flat, mask_flat, h0_flat]
        for l in range(num_layers):
            args += [prepared[f"W_ih_{l}"], prepared[f"b_ih_{l}"],
                     prepared[f"W_hh_{l}"], prepared[f"b_hh_{l}"]]
        args += [prepared["W_out"], prepared["b_out"]]

        logits_flat, hid_flat = pl.pallas_call(
            kernel,
            out_shape=(
                jax.ShapeDtypeStruct((T * B, VPAD), jnp.float32),
                jax.ShapeDtypeStruct((num_layers * B, GP), jnp.float32),
            ),
            scratch_shapes=[pltpu.VMEM((T * B, GP), jnp.float32),        # seq
                            pltpu.VMEM((T * B, 3 * GP), jnp.float32)],   # gx
            compiler_params=pltpu.CompilerParams(
                vmem_limit_bytes=32 * 1024 * 1024),
        )(*args)

        logits = logits_flat.reshape(T, B, VPAD)[:, :, :vocab_size]
        hiddens = hid_flat[:, :H].reshape(num_layers, B, H)
        # td.Categorical(logits=logits) is just a wrapper around these logits.
        return logits, lengths, hiddens

    def forward(tokens, lengths, prepared, hiddens=None):
        T, B = tokens.shape
        if hiddens is None:
            hiddens = jnp.zeros((num_layers, B, H), jnp.float32)
        return _forward(tokens, lengths, hiddens, prepared)

    return forward


# ---------------------------------------------------------------------------
# Pure-JAX f32 reference (mirrors PyTorch packed-GRU semantics)
# ---------------------------------------------------------------------------
def rnn_policy_forward_ref(tokens, lengths, params, num_layers, hiddens=None):
    T, B = tokens.shape
    H = params["W_hh_0"].shape[1]
    if hiddens is None:
        hiddens = jnp.zeros((num_layers, B, H), jnp.float32)
    emb = params["W_emb"][tokens]                                      # (T, B, E)
    mask = (jnp.arange(T)[:, None] < lengths[None, :]).astype(jnp.float32)
    x = emb
    h_finals = []
    for l in range(num_layers):
        Wih, Whh = params[f"W_ih_{l}"], params[f"W_hh_{l}"]
        bih, bhh = params[f"b_ih_{l}"], params[f"b_hh_{l}"]
        h = hiddens[l]
        outs = []
        for t in range(T):
            gx = x[t] @ Wih.T + bih
            gh = h @ Whh.T + bhh
            r = jax.nn.sigmoid(gx[:, :H] + gh[:, :H])
            z = jax.nn.sigmoid(gx[:, H:2 * H] + gh[:, H:2 * H])
            n = jnp.tanh(gx[:, 2 * H:] + r * gh[:, 2 * H:])
            h_new = (1.0 - z) * n + z * h
            m = mask[t][:, None]
            h = m * h_new + (1.0 - m) * h
            outs.append(m * h_new)
        x = jnp.stack(outs, 0)
        h_finals.append(h)
    logits = x @ params["W_lin"].T + params["b_lin"]
    return logits, lengths, jnp.stack(h_finals, 0)


# ---------------------------------------------------------------------------
# Deterministic parameter construction (PyTorch-like shapes / init)
# ---------------------------------------------------------------------------
def make_params(key, vocab_size, embedding_size, hidden_size, num_layers, pad_idx):
    n_keys = 1 + 4 * num_layers + 2
    ks = list(jax.random.split(key, n_keys))
    params = {}
    W_emb = 0.1 * jax.random.normal(ks.pop(), (vocab_size, embedding_size),
                                    jnp.float32)
    params["W_emb"] = W_emb.at[pad_idx].set(0.0)       # padding_idx => zero row
    bound = 1.0 / math.sqrt(hidden_size)
    for l in range(num_layers):
        in_f = embedding_size if l == 0 else hidden_size
        params[f"W_ih_{l}"] = jax.random.uniform(
            ks.pop(), (3 * hidden_size, in_f), jnp.float32, -bound, bound)
        params[f"W_hh_{l}"] = jax.random.uniform(
            ks.pop(), (3 * hidden_size, hidden_size), jnp.float32, -bound, bound)
        params[f"b_ih_{l}"] = jax.random.uniform(
            ks.pop(), (3 * hidden_size,), jnp.float32, -bound, bound)
        params[f"b_hh_{l}"] = jax.random.uniform(
            ks.pop(), (3 * hidden_size,), jnp.float32, -bound, bound)
    params["W_lin"] = jax.random.uniform(
        ks.pop(), (vocab_size, hidden_size), jnp.float32, -bound, bound)
    params["b_lin"] = jax.random.uniform(
        ks.pop(), (vocab_size,), jnp.float32, -bound, bound)
    return params


if __name__ == "__main__":
    VOCAB_SIZE = 16     # len(vocab)
    PAD_IDX = 0         # vocab.pad
    EMB = 8             # embedding_size
    HIDDEN = 32         # hidden_size
    NUM_LAYERS = 2      # num_layers
    SEQ_LEN = 8         # T (seq-first layout, like nn.GRU default)
    BATCH = 8

    key = jax.random.PRNGKey(0)
    k_params, k_tokens = jax.random.split(key)
    params = make_params(k_params, VOCAB_SIZE, EMB, HIDDEN, NUM_LAYERS, PAD_IDX)
    prepared = prepare_params(params, NUM_LAYERS)
    forward = make_forward_fn(NUM_LAYERS, VOCAB_SIZE, HIDDEN)

    tokens = jax.random.randint(k_tokens, (SEQ_LEN, BATCH), 0, VOCAB_SIZE,
                                dtype=jnp.int32)
    lengths = jnp.array([8, 8, 5, 3, 8, 1, 7, 8], dtype=jnp.int32)  # max == T

    logits, lengths_out, hiddens = forward(tokens, lengths, prepared, None)
    logits = jax.block_until_ready(logits)
    hiddens = jax.block_until_ready(hiddens)

    ref_logits, _, ref_hiddens = rnn_policy_forward_ref(
        tokens, lengths, params, NUM_LAYERS)

    assert logits.shape == (SEQ_LEN, BATCH, VOCAB_SIZE)
    assert hiddens.shape == (NUM_LAYERS, BATCH, HIDDEN)
    # bf16 MXU operands with f32 accumulation (+ approx vrcp in sigmoid)
    # => loosened tolerance vs the f32 reference.
    assert jnp.allclose(logits, ref_logits, atol=5e-2, rtol=5e-2), (
        "Pallas logits do not match reference")
    assert jnp.allclose(hiddens, ref_hiddens, atol=5e-2, rtol=5e-2), (
        "Pallas hidden states do not match reference")

    print("KERNEL_OK")
</pallas_src>

<mosaic_0001>
module attributes {stable_mosaic.version = 11 : i64} {
  func.func @kernel(%arg0: memref<64x1xi32, #tpu.memory_space<vmem>>, %arg1: memref<64x128xf32, #tpu.memory_space<vmem>>, %arg2: memref<16x128xf32, #tpu.memory_space<vmem>>, %arg3: memref<128x384xbf16, #tpu.memory_space<vmem>>, %arg4: memref<1x384xf32, #tpu.memory_space<vmem>>, %arg5: memref<128x384xbf16, #tpu.memory_space<vmem>>, %arg6: memref<1x384xf32, #tpu.memory_space<vmem>>, %arg7: memref<128x384xbf16, #tpu.memory_space<vmem>>, %arg8: memref<1x384xf32, #tpu.memory_space<vmem>>, %arg9: memref<128x384xbf16, #tpu.memory_space<vmem>>, %arg10: memref<1x384xf32, #tpu.memory_space<vmem>>, %arg11: memref<128x128xbf16, #tpu.memory_space<vmem>>, %arg12: memref<1x128xf32, #tpu.memory_space<vmem>>, %arg13: memref<64x128xf32, #tpu.memory_space<vmem>>, %arg14: memref<16x128xf32, #tpu.memory_space<vmem>>, %arg15: memref<64x128xf32, #tpu.memory_space<vmem>>, %arg16: memref<64x384xf32, #tpu.memory_space<vmem>>) attributes {dimension_semantics = [], scalar_prefetch = 0 : i64, scratch_operands = 2 : i64, tpu.core_type = #tpu.core_type<tc>} {
    %c0 = arith.constant 0 : index
    %c0_0 = arith.constant 0 : index
    %0 = vector.load %arg0[%c0, %c0_0] : memref<64x1xi32, #tpu.memory_space<vmem>>, vector<64x1xi32>
    %1 = tpu.iota {dimensions = array<i32: 1>} : vector<64x128xi32>
    %2 = vector.broadcast %0 : vector<64x1xi32> to vector<64x128xi32>
    %3 = arith.cmpi eq, %2, %1 : vector<64x128xi32>
    %4 = arith.extui %3 : vector<64x128xi1> to vector<64x128xi32>
    %5 = arith.sitofp %4 : vector<64x128xi32> to vector<64x128xf32>
    %6 = arith.truncf %5 : vector<64x128xf32> to vector<64x128xbf16>
    %c0_1 = arith.constant 0 : index
    %c0_2 = arith.constant 0 : index
    %7 = vector.load %arg3[%c0_1, %c0_2] : memref<128x384xbf16, #tpu.memory_space<vmem>>, vector<128x384xbf16>
    %cst = arith.constant dense<0.000000e+00> : vector<64x384xf32>
    %8 = tpu.matmul %6, %7, %cst {dimension_numbers = #tpu.dot_dimension_numbers<[1], [0], [0], [1], [0, 0, 1, 1], [], []>} : vector<64x128xbf16>, vector<128x384xbf16>, vector<64x384xf32> -> vector<64x384xf32>
    %c0_3 = arith.constant 0 : index
    %c0_4 = arith.constant 0 : index
    %9 = vector.load %arg4[%c0_3, %c0_4] : memref<1x384xf32, #tpu.memory_space<vmem>>, vector<1x384xf32>
    %10 = vector.broadcast %9 : vector<1x384xf32> to vector<64x384xf32>
    %11 = arith.addf %8, %10 : vector<64x384xf32>
    %c0_5 = arith.constant 0 : index
    %c0_6 = arith.constant 0 : index
    %12 = vector.load %arg16[%c0_5, %c0_6] : memref<64x384xf32, #tpu.memory_space<vmem>>, vector<64x384xf32>
    tpu.vector_store %arg16[%c0_5, %c0_6], %11 {strides = array<i32>} : memref<64x384xf32, #tpu.memory_space<vmem>>, vector<64x384xf32>,
    %c0_7 = arith.constant 0 : index
    %c0_8 = arith.constant 0 : index
    %13 = vector.load %arg5[%c0_7, %c0_8] : memref<128x384xbf16, #tpu.memory_space<vmem>>, vector<128x384xbf16>
    %c0_9 = arith.constant 0 : index
    %c0_10 = arith.constant 0 : index
    %14 = vector.load %arg6[%c0_9, %c0_10] : memref<1x384xf32, #tpu.memory_space<vmem>>, vector<1x384xf32>
    %c0_11 = arith.constant 0 : index
    %c0_12 = arith.constant 0 : index
    %15 = vector.load %arg2[%c0_11, %c0_12] : memref<16x128xf32, #tpu.memory_space<vmem>>, vector<8x128xf32>
    %c0_13 = arith.constant 0 : index
    %c0_14 = arith.constant 0 : index
    %16 = vector.load %arg16[%c0_13, %c0_14] : memref<64x384xf32, #tpu.memory_space<vmem>>, vector<8x384xf32>
    %17 = arith.truncf %15 : vector<8x128xf32> to vector<8x128xbf16>
    %cst_15 = arith.constant dense<0.000000e+00> : vector<8x384xf32>
    %18 = tpu.matmul %17, %13, %cst_15 {dimension_numbers = #tpu.dot_dimension_numbers<[1], [0], [0], [1], [0, 0, 1, 1], [], []>} : vector<8x128xbf16>, vector<128x384xbf16>, vector<8x384xf32> -> vector<8x384xf32>
    %19 = vector.broadcast %14 : vector<1x384xf32> to vector<8x384xf32>
    %20 = arith.addf %18, %19 : vector<8x384xf32>
    %21 = vector.extract_strided_slice %16 {offsets = [0, 0], sizes = [8, 128], strides = [1, 1]} : vector<8x384xf32> to vector<8x128xf32>
    %22 = vector.extract_strided_slice %20 {offsets = [0, 0], sizes = [8, 128], strides = [1, 1]} : vector<8x384xf32> to vector<8x128xf32>
    %23 = arith.addf %21, %22 : vector<8x128xf32>
    %cst_16 = arith.constant 0.000000e+00 : f32
    %24 = vector.broadcast %cst_16 : f32 to vector<8x128xf32>
    %25 = arith.subf %24, %23 : vector<8x128xf32>
    %26 = math.exp %25 : vector<8x128xf32>
    %cst_17 = arith.constant 1.000000e+00 : f32
    %27 = vector.broadcast %cst_17 : f32 to vector<8x128xf32>
    %28 = arith.addf %27, %26 : vector<8x128xf32>
    %29 = tpu.reciprocal %28 {approx = true} : vector<8x128xf32> -> vector<8x128xf32>
    %30 = vector.extract_strided_slice %16 {offsets = [0, 128], sizes = [8, 128], strides = [1, 1]} : vector<8x384xf32> to vector<8x128xf32>
    %31 = vector.extract_strided_slice %20 {offsets = [0, 128], sizes = [8, 128], strides = [1, 1]} : vector<8x384xf32> to vector<8x128xf32>
    %32 = arith.addf %30, %31 : vector<8x128xf32>
    %cst_18 = arith.constant 0.000000e+00 : f32
    %33 = vector.broadcast %cst_18 : f32 to vector<8x128xf32>
    %34 = arith.subf %33, %32 : vector<8x128xf32>
    %35 = math.exp %34 : vector<8x128xf32>
    %cst_19 = arith.constant 1.000000e+00 : f32
    %36 = vector.broadcast %cst_19 : f32 to vector<8x128xf32>
    %37 = arith.addf %36, %35 : vector<8x128xf32>
    %38 = tpu.reciprocal %37 {approx = true} : vector<8x128xf32> -> vector<8x128xf32>
    %39 = vector.extract_strided_slice %16 {offsets = [0, 256], sizes = [8, 128], strides = [1, 1]} : vector<8x384xf32> to vector<8x128xf32>
    %40 = vector.extract_strided_slice %20 {offsets = [0, 256], sizes = [8, 128], strides = [1, 1]} : vector<8x384xf32> to vector<8x128xf32>
    %41 = arith.mulf %29, %40 : vector<8x128xf32>
    %42 = arith.addf %39, %41 : vector<8x128xf32>
    %43 = math.tanh %42 : vector<8x128xf32>
    %cst_20 = arith.constant 1.000000e+00 : f32
    %44 = vector.broadcast %cst_20 : f32 to vector<8x128xf32>
    %45 = arith.subf %44, %38 : vector<8x128xf32>
    %46 = arith.mulf %45, %43 : vector<8x128xf32>
    %47 = arith.mulf %38, %15 : vector<8x128xf32>
    %48 = arith.addf %46, %47 : vector<8x128xf32>
    %c0_21 = arith.constant 0 : index
    %c0_22 = arith.constant 0 : index
    %49 = vector.load %arg1[%c0_21, %c0_22] : memref<64x128xf32, #tpu.memory_space<vmem>>, vector<8x128xf32>
    %50 = arith.mulf %49, %48 : vector<8x128xf32>
    %cst_23 = arith.constant 1.000000e+00 : f32
    %51 = vector.broadcast %cst_23 : f32 to vector<8x128xf32>
    %52 = arith.subf %51, %49 : vector<8x128xf32>
    %53 = arith.mulf %52, %15 : vector<8x128xf32>
    %54 = arith.addf %50, %53 : vector<8x128xf32>
    %55 = arith.mulf %49, %48 : vector<8x128xf32>
    %c0_24 = arith.constant 0 : index
    %c0_25 = arith.constant 0 : index
    %56 = vector.load %arg15[%c0_24, %c0_25] : memref<64x128xf32, #tpu.memory_space<vmem>>, vector<8x128xf32>
    tpu.vector_store %arg15[%c0_24, %c0_25], %55 {strides = array<i32>} : memref<64x128xf32, #tpu.memory_space<vmem>>, vector<8x128xf32>,
    %c8 = arith.constant 8 : index
    %c0_26 = arith.constant 0 : index
    %57 = vector.load %arg16[%c8, %c0_26] : memref<64x384xf32, #tpu.memory_space<vmem>>, vector<8x384xf32>
    %58 = arith.truncf %54 : vector<8x128xf32> to vector<8x128xbf16>
    %cst_27 = arith.constant dense<0.000000e+00> : vector<8x384xf32>
    %59 = tpu.matmul %58, %13, %cst_27 {dimension_numbers = #tpu.dot_dimension_numbers<[1], [0], [0], [1], [0, 0, 1, 1], [], []>} : vector<8x128xbf16>, vector<128x384xbf16>, vector<8x384xf32> -> vector<8x384xf32>
    %60 = vector.broadcast %14 : vector<1x384xf32> to vector<8x384xf32>
    %61 = arith.addf %59, %60 : vector<8x384xf32>
    %62 = vector.extract_strided_slice %57 {offsets = [0, 0], sizes = [8, 128], strides = [1, 1]} : vector<8x384xf32> to vector<8x128xf32>
    %63 = vector.extract_strided_slice %61 {offsets = [0, 0], sizes = [8, 128], strides = [1, 1]} : vector<8x384xf32> to vector<8x128xf32>
    %64 = arith.addf %62, %63 : vector<8x128xf32>
    %cst_28 = arith.constant 0.000000e+00 : f32
    %65 = vector.broadcast %cst_28 : f32 to vector<8x128xf32>
    %66 = arith.subf %65, %64 : vector<8x128xf32>
    %67 = math.exp %66 : vector<8x128xf32>
    %cst_29 = arith.constant 1.000000e+00 : f32
    %68 = vector.broadcast %cst_29 : f32 to vector<8x128xf32>
    %69 = arith.addf %68, %67 : vector<8x128xf32>
    %70 = tpu.reciprocal %69 {approx = true} : vector<8x128xf32> -> vector<8x128xf32>
    %71 = vector.extract_strided_slice %57 {offsets = [0, 128], sizes = [8, 128], strides = [1, 1]} : vector<8x384xf32> to vector<8x128xf32>
    %72 = vector.extract_strided_slice %61 {offsets = [0, 128], sizes = [8, 128], strides = [1, 1]} : vector<8x384xf32> to vector<8x128xf32>
    %73 = arith.addf %71, %72 : vector<8x128xf32>
    %cst_30 = arith.constant 0.000000e+00 : f32
    %74 = vector.broadcast %cst_30 : f32 to vector<8x128xf32>
    %75 = arith.subf %74, %73 : vector<8x128xf32>
    %76 = math.exp %75 : vector<8x128xf32>
    %cst_31 = arith.constant 1.000000e+00 : f32
    %77 = vector.broadcast %cst_31 : f32 to vector<8x128xf32>
    %78 = arith.addf %77, %76 : vector<8x128xf32>
    %79 = tpu.reciprocal %78 {approx = true} : vector<8x128xf32> -> vector<8x128xf32>
    %80 = vector.extract_strided_slice %57 {offsets = [0, 256], sizes = [8, 128], strides = [1, 1]} : vector<8x384xf32> to vector<8x128xf32>
    %81 = vector.extract_strided_slice %61 {offsets = [0, 256], sizes = [8, 128], strides = [1, 1]} : vector<8x384xf32> to vector<8x128xf32>
    %82 = arith.mulf %70, %81 : vector<8x128xf32>
    %83 = arith.addf %80, %82 : vector<8x128xf32>
    %84 = math.tanh %83 : vector<8x128xf32>
    %cst_32 = arith.constant 1.000000e+00 : f32
    %85 = vector.broadcast %cst_32 : f32 to vector<8x128xf32>
    %86 = arith.subf %85, %79 : vector<8x128xf32>
    %87 = arith.mulf %86, %84 : vector<8x128xf32>
    %88 = arith.mulf %79, %54 : vector<8x128xf32>
    %89 = arith.addf %87, %88 : vector<8x128xf32>
    %c8_33 = arith.constant 8 : index
    %c0_34 = arith.constant 0 : index
    %90 = vector.load %arg1[%c8_33, %c0_34] : memref<64x128xf32, #tpu.memory_space<vmem>>, vector<8x128xf32>
    %91 = arith.mulf %90, %89 : vector<8x128xf32>
    %cst_35 = arith.constant 1.000000e+00 : f32
    %92 = vector.broadcast %cst_35 : f32 to vector<8x128xf32>
    %93 = arith.subf %92, %90 : vector<8x128xf32>
    %94 = arith.mulf %93, %54 : vector<8x128xf32>
    %95 = arith.addf %91, %94 : vector<8x128xf32>
    %96 = arith.mulf %90, %89 : vector<8x128xf32>
    %c8_36 = arith.constant 8 : index
    %c0_37 = arith.constant 0 : index
    %97 = vector.load %arg15[%c8_36, %c0_37] : memref<64x128xf32, #tpu.memory_space<vmem>>, vector<8x128xf32>
    tpu.vector_store %arg15[%c8_36, %c0_37], %96 {strides = array<i32>} : memref<64x128xf32, #tpu.memory_space<vmem>>, vector<8x128xf32>,
    %c16 = arith.constant 16 : index
    %c0_38 = arith.constant 0 : index
    %98 = vector.load %arg16[%c16, %c0_38] : memref<64x384xf32, #tpu.memory_space<vmem>>, vector<8x384xf32>
    %99 = arith.truncf %95 : vector<8x128xf32> to vector<8x128xbf16>
    %cst_39 = arith.constant dense<0.000000e+00> : vector<8x384xf32>
    %100 = tpu.matmul %99, %13, %cst_39 {dimension_numbers = #tpu.dot_dimension_numbers<[1], [0], [0], [1], [0, 0, 1, 1], [], []>} : vector<8x128xbf16>, vector<128x384xbf16>, vector<8x384xf32> -> vector<8x384xf32>
    %101 = vector.broadcast %14 : vector<1x384xf32> to vector<8x384xf32>
    %102 = arith.addf %100, %101 : vector<8x384xf32>
    %103 = vector.extract_strided_slice %98 {offsets = [0, 0], sizes = [8, 128], strides = [1, 1]} : vector<8x384xf32> to vector<8x128xf32>
    %104 = vector.extract_strided_slice %102 {offsets = [0, 0], sizes = [8, 128], strides = [1, 1]} : vector<8x384xf32> to vector<8x128xf32>
    %105 = arith.addf %103, %104 : vector<8x128xf32>
    %cst_40 = arith.constant 0.000000e+00 : f32
    %106 = vector.broadcast %cst_40 : f32 to vector<8x128xf32>
    %107 = arith.subf %106, %105 : vector<8x128xf32>
    %108 = math.exp %107 : vector<8x128xf32>
    %cst_41 = arith.constant 1.000000e+00 : f32
    %109 = vector.broadcast %cst_41 : f32 to vector<8x128xf32>
    %110 = arith.addf %109, %108 : vector<8x128xf32>
    %111 = tpu.reciprocal %110 {approx = true} : vector<8x128xf32> -> vector<8x128xf32>
    %112 = vector.extract_strided_slice %98 {offsets = [0, 128], sizes = [8, 128], strides = [1, 1]} : vector<8x384xf32> to vector<8x128xf32>
    %113 = vector.extract_strided_slice %102 {offsets = [0, 128], sizes = [8, 128], strides = [1, 1]} : vector<8x384xf32> to vector<8x128xf32>
    %114 = arith.addf %112, %113 : vector<8x128xf32>
    %cst_42 = arith.constant 0.000000e+00 : f32
    %115 = vector.broadcast %cst_42 : f32 to vector<8x128xf32>
    %116 = arith.subf %115, %114 : vector<8x128xf32>
    %117 = math.exp %116 : vector<8x128xf32>
    %cst_43 = arith.constant 1.000000e+00 : f32
    %118 = vector.broadcast %cst_43 : f32 to vector<8x128xf32>
    %119 = arith.addf %118, %117 : vector<8x128xf32>
    %120 = tpu.reciprocal %119 {approx = true} : vector<8x128xf32> -> vector<8x128xf32>
    %121 = vector.extract_strided_slice %98 {offsets = [0, 256], sizes = [8, 128], strides = [1, 1]} : vector<8x384xf32> to vector<8x128xf32>
    %122 = vector.extract_strided_slice %102 {offsets = [0, 256], sizes = [8, 128], strides = [1, 1]} : vector<8x384xf32> to vector<8x128xf32>
    %123 = arith.mulf %111, %122 : vector<8x128xf32>
    %124 = arith.addf %121, %123 : vector<8x128xf32>
    %125 = math.tanh %124 : vector<8x128xf32>
    %cst_44 = arith.constant 1.000000e+00 : f32
    %126 = vector.broadcast %cst_44 : f32 to vector<8x128xf32>
    %127 = arith.subf %126, %120 : vector<8x128xf32>
    %128 = arith.mulf %127, %125 : vector<8x128xf32>
    %129 = arith.mulf %120, %95 : vector<8x128xf32>
    %130 = arith.addf %128, %129 : vector<8x128xf32>
    %c16_45 = arith.constant 16 : index
    %c0_46 = arith.constant 0 : index
    %131 = vector.load %arg1[%c16_45, %c0_46] : memref<64x128xf32, #tpu.memory_space<vmem>>, vector<8x128xf32>
    %132 = arith.mulf %131, %130 : vector<8x128xf32>
    %cst_47 = arith.constant 1.000000e+00 : f32
    %133 = vector.broadcast %cst_47 : f32 to vector<8x128xf32>
    %134 = arith.subf %133, %131 : vector<8x128xf32>
    %135 = arith.mulf %134, %95 : vector<8x128xf32>
    %136 = arith.addf %132, %135 : vector<8x128xf32>
    %137 = arith.mulf %131, %130 : vector<8x128xf32>
    %c16_48 = arith.constant 16 : index
    %c0_49 = arith.constant 0 : index
    %138 = vector.load %arg15[%c16_48, %c0_49] : memref<64x128xf32, #tpu.memory_space<vmem>>, vector<8x128xf32>
    tpu.vector_store %arg15[%c16_48, %c0_49], %137 {strides = array<i32>} : memref<64x128xf32, #tpu.memory_space<vmem>>, vector<8x128xf32>,
    %c24 = arith.constant 24 : index
    %c0_50 = arith.constant 0 : index
    %139 = vector.load %arg16[%c24, %c0_50] : memref<64x384xf32, #tpu.memory_space<vmem>>, vector<8x384xf32>
    %140 = arith.truncf %136 : vector<8x128xf32> to vector<8x128xbf16>
    %cst_51 = arith.constant dense<0.000000e+00> : vector<8x384xf32>
    %141 = tpu.matmul %140, %13, %cst_51 {dimension_numbers = #tpu.dot_dimension_numbers<[1], [0], [0], [1], [0, 0, 1, 1], [], []>} : vector<8x128xbf16>, vector<128x384xbf16>, vector<8x384xf32> -> vector<8x384xf32>
    %142 = vector.broadcast %14 : vector<1x384xf32> to vector<8x384xf32>
    %143 = arith.addf %141, %142 : vector<8x384xf32>
    %144 = vector.extract_strided_slice %139 {offsets = [0, 0], sizes = [8, 128], strides = [1, 1]} : vector<8x384xf32> to vector<8x128xf32>
    %145 = vector.extract_strided_slice %143 {offsets = [0, 0], sizes = [8, 128], strides = [1, 1]} : vector<8x384xf32> to vector<8x128xf32>
    %146 = arith.addf %144, %145 : vector<8x128xf32>
    %cst_52 = arith.constant 0.000000e+00 : f32
    %147 = vector.broadcast %cst_52 : f32 to vector<8x128xf32>
    %148 = arith.subf %147, %146 : vector<8x128xf32>
    %149 = math.exp %148 : vector<8x128xf32>
    %cst_53 = arith.constant 1.000000e+00 : f32
    %150 = vector.broadcast %cst_53 : f32 to vector<8x128xf32>
    %151 = arith.addf %150, %149 : vector<8x128xf32>
    %152 = tpu.reciprocal %151 {approx = true} : vector<8x128xf32> -> vector<8x128xf32>
    %153 = vector.extract_strided_slice %139 {offsets = [0, 128], sizes = [8, 128], strides = [1, 1]} : vector<8x384xf32> to vector<8x128xf32>
    %154 = vector.extract_strided_slice %143 {offsets = [0, 128], sizes = [8, 128], strides = [1, 1]} : vector<8x384xf32> to vector<8x128xf32>
    %155 = arith.addf %153, %154 : vector<8x128xf32>
    %cst_54 = arith.constant 0.000000e+00 : f32
    %156 = vector.broadcast %cst_54 : f32 to vector<8x128xf32>
    %157 = arith.subf %156, %155 : vector<8x128xf32>
    %158 = math.exp %157 : vector<8x128xf32>
    %cst_55 = arith.constant 1.000000e+00 : f32
    %159 = vector.broadcast %cst_55 : f32 to vector<8x128xf32>
    %160 = arith.addf %159, %158 : vector<8x128xf32>
    %161 = tpu.reciprocal %160 {approx = true} : vector<8x128xf32> -> vector<8x128xf32>
    %162 = vector.extract_strided_slice %139 {offsets = [0, 256], sizes = [8, 128], strides = [1, 1]} : vector<8x384xf32> to vector<8x128xf32>
    %163 = vector.extract_strided_slice %143 {offsets = [0, 256], sizes = [8, 128], strides = [1, 1]} : vector<8x384xf32> to vector<8x128xf32>
    %164 = arith.mulf %152, %163 : vector<8x128xf32>
    %165 = arith.addf %162, %164 : vector<8x128xf32>
    %166 = math.tanh %165 : vector<8x128xf32>
    %cst_56 = arith.constant 1.000000e+00 : f32
    %167 = vector.broadcast %cst_56 : f32 to vector<8x128xf32>
    %168 = arith.subf %167, %161 : vector<8x128xf32>
    %169 = arith.mulf %168, %166 : vector<8x128xf32>
    %170 = arith.mulf %161, %136 : vector<8x128xf32>
    %171 = arith.addf %169, %170 : vector<8x128xf32>
    %c24_57 = arith.constant 24 : index
    %c0_58 = arith.constant 0 : index
    %172 = vector.load %arg1[%c24_57, %c0_58] : memref<64x128xf32, #tpu.memory_space<vmem>>, vector<8x128xf32>
    %173 = arith.mulf %172, %171 : vector<8x128xf32>
    %cst_59 = arith.constant 1.000000e+00 : f32
    %174 = vector.broadcast %cst_59 : f32 to vector<8x128xf32>
    %175 = arith.subf %174, %172 : vector<8x128xf32>
    %176 = arith.mulf %175, %136 : vector<8x128xf32>
    %177 = arith.addf %173, %176 : vector<8x128xf32>
    %178 = arith.mulf %172, %171 : vector<8x128xf32>
    %c24_60 = arith.constant 24 : index
    %c0_61 = arith.constant 0 : index
    %179 = vector.load %arg15[%c24_60, %c0_61] : memref<64x128xf32, #tpu.memory_space<vmem>>, vector<8x128xf32>
    tpu.vector_store %arg15[%c24_60, %c0_61], %178 {strides = array<i32>} : memref<64x128xf32, #tpu.memory_space<vmem>>, vector<8x128xf32>,
    %c32 = arith.constant 32 : index
    %c0_62 = arith.constant 0 : index
    %180 = vector.load %arg16[%c32, %c0_62] : memref<64x384xf32, #tpu.memory_space<vmem>>, vector<8x384xf32>
    %181 = arith.truncf %177 : vector<8x128xf32> to vector<8x128xbf16>
    %cst_63 = arith.constant dense<0.000000e+00> : vector<8x384xf32>
    %182 = tpu.matmul %181, %13, %cst_63 {dimension_numbers = #tpu.dot_dimension_numbers<[1], [0], [0], [1], [0, 0, 1, 1], [], []>} : vector<8x128xbf16>, vector<128x384xbf16>, vector<8x384xf32> -> vector<8x384xf32>
    %183 = vector.broadcast %14 : vector<1x384xf32> to vector<8x384xf32>
    %184 = arith.addf %182, %183 : vector<8x384xf32>
    %185 = vector.extract_strided_slice %180 {offsets = [0, 0], sizes = [8, 128], strides = [1, 1]} : vector<8x384xf32> to vector<8x128xf32>
    %186 = vector.extract_strided_slice %184 {offsets = [0, 0], sizes = [8, 128], strides = [1, 1]} : vector<8x384xf32> to vector<8x128xf32>
    %187 = arith.addf %185, %186 : vector<8x128xf32>
    %cst_64 = arith.constant 0.000000e+00 : f32
    %188 = vector.broadcast %cst_64 : f32 to vector<8x128xf32>
    %189 = arith.subf %188, %187 : vector<8x128xf32>
    %190 = math.exp %189 : vector<8x128xf32>
    %cst_65 = arith.constant 1.000000e+00 : f32
    %191 = vector.broadcast %cst_65 : f32 to vector<8x128xf32>
    %192 = arith.addf %191, %190 : vector<8x128xf32>
    %193 = tpu.reciprocal %192 {approx = true} : vector<8x128xf32> -> vector<8x128xf32>
    %194 = vector.extract_strided_slice %180 {offsets = [0, 128], sizes = [8, 128], strides = [1, 1]} : vector<8x384xf32> to vector<8x128xf32>
    %195 = vector.extract_strided_slice %184 {offsets = [0, 128], sizes = [8, 128], strides = [1, 1]} : vector<8x384xf32> to vector<8x128xf32>
    %196 = arith.addf %194, %195 : vector<8x128xf32>
    %cst_66 = arith.constant 0.000000e+00 : f32
    %197 = vector.broadcast %cst_66 : f32 to vector<8x128xf32>
    %198 = arith.subf %197, %196 : vector<8x128xf32>
    %199 = math.exp %198 : vector<8x128xf32>
    %cst_67 = arith.constant 1.000000e+00 : f32
    %200 = vector.broadcast %cst_67 : f32 to vector<8x128xf32>
    %201 = arith.addf %200, %199 : vector<8x128xf32>
    %202 = tpu.reciprocal %201 {approx = true} : vector<8x128xf32> -> vector<8x128xf32>
    %203 = vector.extract_strided_slice %180 {offsets = [0, 256], sizes = [8, 128], strides = [1, 1]} : vector<8x384xf32> to vector<8x128xf32>
    %204 = vector.extract_strided_slice %184 {offsets = [0, 256], sizes = [8, 128], strides = [1, 1]} : vector<8x384xf32> to vector<8x128xf32>
    %205 = arith.mulf %193, %204 : vector<8x128xf32>
    %206 = arith.addf %203, %205 : vector<8x128xf32>
    %207 = math.tanh %206 : vector<8x128xf32>
    %cst_68 = arith.constant 1.000000e+00 : f32
    %208 = vector.broadcast %cst_68 : f32 to vector<8x128xf32>
    %209 = arith.subf %208, %202 : vector<8x128xf32>
    %210 = arith.mulf %209, %207 : vector<8x128xf32>
    %211 = arith.mulf %202, %177 : vector<8x128xf32>
    %212 = arith.addf %210, %211 : vector<8x128xf32>
    %c32_69 = arith.constant 32 : index
    %c0_70 = arith.constant 0 : index
    %213 = vector.load %arg1[%c32_69, %c0_70] : memref<64x128xf32, #tpu.memory_space<vmem>>, vector<8x128xf32>
    %214 = arith.mulf %213, %212 : vector<8x128xf32>
    %cst_71 = arith.constant 1.000000e+00 : f32
    %215 = vector.broadcast %cst_71 : f32 to vector<8x128xf32>
    %216 = arith.subf %215, %213 : vector<8x128xf32>
    %217 = arith.mulf %216, %177 : vector<8x128xf32>
    %218 = arith.addf %214, %217 : vector<8x128xf32>
    %219 = arith.mulf %213, %212 : vector<8x128xf32>
    %c32_72 = arith.constant 32 : index
    %c0_73 = arith.constant 0 : index
    %220 = vector.load %arg15[%c32_72, %c0_73] : memref<64x128xf32, #tpu.memory_space<vmem>>, vector<8x128xf32>
    tpu.vector_store %arg15[%c32_72, %c0_73], %219 {strides = array<i32>} : memref<64x128xf32, #tpu.memory_space<vmem>>, vector<8x128xf32>,
    %c40 = arith.constant 40 : index
    %c0_74 = arith.constant 0 : index
    %221 = vector.load %arg16[%c40, %c0_74] : memref<64x384xf32, #tpu.memory_space<vmem>>, vector<8x384xf32>
    %222 = arith.truncf %218 : vector<8x128xf32> to vector<8x128xbf16>
    %cst_75 = arith.constant dense<0.000000e+00> : vector<8x384xf32>
    %223 = tpu.matmul %222, %13, %cst_75 {dimension_numbers = #tpu.dot_dimension_numbers<[1], [0], [0], [1], [0, 0, 1, 1], [], []>} : vector<8x128xbf16>, vector<128x384xbf16>, vector<8x384xf32> -> vector<8x384xf32>
    %224 = vector.broadcast %14 : vector<1x384xf32> to vector<8x384xf32>
    %225 = arith.addf %223, %224 : vector<8x384xf32>
    %226 = vector.extract_strided_slice %221 {offsets = [0, 0], sizes = [8, 128], strides = [1, 1]} : vector<8x384xf32> to vector<8x128xf32>
    %227 = vector.extract_strided_slice %225 {offsets = [0, 0], sizes = [8, 128], strides = [1, 1]} : vector<8x384xf32> to vector<8x128xf32>
    %228 = arith.addf %226, %227 : vector<8x128xf32>
    %cst_76 = arith.constant 0.000000e+00 : f32
    %229 = vector.broadcast %cst_76 : f32 to vector<8x128xf32>
    %230 = arith.subf %229, %228 : vector<8x128xf32>
    %231 = math.exp %230 : vector<8x128xf32>
    %cst_77 = arith.constant 1.000000e+00 : f32
    %232 = vector.broadcast %cst_77 : f32 to vector<8x128xf32>
    %233 = arith.addf %232, %231 : vector<8x128xf32>
    %234 = tpu.reciprocal %233 {approx = true} : vector<8x128xf32> -> vector<8x128xf32>
    %235 = vector.extract_strided_slice %221 {offsets = [0, 128], sizes = [8, 128], strides = [1, 1]} : vector<8x384xf32> to vector<8x128xf32>
    %236 = vector.extract_strided_slice %225 {offsets = [0, 128], sizes = [8, 128], strides = [1, 1]} : vector<8x384xf32> to vector<8x128xf32>
    %237 = arith.addf %235, %236 : vector<8x128xf32>
    %cst_78 = arith.constant 0.000000e+00 : f32
    %238 = vector.broadcast %cst_78 : f32 to vector<8x128xf32>
    %239 = arith.subf %238, %237 : vector<8x128xf32>
    %240 = math.exp %239 : vector<8x128xf32>
    %cst_79 = arith.constant 1.000000e+00 : f32
    %241 = vector.broadcast %cst_79 : f32 to vector<8x128xf32>
    %242 = arith.addf %241, %240 : vector<8x128xf32>
    %243 = tpu.reciprocal %242 {approx = true} : vector<8x128xf32> -> vector<8x128xf32>
    %244 = vector.extract_strided_slice %221 {offsets = [0, 256], sizes = [8, 128], strides = [1, 1]} : vector<8x384xf32> to vector<8x128xf32>
    %245 = vector.extract_strided_slice %225 {offsets = [0, 256], sizes = [8, 128], strides = [1, 1]} : vector<8x384xf32> to vector<8x128xf32>
    %246 = arith.mulf %234, %245 : vector<8x128xf32>
    %247 = arith.addf %244, %246 : vector<8x128xf32>
    %248 = math.tanh %247 : vector<8x128xf32>
    %cst_80 = arith.constant 1.000000e+00 : f32
    %249 = vector.broadcast %cst_80 : f32 to vector<8x128xf32>
    %250 = arith.subf %249, %243 : vector<8x128xf32>
    %251 = arith.mulf %250, %248 : vector<8x128xf32>
    %252 = arith.mulf %243, %218 : vector<8x128xf32>
    %253 = arith.addf %251, %252 : vector<8x128xf32>
    %c40_81 = arith.constant 40 : index
    %c0_82 = arith.constant 0 : index
    %254 = vector.load %arg1[%c40_81, %c0_82] : memref<64x128xf32, #tpu.memory_space<vmem>>, vector<8x128xf32>
    %255 = arith.mulf %254, %253 : vector<8x128xf32>
    %cst_83 = arith.constant 1.000000e+00 : f32
    %256 = vector.broadcast %cst_83 : f32 to vector<8x128xf32>
    %257 = arith.subf %256, %254 : vector<8x128xf32>
    %258 = arith.mulf %257, %218 : vector<8x128xf32>
    %259 = arith.addf %255, %258 : vector<8x128xf32>
    %260 = arith.mulf %254, %253 : vector<8x128xf32>
    %c40_84 = arith.constant 40 : index
    %c0_85 = arith.constant 0 : index
    %261 = vector.load %arg15[%c40_84, %c0_85] : memref<64x128xf32, #tpu.memory_space<vmem>>, vector<8x128xf32>
    tpu.vector_store %arg15[%c40_84, %c0_85], %260 {strides = array<i32>} : memref<64x128xf32, #tpu.memory_space<vmem>>, vector<8x128xf32>,
    %c48 = arith.constant 48 : index
    %c0_86 = arith.constant 0 : index
    %262 = vector.load %arg16[%c48, %c0_86] : memref<64x384xf32, #tpu.memory_space<vmem>>, vector<8x384xf32>
    %263 = arith.truncf %259 : vector<8x128xf32> to vector<8x128xbf16>
    %cst_87 = arith.constant dense<0.000000e+00> : vector<8x384xf32>
    %264 = tpu.matmul %263, %13, %cst_87 {dimension_numbers = #tpu.dot_dimension_numbers<[1], [0], [0], [1], [0, 0, 1, 1], [], []>} : vector<8x128xbf16>, vector<128x384xbf16>, vector<8x384xf32> -> vector<8x384xf32>
    %265 = vector.broadcast %14 : vector<1x384xf32> to vector<8x384xf32>
    %266 = arith.addf %264, %265 : vector<8x384xf32>
    %267 = vector.extract_strided_slice %262 {offsets = [0, 0], sizes = [8, 128], strides = [1, 1]} : vector<8x384xf32> to vector<8x128xf32>
    %268 = vector.extract_strided_slice %266 {offsets = [0, 0], sizes = [8, 128], strides = [1, 1]} : vector<8x384xf32> to vector<8x128xf32>
    %269 = arith.addf %267, %268 : vector<8x128xf32>
    %cst_88 = arith.constant 0.000000e+00 : f32
    %270 = vector.broadcast %cst_88 : f32 to vector<8x128xf32>
    %271 = arith.subf %270, %269 : vector<8x128xf32>
    %272 = math.exp %271 : vector<8x128xf32>
    %cst_89 = arith.constant 1.000000e+00 : f32
    %273 = vector.broadcast %cst_89 : f32 to vector<8x128xf32>
    %274 = arith.addf %273, %272 : vector<8x128xf32>
    %275 = tpu.reciprocal %274 {approx = true} : vector<8x128xf32> -> vector<8x128xf32>
    %276 = vector.extract_strided_slice %262 {offsets = [0, 128], sizes = [8, 128], strides = [1, 1]} : vector<8x384xf32> to vector<8x128xf32>
    %277 = vector.extract_strided_slice %266 {offsets = [0, 128], sizes = [8, 128], strides = [1, 1]} : vector<8x384xf32> to vector<8x128xf32>
    %278 = arith.addf %276, %277 : vector<8x128xf32>
    %cst_90 = arith.constant 0.000000e+00 : f32
    %279 = vector.broadcast %cst_90 : f32 to vector<8x128xf32>
    %280 = arith.subf %279, %278 : vector<8x128xf32>
    %281 = math.exp %280 : vector<8x128xf32>
    %cst_91 = arith.constant 1.000000e+00 : f32
    %282 = vector.broadcast %cst_91 : f32 to vector<8x128xf32>
    %283 = arith.addf %282, %281 : vector<8x128xf32>
    %284 = tpu.reciprocal %283 {approx = true} : vector<8x128xf32> -> vector<8x128xf32>
    %285 = vector.extract_strided_slice %262 {offsets = [0, 256], sizes = [8, 128], strides = [1, 1]} : vector<8x384xf32> to vector<8x128xf32>
    %286 = vector.extract_strided_slice %266 {offsets = [0, 256], sizes = [8, 128], strides = [1, 1]} : vector<8x384xf32> to vector<8x128xf32>
    %287 = arith.mulf %275, %286 : vector<8x128xf32>
    %288 = arith.addf %285, %287 : vector<8x128xf32>
    %289 = math.tanh %288 : vector<8x128xf32>
    %cst_92 = arith.constant 1.000000e+00 : f32
    %290 = vector.broadcast %cst_92 : f32 to vector<8x128xf32>
    %291 = arith.subf %290, %284 : vector<8x128xf32>
    %292 = arith.mulf %291, %289 : vector<8x128xf32>
    %293 = arith.mulf %284, %259 : vector<8x128xf32>
    %294 = arith.addf %292, %293 : vector<8x128xf32>
    %c48_93 = arith.constant 48 : index
    %c0_94 = arith.constant 0 : index
    %295 = vector.load %arg1[%c48_93, %c0_94] : memref<64x128xf32, #tpu.memory_space<vmem>>, vector<8x128xf32>
    %296 = arith.mulf %295, %294 : vector<8x128xf32>
    %cst_95 = arith.constant 1.000000e+00 : f32
    %297 = vector.broadcast %cst_95 : f32 to vector<8x128xf32>
    %298 = arith.subf %297, %295 : vector<8x128xf32>
    %299 = arith.mulf %298, %259 : vector<8x128xf32>
    %300 = arith.addf %296, %299 : vector<8x128xf32>
    %301 = arith.mulf %295, %294 : vector<8x128xf32>
    %c48_96 = arith.constant 48 : index
    %c0_97 = arith.constant 0 : index
    %302 = vector.load %arg15[%c48_96, %c0_97] : memref<64x128xf32, #tpu.memory_space<vmem>>, vector<8x128xf32>
    tpu.vector_store %arg15[%c48_96, %c0_97], %301 {strides = array<i32>} : memref<64x128xf32, #tpu.memory_space<vmem>>, vector<8x128xf32>,
    %c56 = arith.constant 56 : index
    %c0_98 = arith.constant 0 : index
    %303 = vector.load %arg16[%c56, %c0_98] : memref<64x384xf32, #tpu.memory_space<vmem>>, vector<8x384xf32>
    %304 = arith.truncf %300 : vector<8x128xf32> to vector<8x128xbf16>
    %cst_99 = arith.constant dense<0.000000e+00> : vector<8x384xf32>
    %305 = tpu.matmul %304, %13, %cst_99 {dimension_numbers = #tpu.dot_dimension_numbers<[1], [0], [0], [1], [0, 0, 1, 1], [], []>} : vector<8x128xbf16>, vector<128x384xbf16>, vector<8x384xf32> -> vector<8x384xf32>
    %306 = vector.broadcast %14 : vector<1x384xf32> to vector<8x384xf32>
    %307 = arith.addf %305, %306 : vector<8x384xf32>
    %308 = vector.extract_strided_slice %303 {offsets = [0, 0], sizes = [8, 128], strides = [1, 1]} : vector<8x384xf32> to vector<8x128xf32>
    %309 = vector.extract_strided_slice %307 {offsets = [0, 0], sizes = [8, 128], strides = [1, 1]} : vector<8x384xf32> to vector<8x128xf32>
    %310 = arith.addf %308, %309 : vector<8x128xf32>
    %cst_100 = arith.constant 0.000000e+00 : f32
    %311 = vector.broadcast %cst_100 : f32 to vector<8x128xf32>
    %312 = arith.subf %311, %310 : vector<8x128xf32>
    %313 = math.exp %312 : vector<8x128xf32>
    %cst_101 = arith.constant 1.000000e+00 : f32
    %314 = vector.broadcast %cst_101 : f32 to vector<8x128xf32>
    %315 = arith.addf %314, %313 : vector<8x128xf32>
    %316 = tpu.reciprocal %315 {approx = true} : vector<8x128xf32> -> vector<8x128xf32>
    %317 = vector.extract_strided_slice %303 {offsets = [0, 128], sizes = [8, 128], strides = [1, 1]} : vector<8x384xf32> to vector<8x128xf32>
    %318 = vector.extract_strided_slice %307 {offsets = [0, 128], sizes = [8, 128], strides = [1, 1]} : vector<8x384xf32> to vector<8x128xf32>
    %319 = arith.addf %317, %318 : vector<8x128xf32>
    %cst_102 = arith.constant 0.000000e+00 : f32
    %320 = vector.broadcast %cst_102 : f32 to vector<8x128xf32>
    %321 = arith.subf %320, %319 : vector<8x128xf32>
    %322 = math.exp %321 : vector<8x128xf32>
    %cst_103 = arith.constant 1.000000e+00 : f32
    %323 = vector.broadcast %cst_103 : f32 to vector<8x128xf32>
    %324 = arith.addf %323, %322 : vector<8x128xf32>
    %325 = tpu.reciprocal %324 {approx = true} : vector<8x128xf32> -> vector<8x128xf32>
    %326 = vector.extract_strided_slice %303 {offsets = [0, 256], sizes = [8, 128], strides = [1, 1]} : vector<8x384xf32> to vector<8x128xf32>
    %327 = vector.extract_strided_slice %307 {offsets = [0, 256], sizes = [8, 128], strides = [1, 1]} : vector<8x384xf32> to vector<8x128xf32>
    %328 = arith.mulf %316, %327 : vector<8x128xf32>
    %329 = arith.addf %326, %328 : vector<8x128xf32>
    %330 = math.tanh %329 : vector<8x128xf32>
    %cst_104 = arith.constant 1.000000e+00 : f32
    %331 = vector.broadcast %cst_104 : f32 to vector<8x128xf32>
    %332 = arith.subf %331, %325 : vector<8x128xf32>
    %333 = arith.mulf %332, %330 : vector<8x128xf32>
    %334 = arith.mulf %325, %300 : vector<8x128xf32>
    %335 = arith.addf %333, %334 : vector<8x128xf32>
    %c56_105 = arith.constant 56 : index
    %c0_106 = arith.constant 0 : index
    %336 = vector.load %arg1[%c56_105, %c0_106] : memref<64x128xf32, #tpu.memory_space<vmem>>, vector<8x128xf32>
    %337 = arith.mulf %336, %335 : vector<8x128xf32>
    %cst_107 = arith.constant 1.000000e+00 : f32
    %338 = vector.broadcast %cst_107 : f32 to vector<8x128xf32>
    %339 = arith.subf %338, %336 : vector<8x128xf32>
    %340 = arith.mulf %339, %300 : vector<8x128xf32>
    %341 = arith.addf %337, %340 : vector<8x128xf32>
    %342 = arith.mulf %336, %335 : vector<8x128xf32>
    %c56_108 = arith.constant 56 : index
    %c0_109 = arith.constant 0 : index
    %343 = vector.load %arg15[%c56_108, %c0_109] : memref<64x128xf32, #tpu.memory_space<vmem>>, vector<8x128xf32>
    tpu.vector_store %arg15[%c56_108, %c0_109], %342 {strides = array<i32>} : memref<64x128xf32, #tpu.memory_space<vmem>>, vector<8x128xf32>,
    %c0_110 = arith.constant 0 : index
    %c0_111 = arith.constant 0 : index
    %344 = vector.load %arg14[%c0_110, %c0_111] : memref<16x128xf32, #tpu.memory_space<vmem>>, vector<8x128xf32>
    tpu.vector_store %arg14[%c0_110, %c0_111], %341 {strides = array<i32>} : memref<16x128xf32, #tpu.memory_space<vmem>>, vector<8x128xf32>,
    %c0_112 = arith.constant 0 : index
    %c0_113 = arith.constant 0 : index
    %345 = vector.load %arg15[%c0_112, %c0_113] : memref<64x128xf32, #tpu.memory_space<vmem>>, vector<64x128xf32>
    %346 = arith.truncf %345 : vector<64x128xf32> to vector<64x128xbf16>
    %c0_114 = arith.constant 0 : index
    %c0_115 = arith.constant 0 : index
    %347 = vector.load %arg7[%c0_114, %c0_115] : memref<128x384xbf16, #tpu.memory_space<vmem>>, vector<128x384xbf16>
    %cst_116 = arith.constant dense<0.000000e+00> : vector<64x384xf32>
    %348 = tpu.matmul %346, %347, %cst_116 {dimension_numbers = #tpu.dot_dimension_numbers<[1], [0], [0], [1], [0, 0, 1, 1], [], []>} : vector<64x128xbf16>, vector<128x384xbf16>, vector<64x384xf32> -> vector<64x384xf32>
    %c0_117 = arith.constant 0 : index
    %c0_118 = arith.constant 0 : index
    %349 = vector.load %arg8[%c0_117, %c0_118] : memref<1x384xf32, #tpu.memory_space<vmem>>, vector<1x384xf32>
    %350 = vector.broadcast %349 : vector<1x384xf32> to vector<64x384xf32>
    %351 = arith.addf %348, %350 : vector<64x384xf32>
    %c0_119 = arith.constant 0 : index
    %c0_120 = arith.constant 0 : index
    %352 = vector.load %arg16[%c0_119, %c0_120] : memref<64x384xf32, #tpu.memory_space<vmem>>, vector<64x384xf32>
    tpu.vector_store %arg16[%c0_119, %c0_120], %351 {strides = array<i32>} : memref<64x384xf32, #tpu.memory_space<vmem>>, vector<64x384xf32>,
    %c0_121 = arith.constant 0 : index
    %c0_122 = arith.constant 0 : index
    %353 = vector.load %arg9[%c0_121, %c0_122] : memref<128x384xbf16, #tpu.memory_space<vmem>>, vector<128x384xbf16>
    %c0_123 = arith.constant 0 : index
    %c0_124 = arith.constant 0 : index
    %354 = vector.load %arg10[%c0_123, %c0_124] : memref<1x384xf32, #tpu.memory_space<vmem>>, vector<1x384xf32>
    %c8_125 = arith.constant 8 : index
    %c0_126 = arith.constant 0 : index
    %355 = vector.load %arg2[%c8_125, %c0_126] : memref<16x128xf32, #tpu.memory_space<vmem>>, vector<8x128xf32>
    %c0_127 = arith.constant 0 : index
    %c0_128 = arith.constant 0 : index
    %356 = vector.load %arg16[%c0_127, %c0_128] : memref<64x384xf32, #tpu.memory_space<vmem>>, vector<8x384xf32>
    %357 = arith.truncf %355 : vector<8x128xf32> to vector<8x128xbf16>
    %cst_129 = arith.constant dense<0.000000e+00> : vector<8x384xf32>
    %358 = tpu.matmul %357, %353, %cst_129 {dimension_numbers = #tpu.dot_dimension_numbers<[1], [0], [0], [1], [0, 0, 1, 1], [], []>} : vector<8x128xbf16>, vector<128x384xbf16>, vector<8x384xf32> -> vector<8x384xf32>
    %359 = vector.broadcast %354 : vector<1x384xf32> to vector<8x384xf32>
    %360 = arith.addf %358, %359 : vector<8x384xf32>
    %361 = vector.extract_strided_slice %356 {offsets = [0, 0], sizes = [8, 128], strides = [1, 1]} : vector<8x384xf32> to vector<8x128xf32>
    %362 = vector.extract_strided_slice %360 {offsets = [0, 0], sizes = [8, 128], strides = [1, 1]} : vector<8x384xf32> to vector<8x128xf32>
    %363 = arith.addf %361, %362 : vector<8x128xf32>
    %cst_130 = arith.constant 0.000000e+00 : f32
    %364 = vector.broadcast %cst_130 : f32 to vector<8x128xf32>
    %365 = arith.subf %364, %363 : vector<8x128xf32>
    %366 = math.exp %365 : vector<8x128xf32>
    %cst_131 = arith.constant 1.000000e+00 : f32
    %367 = vector.broadcast %cst_131 : f32 to vector<8x128xf32>
    %368 = arith.addf %367, %366 : vector<8x128xf32>
    %369 = tpu.reciprocal %368 {approx = true} : vector<8x128xf32> -> vector<8x128xf32>
    %370 = vector.extract_strided_slice %356 {offsets = [0, 128], sizes = [8, 128], strides = [1, 1]} : vector<8x384xf32> to vector<8x128xf32>
    %371 = vector.extract_strided_slice %360 {offsets = [0, 128], sizes = [8, 128], strides = [1, 1]} : vector<8x384xf32> to vector<8x128xf32>
    %372 = arith.addf %370, %371 : vector<8x128xf32>
    %cst_132 = arith.constant 0.000000e+00 : f32
    %373 = vector.broadcast %cst_132 : f32 to vector<8x128xf32>
    %374 = arith.subf %373, %372 : vector<8x128xf32>
    %375 = math.exp %374 : vector<8x128xf32>
    %cst_133 = arith.constant 1.000000e+00 : f32
    %376 = vector.broadcast %cst_133 : f32 to vector<8x128xf32>
    %377 = arith.addf %376, %375 : vector<8x128xf32>
    %378 = tpu.reciprocal %377 {approx = true} : vector<8x128xf32> -> vector<8x128xf32>
    %379 = vector.extract_strided_slice %356 {offsets = [0, 256], sizes = [8, 128], strides = [1, 1]} : vector<8x384xf32> to vector<8x128xf32>
    %380 = vector.extract_strided_slice %360 {offsets = [0, 256], sizes = [8, 128], strides = [1, 1]} : vector<8x384xf32> to vector<8x128xf32>
    %381 = arith.mulf %369, %380 : vector<8x128xf32>
    %382 = arith.addf %379, %381 : vector<8x128xf32>
    %383 = math.tanh %382 : vector<8x128xf32>
    %cst_134 = arith.constant 1.000000e+00 : f32
    %384 = vector.broadcast %cst_134 : f32 to vector<8x128xf32>
    %385 = arith.subf %384, %378 : vector<8x128xf32>
    %386 = arith.mulf %385, %383 : vector<8x128xf32>
    %387 = arith.mulf %378, %355 : vector<8x128xf32>
    %388 = arith.addf %386, %387 : vector<8x128xf32>
    %c0_135 = arith.constant 0 : index
    %c0_136 = arith.constant 0 : index
    %389 = vector.load %arg1[%c0_135, %c0_136] : memref<64x128xf32, #tpu.memory_space<vmem>>, vector<8x128xf32>
    %390 = arith.mulf %389, %388 : vector<8x128xf32>
    %cst_137 = arith.constant 1.000000e+00 : f32
    %391 = vector.broadcast %cst_137 : f32 to vector<8x128xf32>
    %392 = arith.subf %391, %389 : vector<8x128xf32>
    %393 = arith.mulf %392, %355 : vector<8x128xf32>
    %394 = arith.addf %390, %393 : vector<8x128xf32>
    %395 = arith.mulf %389, %388 : vector<8x128xf32>
    %c0_138 = arith.constant 0 : index
    %c0_139 = arith.constant 0 : index
    %396 = vector.load %arg15[%c0_138, %c0_139] : memref<64x128xf32, #tpu.memory_space<vmem>>, vector<8x128xf32>
    tpu.vector_store %arg15[%c0_138, %c0_139], %395 {strides = array<i32>} : memref<64x128xf32, #tpu.memory_space<vmem>>, vector<8x128xf32>,
    %c8_140 = arith.constant 8 : index
    %c0_141 = arith.constant 0 : index
    %397 = vector.load %arg16[%c8_140, %c0_141] : memref<64x384xf32, #tpu.memory_space<vmem>>, vector<8x384xf32>
    %398 = arith.truncf %394 : vector<8x128xf32> to vector<8x128xbf16>
    %cst_142 = arith.constant dense<0.000000e+00> : vector<8x384xf32>
    %399 = tpu.matmul %398, %353, %cst_142 {dimension_numbers = #tpu.dot_dimension_numbers<[1], [0], [0], [1], [0, 0, 1, 1], [], []>} : vector<8x128xbf16>, vector<128x384xbf16>, vector<8x384xf32> -> vector<8x384xf32>
    %400 = vector.broadcast %354 : vector<1x384xf32> to vector<8x384xf32>
    %401 = arith.addf %399, %400 : vector<8x384xf32>
    %402 = vector.extract_strided_slice %397 {offsets = [0, 0], sizes = [8, 128], strides = [1, 1]} : vector<8x384xf32> to vector<8x128xf32>
    %403 = vector.extract_strided_slice %401 {offsets = [0, 0], sizes = [8, 128], strides = [1, 1]} : vector<8x384xf32> to vector<8x128xf32>
    %404 = arith.addf %402, %403 : vector<8x128xf32>
    %cst_143 = arith.constant 0.000000e+00 : f32
    %405 = vector.broadcast %cst_143 : f32 to vector<8x128xf32>
    %406 = arith.subf %405, %404 : vector<8x128xf32>
    %407 = math.exp %406 : vector<8x128xf32>
    %cst_144 = arith.constant 1.000000e+00 : f32
    %408 = vector.broadcast %cst_144 : f32 to vector<8x128xf32>
    %409 = arith.addf %408, %407 : vector<8x128xf32>
    %410 = tpu.reciprocal %409 {approx = true} : vector<8x128xf32> -> vector<8x128xf32>
    %411 = vector.extract_strided_slice %397 {offsets = [0, 128], sizes = [8, 128], strides = [1, 1]} : vector<8x384xf32> to vector<8x128xf32>
    %412 = vector.extract_strided_slice %401 {offsets = [0, 128], sizes = [8, 128], strides = [1, 1]} : vector<8x384xf32> to vector<8x128xf32>
    %413 = arith.addf %411, %412 : vector<8x128xf32>
    %cst_145 = arith.constant 0.000000e+00 : f32
    %414 = vector.broadcast %cst_145 : f32 to vector<8x128xf32>
    %415 = arith.subf %414, %413 : vector<8x128xf32>
    %416 = math.exp %415 : vector<8x128xf32>
    %cst_146 = arith.constant 1.000000e+00 : f32
    %417 = vector.broadcast %cst_146 : f32 to vector<8x128xf32>
    %418 = arith.addf %417, %416 : vector<8x128xf32>
    %419 = tpu.reciprocal %418 {approx = true} : vector<8x128xf32> -> vector<8x128xf32>
    %420 = vector.extract_strided_slice %397 {offsets = [0, 256], sizes = [8, 128], strides = [1, 1]} : vector<8x384xf32> to vector<8x128xf32>
    %421 = vector.extract_strided_slice %401 {offsets = [0, 256], sizes = [8, 128], strides = [1, 1]} : vector<8x384xf32> to vector<8x128xf32>
    %422 = arith.mulf %410, %421 : vector<8x128xf32>
    %423 = arith.addf %420, %422 : vector<8x128xf32>
    %424 = math.tanh %423 : vector<8x128xf32>
    %cst_147 = arith.constant 1.000000e+00 : f32
    %425 = vector.broadcast %cst_147 : f32 to vector<8x128xf32>
    %426 = arith.subf %425, %419 : vector<8x128xf32>
    %427 = arith.mulf %426, %424 : vector<8x128xf32>
    %428 = arith.mulf %419, %394 : vector<8x128xf32>
    %429 = arith.addf %427, %428 : vector<8x128xf32>
    %c8_148 = arith.constant 8 : index
    %c0_149 = arith.constant 0 : index
    %430 = vector.load %arg1[%c8_148, %c0_149] : memref<64x128xf32, #tpu.memory_space<vmem>>, vector<8x128xf32>
    %431 = arith.mulf %430, %429 : vector<8x128xf32>
    %cst_150 = arith.constant 1.000000e+00 : f32
    %432 = vector.broadcast %cst_150 : f32 to vector<8x128xf32>
    %433 = arith.subf %432, %430 : vector<8x128xf32>
    %434 = arith.mulf %433, %394 : vector<8x128xf32>
    %435 = arith.addf %431, %434 : vector<8x128xf32>
    %436 = arith.mulf %430, %429 : vector<8x128xf32>
    %c8_151 = arith.constant 8 : index
    %c0_152 = arith.constant 0 : index
    %437 = vector.load %arg15[%c8_151, %c0_152] : memref<64x128xf32, #tpu.memory_space<vmem>>, vector<8x128xf32>
    tpu.vector_store %arg15[%c8_151, %c0_152], %436 {strides = array<i32>} : memref<64x128xf32, #tpu.memory_space<vmem>>, vector<8x128xf32>,
    %c16_153 = arith.constant 16 : index
    %c0_154 = arith.constant 0 : index
    %438 = vector.load %arg16[%c16_153, %c0_154] : memref<64x384xf32, #tpu.memory_space<vmem>>, vector<8x384xf32>
    %439 = arith.truncf %435 : vector<8x128xf32> to vector<8x128xbf16>
    %cst_155 = arith.constant dense<0.000000e+00> : vector<8x384xf32>
    %440 = tpu.matmul %439, %353, %cst_155 {dimension_numbers = #tpu.dot_dimension_numbers<[1], [0], [0], [1], [0, 0, 1, 1], [], []>} : vector<8x128xbf16>, vector<128x384xbf16>, vector<8x384xf32> -> vector<8x384xf32>
    %441 = vector.broadcast %354 : vector<1x384xf32> to vector<8x384xf32>
    %442 = arith.addf %440, %441 : vector<8x384xf32>
    %443 = vector.extract_strided_slice %438 {offsets = [0, 0], sizes = [8, 128], strides = [1, 1]} : vector<8x384xf32> to vector<8x128xf32>
    %444 = vector.extract_strided_slice %442 {offsets = [0, 0], sizes = [8, 128], strides = [1, 1]} : vector<8x384xf32> to vector<8x128xf32>
    %445 = arith.addf %443, %444 : vector<8x128xf32>
    %cst_156 = arith.constant 0.000000e+00 : f32
    %446 = vector.broadcast %cst_156 : f32 to vector<8x128xf32>
    %447 = arith.subf %446, %445 : vector<8x128xf32>
    %448 = math.exp %447 : vector<8x128xf32>
    %cst_157 = arith.constant 1.000000e+00 : f32
    %449 = vector.broadcast %cst_157 : f32 to vector<8x128xf32>
    %450 = arith.addf %449, %448 : vector<8x128xf32>
    %451 = tpu.reciprocal %450 {approx = true} : vector<8x128xf32> -> vector<8x128xf32>
    %452 = vector.extract_strided_slice %438 {offsets = [0, 128], sizes = [8, 128], strides = [1, 1]} : vector<8x384xf32> to vector<8x128xf32>
    %453 = vector.extract_strided_slice %442 {offsets = [0, 128], sizes = [8, 128], strides = [1, 1]} : vector<8x384xf32> to vector<8x128xf32>
    %454 = arith.addf %452, %453 : vector<8x128xf32>
    %cst_158 = arith.constant 0.000000e+00 : f32
    %455 = vector.broadcast %cst_158 : f32 to vector<8x128xf32>
    %456 = arith.subf %455, %454 : vector<8x128xf32>
    %457 = math.exp %456 : vector<8x128xf32>
    %cst_159 = arith.constant 1.000000e+00 : f32
    %458 = vector.broadcast %cst_159 : f32 to vector<8x128xf32>
    %459 = arith.addf %458, %457 : vector<8x128xf32>
    %460 = tpu.reciprocal %459 {approx = true} : vector<8x128xf32> -> vector<8x128xf32>
    %461 = vector.extract_strided_slice %438 {offsets = [0, 256], sizes = [8, 128], strides = [1, 1]} : vector<8x384xf32> to vector<8x128xf32>
    %462 = vector.extract_strided_slice %442 {offsets = [0, 256], sizes = [8, 128], strides = [1, 1]} : vector<8x384xf32> to vector<8x128xf32>
    %463 = arith.mulf %451, %462 : vector<8x128xf32>
    %464 = arith.addf %461, %463 : vector<8x128xf32>
    %465 = math.tanh %464 : vector<8x128xf32>
    %cst_160 = arith.constant 1.000000e+00 : f32
    %466 = vector.broadcast %cst_160 : f32 to vector<8x128xf32>
    %467 = arith.subf %466, %460 : vector<8x128xf32>
    %468 = arith.mulf %467, %465 : vector<8x128xf32>
    %469 = arith.mulf %460, %435 : vector<8x128xf32>
    %470 = arith.addf %468, %469 : vector<8x128xf32>
    %c16_161 = arith.constant 16 : index
    %c0_162 = arith.constant 0 : index
    %471 = vector.load %arg1[%c16_161, %c0_162] : memref<64x128xf32, #tpu.memory_space<vmem>>, vector<8x128xf32>
    %472 = arith.mulf %471, %470 : vector<8x128xf32>
    %cst_163 = arith.constant 1.000000e+00 : f32
    %473 = vector.broadcast %cst_163 : f32 to vector<8x128xf32>
    %474 = arith.subf %473, %471 : vector<8x128xf32>
    %475 = arith.mulf %474, %435 : vector<8x128xf32>
    %476 = arith.addf %472, %475 : vector<8x128xf32>
    %477 = arith.mulf %471, %470 : vector<8x128xf32>
    %c16_164 = arith.constant 16 : index
    %c0_165 = arith.constant 0 : index
    %478 = vector.load %arg15[%c16_164, %c0_165] : memref<64x128xf32, #tpu.memory_space<vmem>>, vector<8x128xf32>
    tpu.vector_store %arg15[%c16_164, %c0_165], %477 {strides = array<i32>} : memref<64x128xf32, #tpu.memory_space<vmem>>, vector<8x128xf32>,
    %c24_166 = arith.constant 24 : index
    %c0_167 = arith.constant 0 : index
    %479 = vector.load %arg16[%c24_166, %c0_167] : memref<64x384xf32, #tpu.memory_space<vmem>>, vector<8x384xf32>
    %480 = arith.truncf %476 : vector<8x128xf32> to vector<8x128xbf16>
    %cst_168 = arith.constant dense<0.000000e+00> : vector<8x384xf32>
    %481 = tpu.matmul %480, %353, %cst_168 {dimension_numbers = #tpu.dot_dimension_numbers<[1], [0], [0], [1], [0, 0, 1, 1], [], []>} : vector<8x128xbf16>, vector<128x384xbf16>, vector<8x384xf32> -> vector<8x384xf32>
    %482 = vector.broadcast %354 : vector<1x384xf32> to vector<8x384xf32>
    %483 = arith.addf %481, %482 : vector<8x384xf32>
    %484 = vector.extract_strided_slice %479 {offsets = [0, 0], sizes = [8, 128], strides = [1, 1]} : vector<8x384xf32> to vector<8x128xf32>
    %485 = vector.extract_strided_slice %483 {offsets = [0, 0], sizes = [8, 128], strides = [1, 1]} : vector<8x384xf32> to vector<8x128xf32>
    %486 = arith.addf %484, %485 : vector<8x128xf32>
    %cst_169 = arith.constant 0.000000e+00 : f32
    %487 = vector.broadcast %cst_169 : f32 to vector<8x128xf32>
    %488 = arith.subf %487, %486 : vector<8x128xf32>
    %489 = math.exp %488 : vector<8x128xf32>
    %cst_170 = arith.constant 1.000000e+00 : f32
    %490 = vector.broadcast %cst_170 : f32 to vector<8x128xf32>
    %491 = arith.addf %490, %489 : vector<8x128xf32>
    %492 = tpu.reciprocal %491 {approx = true} : vector<8x128xf32> -> vector<8x128xf32>
    %493 = vector.extract_strided_slice %479 {offsets = [0, 128], sizes = [8, 128], strides = [1, 1]} : vector<8x384xf32> to vector<8x128xf32>
    %494 = vector.extract_strided_slice %483 {offsets = [0, 128], sizes = [8, 128], strides = [1, 1]} : vector<8x384xf32> to vector<8x128xf32>
    %495 = arith.addf %493, %494 : vector<8x128xf32>
    %cst_171 = arith.constant 0.000000e+00 : f32
    %496 = vector.broadcast %cst_171 : f32 to vector<8x128xf32>
    %497 = arith.subf %496, %495 : vector<8x128xf32>
    %498 = math.exp %497 : vector<8x128xf32>
    %cst_172 = arith.constant 1.000000e+00 : f32
    %499 = vector.broadcast %cst_172 : f32 to vector<8x128xf32>
    %500 = arith.addf %499, %498 : vector<8x128xf32>
    %501 = tpu.reciprocal %500 {approx = true} : vector<8x128xf32> -> vector<8x128xf32>
    %502 = vector.extract_strided_slice %479 {offsets = [0, 256], sizes = [8, 128], strides = [1, 1]} : vector<8x384xf32> to vector<8x128xf32>
    %503 = vector.extract_strided_slice %483 {offsets = [0, 256], sizes = [8, 128], strides = [1, 1]} : vector<8x384xf32> to vector<8x128xf32>
    %504 = arith.mulf %492, %503 : vector<8x128xf32>
    %505 = arith.addf %502, %504 : vector<8x128xf32>
    %506 = math.tanh %505 : vector<8x128xf32>
    %cst_173 = arith.constant 1.000000e+00 : f32
    %507 = vector.broadcast %cst_173 : f32 to vector<8x128xf32>
    %508 = arith.subf %507, %501 : vector<8x128xf32>
    %509 = arith.mulf %508, %506 : vector<8x128xf32>
    %510 = arith.mulf %501, %476 : vector<8x128xf32>
    %511 = arith.addf %509, %510 : vector<8x128xf32>
    %c24_174 = arith.constant 24 : index
    %c0_175 = arith.constant 0 : index
    %512 = vector.load %arg1[%c24_174, %c0_175] : memref<64x128xf32, #tpu.memory_space<vmem>>, vector<8x128xf32>
    %513 = arith.mulf %512, %511 : vector<8x128xf32>
    %cst_176 = arith.constant 1.000000e+00 : f32
    %514 = vector.broadcast %cst_176 : f32 to vector<8x128xf32>
    %515 = arith.subf %514, %512 : vector<8x128xf32>
    %516 = arith.mulf %515, %476 : vector<8x128xf32>
    %517 = arith.addf %513, %516 : vector<8x128xf32>
    %518 = arith.mulf %512, %511 : vector<8x128xf32>
    %c24_177 = arith.constant 24 : index
    %c0_178 = arith.constant 0 : index
    %519 = vector.load %arg15[%c24_177, %c0_178] : memref<64x128xf32, #tpu.memory_space<vmem>>, vector<8x128xf32>
    tpu.vector_store %arg15[%c24_177, %c0_178], %518 {strides = array<i32>} : memref<64x128xf32, #tpu.memory_space<vmem>>, vector<8x128xf32>,
    %c32_179 = arith.constant 32 : index
    %c0_180 = arith.constant 0 : index
    %520 = vector.load %arg16[%c32_179, %c0_180] : memref<64x384xf32, #tpu.memory_space<vmem>>, vector<8x384xf32>
    %521 = arith.truncf %517 : vector<8x128xf32> to vector<8x128xbf16>
    %cst_181 = arith.constant dense<0.000000e+00> : vector<8x384xf32>
    %522 = tpu.matmul %521, %353, %cst_181 {dimension_numbers = #tpu.dot_dimension_numbers<[1], [0], [0], [1], [0, 0, 1, 1], [], []>} : vector<8x128xbf16>, vector<128x384xbf16>, vector<8x384xf32> -> vector<8x384xf32>
    %523 = vector.broadcast %354 : vector<1x384xf32> to vector<8x384xf32>
    %524 = arith.addf %522, %523 : vector<8x384xf32>
    %525 = vector.extract_strided_slice %520 {offsets = [0, 0], sizes = [8, 128], strides = [1, 1]} : vector<8x384xf32> to vector<8x128xf32>
    %526 = vector.extract_strided_slice %524 {offsets = [0, 0], sizes = [8, 128], strides = [1, 1]} : vector<8x384xf32> to vector<8x128xf32>
    %527 = arith.addf %525, %526 : vector<8x128xf32>
    %cst_182 = arith.constant 0.000000e+00 : f32
    %528 = vector.broadcast %cst_182 : f32 to vector<8x128xf32>
    %529 = arith.subf %528, %527 : vector<8x128xf32>
    %530 = math.exp %529 : vector<8x128xf32>
    %cst_183 = arith.constant 1.000000e+00 : f32
    %531 = vector.broadcast %cst_183 : f32 to vector<8x128xf32>
    %532 = arith.addf %531, %530 : vector<8x128xf32>
    %533 = tpu.reciprocal %532 {approx = true} : vector<8x128xf32> -> vector<8x128xf32>
    %534 = vector.extract_strided_slice %520 {offsets = [0, 128], sizes = [8, 128], strides = [1, 1]} : vector<8x384xf32> to vector<8x128xf32>
    %535 = vector.extract_strided_slice %524 {offsets = [0, 128], sizes = [8, 128], strides = [1, 1]} : vector<8x384xf32> to vector<8x128xf32>
    %536 = arith.addf %534, %535 : vector<8x128xf32>
    %cst_184 = arith.constant 0.000000e+00 : f32
    %537 = vector.broadcast %cst_184 : f32 to vector<8x128xf32>
    %538 = arith.subf %537, %536 : vector<8x128xf32>
    %539 = math.exp %538 : vector<8x128xf32>
    %cst_185 = arith.constant 1.000000e+00 : f32
    %540 = vector.broadcast %cst_185 : f32 to vector<8x128xf32>
    %541 = arith.addf %540, %539 : vector<8x128xf32>
    %542 = tpu.reciprocal %541 {approx = true} : vector<8x128xf32> -> vector<8x128xf32>
    %543 = vector.extract_strided_slice %520 {offsets = [0, 256], sizes = [8, 128], strides = [1, 1]} : vector<8x384xf32> to vector<8x128xf32>
    %544 = vector.extract_strided_slice %524 {offsets = [0, 256], sizes = [8, 128], strides = [1, 1]} : vector<8x384xf32> to vector<8x128xf32>
    %545 = arith.mulf %533, %544 : vector<8x128xf32>
    %546 = arith.addf %543, %545 : vector<8x128xf32>
    %547 = math.tanh %546 : vector<8x128xf32>
    %cst_186 = arith.constant 1.000000e+00 : f32
    %548 = vector.broadcast %cst_186 : f32 to vector<8x128xf32>
    %549 = arith.subf %548, %542 : vector<8x128xf32>
    %550 = arith.mulf %549, %547 : vector<8x128xf32>
    %551 = arith.mulf %542, %517 : vector<8x128xf32>
    %552 = arith.addf %550, %551 : vector<8x128xf32>
    %c32_187 = arith.constant 32 : index
    %c0_188 = arith.constant 0 : index
    %553 = vector.load %arg1[%c32_187, %c0_188] : memref<64x128xf32, #tpu.memory_space<vmem>>, vector<8x128xf32>
    %554 = arith.mulf %553, %552 : vector<8x128xf32>
    %cst_189 = arith.constant 1.000000e+00 : f32
    %555 = vector.broadcast %cst_189 : f32 to vector<8x128xf32>
    %556 = arith.subf %555, %553 : vector<8x128xf32>
    %557 = arith.mulf %556, %517 : vector<8x128xf32>
    %558 = arith.addf %554, %557 : vector<8x128xf32>
    %559 = arith.mulf %553, %552 : vector<8x128xf32>
    %c32_190 = arith.constant 32 : index
    %c0_191 = arith.constant 0 : index
    %560 = vector.load %arg15[%c32_190, %c0_191] : memref<64x128xf32, #tpu.memory_space<vmem>>, vector<8x128xf32>
    tpu.vector_store %arg15[%c32_190, %c0_191], %559 {strides = array<i32>} : memref<64x128xf32, #tpu.memory_space<vmem>>, vector<8x128xf32>,
    %c40_192 = arith.constant 40 : index
    %c0_193 = arith.constant 0 : index
    %561 = vector.load %arg16[%c40_192, %c0_193] : memref<64x384xf32, #tpu.memory_space<vmem>>, vector<8x384xf32>
    %562 = arith.truncf %558 : vector<8x128xf32> to vector<8x128xbf16>
    %cst_194 = arith.constant dense<0.000000e+00> : vector<8x384xf32>
    %563 = tpu.matmul %562, %353, %cst_194 {dimension_numbers = #tpu.dot_dimension_numbers<[1], [0], [0], [1], [0, 0, 1, 1], [], []>} : vector<8x128xbf16>, vector<128x384xbf16>, vector<8x384xf32> -> vector<8x384xf32>
    %564 = vector.broadcast %354 : vector<1x384xf32> to vector<8x384xf32>
    %565 = arith.addf %563, %564 : vector<8x384xf32>
    %566 = vector.extract_strided_slice %561 {offsets = [0, 0], sizes = [8, 128], strides = [1, 1]} : vector<8x384xf32> to vector<8x128xf32>
    %567 = vector.extract_strided_slice %565 {offsets = [0, 0], sizes = [8, 128], strides = [1, 1]} : vector<8x384xf32> to vector<8x128xf32>
    %568 = arith.addf %566, %567 : vector<8x128xf32>
    %cst_195 = arith.constant 0.000000e+00 : f32
    %569 = vector.broadcast %cst_195 : f32 to vector<8x128xf32>
    %570 = arith.subf %569, %568 : vector<8x128xf32>
    %571 = math.exp %570 : vector<8x128xf32>
    %cst_196 = arith.constant 1.000000e+00 : f32
    %572 = vector.broadcast %cst_196 : f32 to vector<8x128xf32>
    %573 = arith.addf %572, %571 : vector<8x128xf32>
    %574 = tpu.reciprocal %573 {approx = true} : vector<8x128xf32> -> vector<8x128xf32>
    %575 = vector.extract_strided_slice %561 {offsets = [0, 128], sizes = [8, 128], strides = [1, 1]} : vector<8x384xf32> to vector<8x128xf32>
    %576 = vector.extract_strided_slice %565 {offsets = [0, 128], sizes = [8, 128], strides = [1, 1]} : vector<8x384xf32> to vector<8x128xf32>
    %577 = arith.addf %575, %576 : vector<8x128xf32>
    %cst_197 = arith.constant 0.000000e+00 : f32
    %578 = vector.broadcast %cst_197 : f32 to vector<8x128xf32>
    %579 = arith.subf %578, %577 : vector<8x128xf32>
    %580 = math.exp %579 : vector<8x128xf32>
    %cst_198 = arith.constant 1.000000e+00 : f32
    %581 = vector.broadcast %cst_198 : f32 to vector<8x128xf32>
    %582 = arith.addf %581, %580 : vector<8x128xf32>
    %583 = tpu.reciprocal %582 {approx = true} : vector<8x128xf32> -> vector<8x128xf32>
    %584 = vector.extract_strided_slice %561 {offsets = [0, 256], sizes = [8, 128], strides = [1, 1]} : vector<8x384xf32> to vector<8x128xf32>
    %585 = vector.extract_strided_slice %565 {offsets = [0, 256], sizes = [8, 128], strides = [1, 1]} : vector<8x384xf32> to vector<8x128xf32>
    %586 = arith.mulf %574, %585 : vector<8x128xf32>
    %587 = arith.addf %584, %586 : vector<8x128xf32>
    %588 = math.tanh %587 : vector<8x128xf32>
    %cst_199 = arith.constant 1.000000e+00 : f32
    %589 = vector.broadcast %cst_199 : f32 to vector<8x128xf32>
    %590 = arith.subf %589, %583 : vector<8x128xf32>
    %591 = arith.mulf %590, %588 : vector<8x128xf32>
    %592 = arith.mulf %583, %558 : vector<8x128xf32>
    %593 = arith.addf %591, %592 : vector<8x128xf32>
    %c40_200 = arith.constant 40 : index
    %c0_201 = arith.constant 0 : index
    %594 = vector.load %arg1[%c40_200, %c0_201] : memref<64x128xf32, #tpu.memory_space<vmem>>, vector<8x128xf32>
    %595 = arith.mulf %594, %593 : vector<8x128xf32>
    %cst_202 = arith.constant 1.000000e+00 : f32
    %596 = vector.broadcast %cst_202 : f32 to vector<8x128xf32>
    %597 = arith.subf %596, %594 : vector<8x128xf32>
    %598 = arith.mulf %597, %558 : vector<8x128xf32>
    %599 = arith.addf %595, %598 : vector<8x128xf32>
    %600 = arith.mulf %594, %593 : vector<8x128xf32>
    %c40_203 = arith.constant 40 : index
    %c0_204 = arith.constant 0 : index
    %601 = vector.load %arg15[%c40_203, %c0_204] : memref<64x128xf32, #tpu.memory_space<vmem>>, vector<8x128xf32>
    tpu.vector_store %arg15[%c40_203, %c0_204], %600 {strides = array<i32>} : memref<64x128xf32, #tpu.memory_space<vmem>>, vector<8x128xf32>,
    %c48_205 = arith.constant 48 : index
    %c0_206 = arith.constant 0 : index
    %602 = vector.load %arg16[%c48_205, %c0_206] : memref<64x384xf32, #tpu.memory_space<vmem>>, vector<8x384xf32>
    %603 = arith.truncf %599 : vector<8x128xf32> to vector<8x128xbf16>
    %cst_207 = arith.constant dense<0.000000e+00> : vector<8x384xf32>
    %604 = tpu.matmul %603, %353, %cst_207 {dimension_numbers = #tpu.dot_dimension_numbers<[1], [0], [0], [1], [0, 0, 1, 1], [], []>} : vector<8x128xbf16>, vector<128x384xbf16>, vector<8x384xf32> -> vector<8x384xf32>
    %605 = vector.broadcast %354 : vector<1x384xf32> to vector<8x384xf32>
    %606 = arith.addf %604, %605 : vector<8x384xf32>
    %607 = vector.extract_strided_slice %602 {offsets = [0, 0], sizes = [8, 128], strides = [1, 1]} : vector<8x384xf32> to vector<8x128xf32>
    %608 = vector.extract_strided_slice %606 {offsets = [0, 0], sizes = [8, 128], strides = [1, 1]} : vector<8x384xf32> to vector<8x128xf32>
    %609 = arith.addf %607, %608 : vector<8x128xf32>
    %cst_208 = arith.constant 0.000000e+00 : f32
    %610 = vector.broadcast %cst_208 : f32 to vector<8x128xf32>
    %611 = arith.subf %610, %609 : vector<8x128xf32>
    %612 = math.exp %611 : vector<8x128xf32>
    %cst_209 = arith.constant 1.000000e+00 : f32
    %613 = vector.broadcast %cst_209 : f32 to vector<8x128xf32>
    %614 = arith.addf %613, %612 : vector<8x128xf32>
    %615 = tpu.reciprocal %614 {approx = true} : vector<8x128xf32> -> vector<8x128xf32>
    %616 = vector.extract_strided_slice %602 {offsets = [0, 128], sizes = [8, 128], strides = [1, 1]} : vector<8x384xf32> to vector<8x128xf32>
    %617 = vector.extract_strided_slice %606 {offsets = [0, 128], sizes = [8, 128], strides = [1, 1]} : vector<8x384xf32> to vector<8x128xf32>
    %618 = arith.addf %616, %617 : vector<8x128xf32>
    %cst_210 = arith.constant 0.000000e+00 : f32
    %619 = vector.broadcast %cst_210 : f32 to vector<8x128xf32>
    %620 = arith.subf %619, %618 : vector<8x128xf32>
    %621 = math.exp %620 : vector<8x128xf32>
    %cst_211 = arith.constant 1.000000e+00 : f32
    %622 = vector.broadcast %cst_211 : f32 to vector<8x128xf32>
    %623 = arith.addf %622, %621 : vector<8x128xf32>
    %624 = tpu.reciprocal %623 {approx = true} : vector<8x128xf32> -> vector<8x128xf32>
    %625 = vector.extract_strided_slice %602 {offsets = [0, 256], sizes = [8, 128], strides = [1, 1]} : vector<8x384xf32> to vector<8x128xf32>
    %626 = vector.extract_strided_slice %606 {offsets = [0, 256], sizes = [8, 128], strides = [1, 1]} : vector<8x384xf32> to vector<8x128xf32>
    %627 = arith.mulf %615, %626 : vector<8x128xf32>
    %628 = arith.addf %625, %627 : vector<8x128xf32>
    %629 = math.tanh %628 : vector<8x128xf32>
    %cst_212 = arith.constant 1.000000e+00 : f32
    %630 = vector.broadcast %cst_212 : f32 to vector<8x128xf32>
    %631 = arith.subf %630, %624 : vector<8x128xf32>
    %632 = arith.mulf %631, %629 : vector<8x128xf32>
    %633 = arith.mulf %624, %599 : vector<8x128xf32>
    %634 = arith.addf %632, %633 : vector<8x128xf32>
    %c48_213 = arith.constant 48 : index
    %c0_214 = arith.constant 0 : index
    %635 = vector.load %arg1[%c48_213, %c0_214] : memref<64x128xf32, #tpu.memory_space<vmem>>, vector<8x128xf32>
    %636 = arith.mulf %635, %634 : vector<8x128xf32>
    %cst_215 = arith.constant 1.000000e+00 : f32
    %637 = vector.broadcast %cst_215 : f32 to vector<8x128xf32>
    %638 = arith.subf %637, %635 : vector<8x128xf32>
    %639 = arith.mulf %638, %599 : vector<8x128xf32>
    %640 = arith.addf %636, %639 : vector<8x128xf32>
    %641 = arith.mulf %635, %634 : vector<8x128xf32>
    %c48_216 = arith.constant 48 : index
    %c0_217 = arith.constant 0 : index
    %642 = vector.load %arg15[%c48_216, %c0_217] : memref<64x128xf32, #tpu.memory_space<vmem>>, vector<8x128xf32>
    tpu.vector_store %arg15[%c48_216, %c0_217], %641 {strides = array<i32>} : memref<64x128xf32, #tpu.memory_space<vmem>>, vector<8x128xf32>,
    %c56_218 = arith.constant 56 : index
    %c0_219 = arith.constant 0 : index
    %643 = vector.load %arg16[%c56_218, %c0_219] : memref<64x384xf32, #tpu.memory_space<vmem>>, vector<8x384xf32>
    %644 = arith.truncf %640 : vector<8x128xf32> to vector<8x128xbf16>
    %cst_220 = arith.constant dense<0.000000e+00> : vector<8x384xf32>
    %645 = tpu.matmul %644, %353, %cst_220 {dimension_numbers = #tpu.dot_dimension_numbers<[1], [0], [0], [1], [0, 0, 1, 1], [], []>} : vector<8x128xbf16>, vector<128x384xbf16>, vector<8x384xf32> -> vector<8x384xf32>
    %646 = vector.broadcast %354 : vector<1x384xf32> to vector<8x384xf32>
    %647 = arith.addf %645, %646 : vector<8x384xf32>
    %648 = vector.extract_strided_slice %643 {offsets = [0, 0], sizes = [8, 128], strides = [1, 1]} : vector<8x384xf32> to vector<8x128xf32>
    %649 = vector.extract_strided_slice %647 {offsets = [0, 0], sizes = [8, 128], strides = [1, 1]} : vector<8x384xf32> to vector<8x128xf32>
    %650 = arith.addf %648, %649 : vector<8x128xf32>
    %cst_221 = arith.constant 0.000000e+00 : f32
    %651 = vector.broadcast %cst_221 : f32 to vector<8x128xf32>
    %652 = arith.subf %651, %650 : vector<8x128xf32>
    %653 = math.exp %652 : vector<8x128xf32>
    %cst_222 = arith.constant 1.000000e+00 : f32
    %654 = vector.broadcast %cst_222 : f32 to vector<8x128xf32>
    %655 = arith.addf %654, %653 : vector<8x128xf32>
    %656 = tpu.reciprocal %655 {approx = true} : vector<8x128xf32> -> vector<8x128xf32>
    %657 = vector.extract_strided_slice %643 {offsets = [0, 128], sizes = [8, 128], strides = [1, 1]} : vector<8x384xf32> to vector<8x128xf32>
    %658 = vector.extract_strided_slice %647 {offsets = [0, 128], sizes = [8, 128], strides = [1, 1]} : vector<8x384xf32> to vector<8x128xf32>
    %659 = arith.addf %657, %658 : vector<8x128xf32>
    %cst_223 = arith.constant 0.000000e+00 : f32
    %660 = vector.broadcast %cst_223 : f32 to vector<8x128xf32>
    %661 = arith.subf %660, %659 : vector<8x128xf32>
    %662 = math.exp %661 : vector<8x128xf32>
    %cst_224 = arith.constant 1.000000e+00 : f32
    %663 = vector.broadcast %cst_224 : f32 to vector<8x128xf32>
    %664 = arith.addf %663, %662 : vector<8x128xf32>
    %665 = tpu.reciprocal %664 {approx = true} : vector<8x128xf32> -> vector<8x128xf32>
    %666 = vector.extract_strided_slice %643 {offsets = [0, 256], sizes = [8, 128], strides = [1, 1]} : vector<8x384xf32> to vector<8x128xf32>
    %667 = vector.extract_strided_slice %647 {offsets = [0, 256], sizes = [8, 128], strides = [1, 1]} : vector<8x384xf32> to vector<8x128xf32>
    %668 = arith.mulf %656, %667 : vector<8x128xf32>
    %669 = arith.addf %666, %668 : vector<8x128xf32>
    %670 = math.tanh %669 : vector<8x128xf32>
    %cst_225 = arith.constant 1.000000e+00 : f32
    %671 = vector.broadcast %cst_225 : f32 to vector<8x128xf32>
    %672 = arith.subf %671, %665 : vector<8x128xf32>
    %673 = arith.mulf %672, %670 : vector<8x128xf32>
    %674 = arith.mulf %665, %640 : vector<8x128xf32>
    %675 = arith.addf %673, %674 : vector<8x128xf32>
    %c56_226 = arith.constant 56 : index
    %c0_227 = arith.constant 0 : index
    %676 = vector.load %arg1[%c56_226, %c0_227] : memref<64x128xf32, #tpu.memory_space<vmem>>, vector<8x128xf32>
    %677 = arith.mulf %676, %675 : vector<8x128xf32>
    %cst_228 = arith.constant 1.000000e+00 : f32
    %678 = vector.broadcast %cst_228 : f32 to vector<8x128xf32>
    %679 = arith.subf %678, %676 : vector<8x128xf32>
    %680 = arith.mulf %679, %640 : vector<8x128xf32>
    %681 = arith.addf %677, %680 : vector<8x128xf32>
    %682 = arith.mulf %676, %675 : vector<8x128xf32>
    %c56_229 = arith.constant 56 : index
    %c0_230 = arith.constant 0 : index
    %683 = vector.load %arg15[%c56_229, %c0_230] : memref<64x128xf32, #tpu.memory_space<vmem>>, vector<8x128xf32>
    tpu.vector_store %arg15[%c56_229, %c0_230], %682 {strides = array<i32>} : memref<64x128xf32, #tpu.memory_space<vmem>>, vector<8x128xf32>,
    %c8_231 = arith.constant 8 : index
    %c0_232 = arith.constant 0 : index
    %684 = vector.load %arg14[%c8_231, %c0_232] : memref<16x128xf32, #tpu.memory_space<vmem>>, vector<8x128xf32>
    tpu.vector_store %arg14[%c8_231, %c0_232], %681 {strides = array<i32>} : memref<16x128xf32, #tpu.memory_space<vmem>>, vector<8x128xf32>,
    %c0_233 = arith.constant 0 : index
    %c0_234 = arith.constant 0 : index
    %685 = vector.load %arg15[%c0_233, %c0_234] : memref<64x128xf32, #tpu.memory_space<vmem>>, vector<64x128xf32>
    %686 = arith.truncf %685 : vector<64x128xf32> to vector<64x128xbf16>
    %c0_235 = arith.constant 0 : index
    %c0_236 = arith.constant 0 : index
    %687 = vector.load %arg11[%c0_235, %c0_236] : memref<128x128xbf16, #tpu.memory_space<vmem>>, vector<128x128xbf16>
    %cst_237 = arith.constant dense<0.000000e+00> : vector<64x128xf32>
    %688 = tpu.matmul %686, %687, %cst_237 {dimension_numbers = #tpu.dot_dimension_numbers<[1], [0], [0], [1], [0, 0, 1, 1], [], []>} : vector<64x128xbf16>, vector<128x128xbf16>, vector<64x128xf32> -> vector<64x128xf32>
    %c0_238 = arith.constant 0 : index
    %c0_239 = arith.constant 0 : index
    %689 = vector.load %arg12[%c0_238, %c0_239] : memref<1x128xf32, #tpu.memory_space<vmem>>, vector<1x128xf32>
    %690 = vector.broadcast %689 : vector<1x128xf32> to vector<64x128xf32>
    %691 = arith.addf %688, %690 : vector<64x128xf32>
    %c0_240 = arith.constant 0 : index
    %c0_241 = arith.constant 0 : index
    %692 = vector.load %arg13[%c0_240, %c0_241] : memref<64x128xf32, #tpu.memory_space<vmem>>, vector<64x128xf32>
    tpu.vector_store %arg13[%c0_240, %c0_241], %691 {strides = array<i32>} : memref<64x128xf32, #tpu.memory_space<vmem>>, vector<64x128xf32>,
    return
  }
}

</mosaic_0001>

<llo_original>
// kernel: _forward.1
$region0: #{_forward.1}
  #allocation0 [shape = 'u32[]', space=smem, size = 0x4, offset = 0x4, fixed_abs, tag = 'smem constant byte address 0x4 - core index']
  #allocation1 [shape = 'u32[144,128]{1,0:T(1,128)}', space=vmem, size = 0x12000, scoped, tag = 'internal scratch']
  #allocation2 [shape = 'f32[64,128]{1,0:T(8,128)}', space=vmem, size = 0x8000, scoped, tag = 'scratch operand']
  #allocation3 [shape = 'f32[64,384]{1,0:T(8,128)}', space=vmem, size = 0x18000, scoped, tag = 'scratch operand']
  %s0 = inlined_call_operand.vmem [shape: s32[64,1], index: 0, kind: input, shape index: {}]
  %s1 = inlined_call_operand.vmem [shape: f32[64,128], index: 1, kind: input, shape index: {}]
  %s2 = inlined_call_operand.vmem [shape: f32[16,128], index: 2, kind: input, shape index: {}]
  %s3 = inlined_call_operand.vmem [shape: bf16[128,384], index: 3, kind: input, shape index: {}]
  %s4 = inlined_call_operand.vmem [shape: f32[1,384], index: 4, kind: input, shape index: {}]
  %s5 = inlined_call_operand.hbm [shape: bf16[128,384], index: 5, kind: input, shape index: {}]
  %s6 = inlined_call_operand.vmem [shape: f32[1,384], index: 6, kind: input, shape index: {}]
  %s7 = inlined_call_operand.hbm [shape: bf16[128,384], index: 7, kind: input, shape index: {}]
  %s8 = inlined_call_operand.vmem [shape: f32[1,384], index: 8, kind: input, shape index: {}]
  %s9 = inlined_call_operand.hbm [shape: bf16[128,384], index: 9, kind: input, shape index: {}]
  %s10 = inlined_call_operand.vmem [shape: f32[1,384], index: 10, kind: input, shape index: {}]
  %s11 = inlined_call_operand.hbm [shape: bf16[128,128], index: 11, kind: input, shape index: {}]
  %s12 = inlined_call_operand.vmem [shape: f32[1,128], index: 12, kind: input, shape index: {}]
  %s13 = inlined_call_operand.hbm [shape: f32[64,128], index: 13, kind: output, shape index: {0}]
  %s14 = inlined_call_operand.vmem [shape: f32[16,128], index: 14, kind: output, shape index: {1}]
  %15 = xla_tuple %s13, %s14
  %s16 = sld [smem:[#allocation0]]
  $region86: #{_forward.1} parent=0
    _
  %s18 = ssub.s32 1, %s16
  %s19 = scalar_select 0, %s18, %s16
  $region1: #{_forward.1} parent=0
    #allocation4 [shape = 'u8[98304]{0}', space=vmem, size = 0x18000, scoped, tag = 'input window, operand 5, single buffered']
    #allocation5 [shape = 's32[1]{0}', space=sflag, size = 0x4, scoped, tag = 'scoped memory for _forward.1']
    #allocation6 [shape = 's32[1]{0}', space=sflag, size = 0x4, scoped, tag = 'scoped memory for _forward.1']
    #allocation7 [shape = 'u8[98304]{0}', space=vmem, size = 0x18000, scoped, tag = 'input window, operand 7, single buffered']
    #allocation8 [shape = 's32[1]{0}', space=sflag, size = 0x4, scoped, tag = 'scoped memory for _forward.1']
    #allocation9 [shape = 'u8[98304]{0}', space=vmem, size = 0x18000, scoped, tag = 'input window, operand 9, single buffered']
    #allocation10 [shape = 'u8[32768]{0}', space=vmem, size = 0x8000, scoped, tag = 'input window, operand 11, single buffered']
    #allocation11 [shape = 's32[1]{0}', space=sflag, size = 0x4, scoped, tag = 'scoped memory for _forward.1']
    #allocation12 [shape = 'u8[32768]{0}', space=vmem, size = 0x8000, scoped, tag = 'output window, operand 0, single buffered']
    %20 = vsyncpa [#allocation5], 0
    %21 = vsyncpa [#allocation8], 0
    %22 = vsyncpa [#allocation11], 0
    %23 = vsyncpa [#allocation6], 0
    // Predicated region
    $region2: #{_forward.1} parent=1 // pred_check
      _
    $region3: #{_forward.1} parent=1 // pred_check_branch
      %25 = sbr.rel (0) target = $region5
    $region4: #{_forward.1} parent=1 // pred_region
      _
    $region5: #{_forward.1} parent=1 // pred_fallthru
      _
    // Predicated region
    $region6: #{_forward.1} parent=1 // pred_check
      _
    $region7: #{_forward.1} parent=1 // pred_check_branch
      %27 = sbr.rel (0) target = $region9
    $region8: #{_forward.1} parent=1 // pred_region
      _
    $region9: #{_forward.1} parent=1 // pred_fallthru
      _
    // Predicated region
    $region10: #{_forward.1} parent=1 // pred_check
      _
    $region11: #{_forward.1} parent=1 // pred_check_branch
      %29 = sbr.rel (0) target = $region13
    $region12: #{_forward.1} parent=1 // pred_region
      _
    $region13: #{_forward.1} parent=1 // pred_fallthru
      _
    // Predicated region
    $region14: #{_forward.1} parent=1 // pred_check
      _
    $region15: #{_forward.1} parent=1 // pred_check_branch
      %31 = sbr.rel (0) target = $region17
    $region16: #{_forward.1} parent=1 // pred_region
      _
    $region17: #{_forward.1} parent=1 // pred_fallthru
      _
    // Predicated region
    $region18: #{_forward.1} parent=1 // pred_check
      _
    $region19: #{_forward.1} parent=1 // pred_check_branch
      %33 = sbr.rel (0) target = $region21
    $region20: #{_forward.1} parent=1 // pred_region
      _
    $region21: #{_forward.1} parent=1 // pred_fallthru
      _
    // Predicated region
    $region22: #{_forward.1} parent=1 // pred_check
      _
    $region23: #{_forward.1} parent=1 // pred_check_branch
      %35 = sbr.rel (0) target = $region25
    $region24: #{_forward.1} parent=1 // pred_region
      %s37 = ssub.s32 3072, 3072
      %38 = vsyncadd [#allocation5], %s37
      %s39 = sshll.u32 [#allocation4], 4
      %s40 = int_to_ptr.vmem [resolvable:$true] %s39
      %45 = dma.hbm_to_vmem [thread:$0]  %s5, 3072, %s40, [#allocation5], 192, 192, 12
    $region25: #{_forward.1} parent=1 // pred_fallthru
      _
    // Predicated region
    $region26: #{_forward.1} parent=1 // pred_check
      _
    $region27: #{_forward.1} parent=1 // pred_check_branch
      %47 = sbr.rel (0) target = $region29
    $region28: #{_forward.1} parent=1 // pred_region
      _
    $region29: #{_forward.1} parent=1 // pred_fallthru
      _
    // Predicated region
    $region30: #{_forward.1} parent=1 // pred_check
      _
    $region31: #{_forward.1} parent=1 // pred_check_branch
      %49 = sbr.rel (0) target = $region33
    $region32: #{_forward.1} parent=1 // pred_region
      %s51 = ssub.s32 3072, 3072
      %52 = vsyncadd [#allocation8], %s51
      %s53 = sshll.u32 [#allocation7], 4
      %s54 = int_to_ptr.vmem [resolvable:$true] %s53
      %59 = dma.hbm_to_vmem [thread:$0]  %s7, 3072, %s54, [#allocation8], 192, 192, 12
    $region33: #{_forward.1} parent=1 // pred_fallthru
      _
    // Predicated region
    $region34: #{_forward.1} parent=1 // pred_check
      _
    $region35: #{_forward.1} parent=1 // pred_check_branch
      %61 = sbr.rel (0) target = $region37
    $region36: #{_forward.1} parent=1 // pred_region
      _
    $region37: #{_forward.1} parent=1 // pred_fallthru
      _
    // Predicated region
    $region38: #{_forward.1} parent=1 // pred_check
      _
    $region39: #{_forward.1} parent=1 // pred_check_branch
      %63 = sbr.rel (0) target = $region41
    $region40: #{_forward.1} parent=1 // pred_region
      %s65 = ssub.s32 3072, 3072
      %66 = vsyncadd [#allocation8], %s65
      %s67 = sshll.u32 [#allocation9], 4
      %s68 = int_to_ptr.vmem [resolvable:$true] %s67
      %73 = dma.hbm_to_vmem [thread:$0]  %s9, 3072, %s68, [#allocation8], 192, 192, 12
    $region41: #{_forward.1} parent=1 // pred_fallthru
      _
    // Predicated region
    $region42: #{_forward.1} parent=1 // pred_check
      _
    $region43: #{_forward.1} parent=1 // pred_check_branch
      %75 = sbr.rel (0) target = $region45
    $region44: #{_forward.1} parent=1 // pred_region
      _
    $region45: #{_forward.1} parent=1 // pred_fallthru
      _
    // Predicated region
    $region46: #{_forward.1} parent=1 // pred_check
      _
    $region47: #{_forward.1} parent=1 // pred_check_branch
      %77 = sbr.rel (0) target = $region49
    $region48: #{_forward.1} parent=1 // pred_region
      %s79 = ssub.s32 1024, 1024
      %80 = vsyncadd [#allocation11], %s79
      %s81 = sshll.u32 [#allocation10], 4
      %s82 = int_to_ptr.vmem [resolvable:$true] %s81
      %87 = dma.hbm_to_vmem [thread:$0]  %s11, 1024, %s82, [#allocation11], 64, 64, 4
    $region49: #{_forward.1} parent=1 // pred_fallthru
      _
    // Predicated region
    $region50: #{_forward.1} parent=1 // pred_check
      _
    $region51: #{_forward.1} parent=1 // pred_check_branch
      %89 = sbr.rel (0) target = $region53
    $region52: #{_forward.1} parent=1 // pred_region
      _
    $region53: #{_forward.1} parent=1 // pred_fallthru
      _
    // Predicated region
    $region54: #{_forward.1} parent=1 // pred_check
      _
    $region55: #{_forward.1} parent=1 // pred_check_branch
      %91 = sbr.rel (0) target = $region57
    $region56: #{_forward.1} parent=1 // pred_region
      %92 = dma.done [#allocation5], 3072
    $region57: #{_forward.1} parent=1 // pred_fallthru
      _
    // Predicated region
    $region58: #{_forward.1} parent=1 // pred_check
      _
    $region59: #{_forward.1} parent=1 // pred_check_branch
      %94 = sbr.rel (0) target = $region61
    $region60: #{_forward.1} parent=1 // pred_region
      %95 = dma.done [#allocation8], 3072
    $region61: #{_forward.1} parent=1 // pred_fallthru
      _
    // Predicated region
    $region62: #{_forward.1} parent=1 // pred_check
      _
    $region63: #{_forward.1} parent=1 // pred_check_branch
      %97 = sbr.rel (0) target = $region65
    $region64: #{_forward.1} parent=1 // pred_region
      %98 = dma.done [#allocation8], 3072
    $region65: #{_forward.1} parent=1 // pred_fallthru
      _
    // Predicated region
    $region66: #{_forward.1} parent=1 // pred_check
      _
    $region67: #{_forward.1} parent=1 // pred_check_branch
      %100 = sbr.rel (0) target = $region69
    $region68: #{_forward.1} parent=1 // pred_region
      %101 = dma.done [#allocation11], 1024
    $region69: #{_forward.1} parent=1 // pred_fallthru
      _
    %v103 = vld [vmem:[%s0] sm:$0xff]
    %v104 = vld [vmem:[%s0 + $0x8] sm:$0xff]
    %v105 = vld [vmem:[%s0 + $0x10] sm:$0xff]
    %v106 = vld [vmem:[%s0 + $0x18] sm:$0xff]
    %v107 = vld [vmem:[%s0 + $0x20] sm:$0xff]
    %v108 = vld [vmem:[%s0 + $0x28] sm:$0xff]
    %v109 = vld [vmem:[%s0 + $0x30] sm:$0xff]
    %v110 = vld [vmem:[%s0 + $0x38] sm:$0xff]
    %v111 = vlaneseq
    %v112 = vand.u32 %v111, 127
    %113 = vset.pattern.permute.xlu0 0
    %114 = vperm.xlu0 %113, %v103
    %v115 = vpop.permute.xlu0 %114
    %116 = vset.pattern.permute.xlu0 0
    %117 = vperm.xlu0 %116, %v104
    %v118 = vpop.permute.xlu0 %117
    %119 = vset.pattern.permute.xlu0 0
    %120 = vperm.xlu0 %119, %v105
    %v121 = vpop.permute.xlu0 %120
    %122 = vset.pattern.permute.xlu0 0
    %123 = vperm.xlu0 %122, %v106
    %v124 = vpop.permute.xlu0 %123
    %125 = vset.pattern.permute.xlu0 0
    %126 = vperm.xlu0 %125, %v107
    %v127 = vpop.permute.xlu0 %126
    %128 = vset.pattern.permute.xlu0 0
    %129 = vperm.xlu0 %128, %v108
    %v130 = vpop.permute.xlu0 %129
    %131 = vset.pattern.permute.xlu0 0
    %132 = vperm.xlu0 %131, %v109
    %v133 = vpop.permute.xlu0 %132
    %134 = vset.pattern.permute.xlu0 0
    %135 = vperm.xlu0 %134, %v110
    %v136 = vpop.permute.xlu0 %135
    %vm137 = vcmp.eq.s32.totalorder %v115, %v112
    %vm138 = vcmp.eq.s32.totalorder %v118, %v112
    %vm139 = vcmp.eq.s32.totalorder %v121, %v112
    %vm140 = vcmp.eq.s32.totalorder %v124, %v112
    %vm141 = vcmp.eq.s32.totalorder %v127, %v112
    %vm142 = vcmp.eq.s32.totalorder %v130, %v112
    %vm143 = vcmp.eq.s32.totalorder %v133, %v112
    %vm144 = vcmp.eq.s32.totalorder %v136, %v112
    %v145 = vsel %vm137, 1, 0
    %v146 = vsel %vm138, 1, 0
    %v147 = vsel %vm139, 1, 0
    %v148 = vsel %vm140, 1, 0
    %v149 = vsel %vm141, 1, 0
    %v150 = vsel %vm142, 1, 0
    %v151 = vsel %vm143, 1, 0
    %v152 = vsel %vm144, 1, 0
    %v153 = vcvt.s32.f32 %v145
    %v154 = vcvt.s32.f32 %v146
    %v155 = vcvt.s32.f32 %v147
    %v156 = vcvt.s32.f32 %v148
    %v157 = vcvt.s32.f32 %v149
    %v158 = vcvt.s32.f32 %v150
    %v159 = vcvt.s32.f32 %v151
    %v160 = vcvt.s32.f32 %v152
    %v161 = vpack.c.bf16 %v154, %v153
    %v162 = vpack.c.bf16 %v156, %v155
    %v163 = vpack.c.bf16 %v158, %v157
    %v164 = vpack.c.bf16 %v160, %v159
    %v165 = vld [vmem:[%s3] sm:$0xff]
    %v166 = vld [vmem:[%s3 + $0x8] sm:$0xf]
    %v167 = vld [vmem:[%s3 + $0xc] sm:$0xff]
    %v168 = vld [vmem:[%s3 + $0x14] sm:$0xf]
    %v169 = vld [vmem:[%s3 + $0x18] sm:$0xff]
    %v170 = vld [vmem:[%s3 + $0x20] sm:$0xf]
    %v171 = vld [vmem:[%s3 + $0x24] sm:$0xff]
    %v172 = vld [vmem:[%s3 + $0x2c] sm:$0xf]
    %v173 = vld [vmem:[%s3 + $0x30] sm:$0xff]
    %v174 = vld [vmem:[%s3 + $0x38] sm:$0xf]
    %v175 = vld [vmem:[%s3 + $0x3c] sm:$0xff]
    %v176 = vld [vmem:[%s3 + $0x44] sm:$0xf]
    %v177 = vld [vmem:[%s3 + $0x48] sm:$0xff]
    %v178 = vld [vmem:[%s3 + $0x50] sm:$0xf]
    %v179 = vld [vmem:[%s3 + $0x54] sm:$0xff]
    %v180 = vld [vmem:[%s3 + $0x5c] sm:$0xf]
    %v181 = vld [vmem:[%s3 + $0x60] sm:$0xff]
    %v182 = vld [vmem:[%s3 + $0x68] sm:$0xf]
    %v183 = vld [vmem:[%s3 + $0x6c] sm:$0xff]
    %v184 = vld [vmem:[%s3 + $0x74] sm:$0xf]
    %v185 = vld [vmem:[%s3 + $0x78] sm:$0xff]
    %v186 = vld [vmem:[%s3 + $0x80] sm:$0xf]
    %v187 = vld [vmem:[%s3 + $0x84] sm:$0xff]
    %v188 = vld [vmem:[%s3 + $0x8c] sm:$0xf]
    %v189 = vld [vmem:[%s3 + $0x90] sm:$0xff]
    %v190 = vld [vmem:[%s3 + $0x98] sm:$0xf]
    %v191 = vld [vmem:[%s3 + $0x9c] sm:$0xff]
    %v192 = vld [vmem:[%s3 + $0xa4] sm:$0xf]
    %v193 = vld [vmem:[%s3 + $0xa8] sm:$0xff]
    %v194 = vld [vmem:[%s3 + $0xb0] sm:$0xf]
    %v195 = vld [vmem:[%s3 + $0xb4] sm:$0xff]
    %v196 = vld [vmem:[%s3 + $0xbc] sm:$0xf]
    %v197 = vld [vmem:[%s4] sm:$0x7]
    %v199 = vlaneseq
    %v200 = vshrl.u32 %v199, 7
    %v201 = vsub.s32 0, %v200
    %v202 = vrot.slane %v197, %v201
    %v203 = vlaneseq
    %v204 = vshrl.u32 %v203, 7
    %v205 = vsub.s32 1, %v204
    %v206 = vrot.slane %v197, %v205
    %v207 = vlaneseq
    %v208 = vshrl.u32 %v207, 7
    %v209 = vsub.s32 2, %v208
    %v210 = vrot.slane %v197, %v209
    %v246 = vunpack.c.l.b16 %v165
    %v247 = vunpack.c.h.b16 %v165
    %v248 = vunpack.c.l.b16 %v166
    %v249 = vunpack.c.l.b16 %v167
    %v250 = vunpack.c.h.b16 %v167
    %v251 = vunpack.c.l.b16 %v168
    %v252 = vunpack.c.l.b16 %v169
    %v253 = vunpack.c.h.b16 %v169
    %v254 = vunpack.c.l.b16 %v170
    %v255 = vunpack.c.l.b16 %v171
    %v256 = vunpack.c.h.b16 %v171
    %v257 = vunpack.c.l.b16 %v172
    %v258 = vunpack.c.l.b16 %v173
    %v259 = vunpack.c.h.b16 %v173
    %v260 = vunpack.c.l.b16 %v174
    %v261 = vunpack.c.l.b16 %v175
    %v262 = vunpack.c.h.b16 %v175
    %v263 = vunpack.c.l.b16 %v176
    %v264 = vunpack.c.l.b16 %v177
    %v265 = vunpack.c.h.b16 %v177
    %v266 = vunpack.c.l.b16 %v178
    %v267 = vunpack.c.l.b16 %v179
    %v268 = vunpack.c.h.b16 %v179
    %v269 = vunpack.c.l.b16 %v180
    %v270 = vunpack.c.l.b16 %v181
    %v271 = vunpack.c.h.b16 %v181
    %v272 = vunpack.c.l.b16 %v182
    %v273 = vunpack.c.l.b16 %v183
    %v274 = vunpack.c.h.b16 %v183
    %v275 = vunpack.c.l.b16 %v184
    %v276 = vunpack.c.l.b16 %v185
    %v277 = vunpack.c.h.b16 %v185
    %v278 = vunpack.c.l.b16 %v186
    %v279 = vunpack.c.l.b16 %v187
    %v280 = vunpack.c.h.b16 %v187
    %v281 = vunpack.c.l.b16 %v188
    %v282 = vunpack.c.l.b16 %v189
    %v283 = vunpack.c.h.b16 %v189
    %v284 = vunpack.c.l.b16 %v190
    %v285 = vunpack.c.l.b16 %v191
    %v286 = vunpack.c.h.b16 %v191
    %v287 = vunpack.c.l.b16 %v192
    %v288 = vunpack.c.l.b16 %v193
    %v289 = vunpack.c.h.b16 %v193
    %v290 = vunpack.c.l.b16 %v194
    %v291 = vunpack.c.l.b16 %v195
    %v292 = vunpack.c.h.b16 %v195
    %v293 = vunpack.c.l.b16 %v196
    %v294 = vpack.c.b16 %v249, %v246
    %v295 = vpack.c.b16 %v250, %v247
    %v296 = vpack.c.b16 %v251, %v248
    %v297 = vpack.c.b16 %v255, %v252
    %v298 = vpack.c.b16 %v256, %v253
    %v299 = vpack.c.b16 %v257, %v254
    %v300 = vpack.c.b16 %v261, %v258
    %v301 = vpack.c.b16 %v262, %v259
    %v302 = vpack.c.b16 %v263, %v260
    %v303 = vpack.c.b16 %v267, %v264
    %v304 = vpack.c.b16 %v268, %v265
    %v305 = vpack.c.b16 %v269, %v266
    %v306 = vpack.c.b16 %v273, %v270
    %v307 = vpack.c.b16 %v274, %v271
    %v308 = vpack.c.b16 %v275, %v272
    %v309 = vpack.c.b16 %v279, %v276
    %v310 = vpack.c.b16 %v280, %v277
    %v311 = vpack.c.b16 %v281, %v278
    %v312 = vpack.c.b16 %v285, %v282
    %v313 = vpack.c.b16 %v286, %v283
    %v314 = vpack.c.b16 %v287, %v284
    %v315 = vpack.c.b16 %v291, %v288
    %v316 = vpack.c.b16 %v292, %v289
    %v317 = vpack.c.b16 %v293, %v290
    %342 = vmatprep.subr.bf16.mxu0 %v295
    %343 = vmatpush1.bf16.msra.mxu0 %v294
    %344 = vmatprep.subr.bf16.mxu0 %v298
    %345 = vmatpush1.bf16.msra.mxu0 %v297
    %346 = vmatprep.subr.bf16.mxu0 %v301
    %347 = vmatpush1.bf16.msra.mxu0 %v300
    %348 = vmatprep.subr.bf16.mxu0 %v304
    %349 = vmatpush1.bf16.msra.mxu0 %v303
    %350 = vmatprep.subr.bf16.mxu0 %v307
    %351 = vmatpush1.bf16.msra.mxu0 %v306
    %352 = vmatprep.subr.bf16.mxu0 %v310
    %353 = vmatpush1.bf16.msra.mxu0 %v309
    %354 = vmatprep.subr.bf16.mxu0 %v313
    %355 = vmatpush1.bf16.msra.mxu0 %v312
    %356 = vmatprep.subr.bf16.mxu0 %v316
    %357 = vmatpush1.bf16.msra.mxu0 %v315
    %358 = vmatprep.subr.bf16.mxu0 0
    %359 = vmatpush1.bf16.msra.mxu0 0
    %360 = vmatprep.subr.bf16.mxu0 0
    %361 = vmatpush1.bf16.msra.mxu0 0
    %362 = vmatprep.subr.bf16.mxu0 0
    %363 = vmatpush1.bf16.msra.mxu0 0
    %364 = vmatprep.subr.bf16.mxu0 0
    %365 = vmatpush1.bf16.msra.mxu0 0
    %366 = vmatprep.subr.bf16.mxu0 0
    %367 = vmatpush1.bf16.msra.mxu0 0
    %368 = vmatprep.subr.bf16.mxu0 0
    %369 = vmatpush1.bf16.msra.mxu0 0
    %370 = vmatprep.subr.bf16.mxu0 0
    %371 = vmatpush1.bf16.msra.mxu0 0
    %372 = vmatprep.subr.bf16.mxu0 0
    %373 = vmatpush1.bf16.msra.mxu0 0
    %374 = vmatprep.mubr.bf16.mxu0 0
    %375 = vmatmul.mubr.bf16.gmra.mrb[0].mxu0 %v161
    %v376 = vpop.f32.mrb[0].mxu0
    %v377 = vadd.f32 %v202, %v376
    %v378 = vpop.f32.mrb[0].mxu0
    %v379 = vadd.f32 %v206, %v378
    %v380 = vpop.f32.mrb[0].mxu0
    %v381 = vadd.f32 %v202, %v380
    %v382 = vpop.f32.mrb[0].mxu0
    %v383 = vadd.f32 %v206, %v382
    %384 = vmatprep.mubr.bf16.mxu0 0
    %385 = vmatmul.mubr.bf16.gmra.mrb[0].mxu0 %v162
    %v386 = vpop.f32.mrb[0].mxu0
    %v387 = vadd.f32 %v202, %v386
    %v388 = vpop.f32.mrb[0].mxu0
    %v389 = vadd.f32 %v206, %v388
    %v390 = vpop.f32.mrb[0].mxu0
    %v391 = vadd.f32 %v202, %v390
    %v392 = vpop.f32.mrb[0].mxu0
    %v393 = vadd.f32 %v206, %v392
    %394 = vmatprep.mubr.bf16.mxu0 0
    %395 = vmatmul.mubr.bf16.gmra.mrb[0].mxu0 %v163
    %v396 = vpop.f32.mrb[0].mxu0
    %v397 = vadd.f32 %v202, %v396
    %v398 = vpop.f32.mrb[0].mxu0
    %v399 = vadd.f32 %v206, %v398
    %v400 = vpop.f32.mrb[0].mxu0
    %v401 = vadd.f32 %v202, %v400
    %v402 = vpop.f32.mrb[0].mxu0
    %v403 = vadd.f32 %v206, %v402
    %404 = vmatprep.mubr.bf16.mxu0 0
    %405 = vmatmul.mubr.bf16.gmra.mrb[0].mxu0 %v164
    %v406 = vpop.f32.mrb[0].mxu0
    %v407 = vadd.f32 %v202, %v406
    %v408 = vpop.f32.mrb[0].mxu0
    %v409 = vadd.f32 %v206, %v408
    %v410 = vpop.f32.mrb[0].mxu0
    %v411 = vadd.f32 %v202, %v410
    %v412 = vpop.f32.mrb[0].mxu0
    %v413 = vadd.f32 %v206, %v412
    %414 = vdwg.mxu0
    %415 = vmatprep.subr.bf16.mxu0 0
    %416 = vmatpush1.bf16.msra.mxu0 %v296
    %417 = vmatprep.subr.bf16.mxu0 0
    %418 = vmatpush1.bf16.msra.mxu0 %v299
    %419 = vmatprep.subr.bf16.mxu0 0
    %420 = vmatpush1.bf16.msra.mxu0 %v302
    %421 = vmatprep.subr.bf16.mxu0 0
    %422 = vmatpush1.bf16.msra.mxu0 %v305
    %423 = vmatprep.subr.bf16.mxu0 0
    %424 = vmatpush1.bf16.msra.mxu0 %v308
    %425 = vmatprep.subr.bf16.mxu0 0
    %426 = vmatpush1.bf16.msra.mxu0 %v311
    %427 = vmatprep.subr.bf16.mxu0 0
    %428 = vmatpush1.bf16.msra.mxu0 %v314
    %429 = vmatprep.subr.bf16.mxu0 0
    %430 = vmatpush1.bf16.msra.mxu0 %v317
    %431 = vmatprep.subr.bf16.mxu0 0
    %432 = vmatpush1.bf16.msra.mxu0 0
    %433 = vmatprep.subr.bf16.mxu0 0
    %434 = vmatpush1.bf16.msra.mxu0 0
    %435 = vmatprep.subr.bf16.mxu0 0
    %436 = vmatpush1.bf16.msra.mxu0 0
    %437 = vmatprep.subr.bf16.mxu0 0
    %438 = vmatpush1.bf16.msra.mxu0 0
    %439 = vmatprep.subr.bf16.mxu0 0
    %440 = vmatpush1.bf16.msra.mxu0 0
    %441 = vmatprep.subr.bf16.mxu0 0
    %442 = vmatpush1.bf16.msra.mxu0 0
    %443 = vmatprep.subr.bf16.mxu0 0
    %444 = vmatpush1.bf16.msra.mxu0 0
    %445 = vmatprep.subr.bf16.mxu0 0
    %446 = vmatpush1.bf16.msra.mxu0 0
    %447 = vmatprep.mubr.bf16.mxu0 0
    %448 = vmatmul.mubr.bf16.gmra.mrb[0].mxu0 %v161
    %v449 = vpop.f32.mrb[0].mxu0
    %v450 = vadd.f32 %v210, %v449
    %v451 = vpop.f32.mrb[0].mxu0
    %v452 = vpop.f32.mrb[0].mxu0
    %v453 = vadd.f32 %v210, %v452
    %v454 = vpop.f32.mrb[0].mxu0
    %455 = vmatprep.mubr.bf16.mxu0 0
    %456 = vmatmul.mubr.bf16.gmra.mrb[0].mxu0 %v162
    %v457 = vpop.f32.mrb[0].mxu0
    %v458 = vadd.f32 %v210, %v457
    %v459 = vpop.f32.mrb[0].mxu0
    %v460 = vpop.f32.mrb[0].mxu0
    %v461 = vadd.f32 %v210, %v460
    %v462 = vpop.f32.mrb[0].mxu0
    %463 = vmatprep.mubr.bf16.mxu0 0
    %464 = vmatmul.mubr.bf16.gmra.mrb[0].mxu0 %v163
    %v465 = vpop.f32.mrb[0].mxu0
    %v466 = vadd.f32 %v210, %v465
    %v467 = vpop.f32.mrb[0].mxu0
    %v468 = vpop.f32.mrb[0].mxu0
    %v469 = vadd.f32 %v210, %v468
    %v470 = vpop.f32.mrb[0].mxu0
    %471 = vmatprep.mubr.bf16.mxu0 0
    %472 = vmatmul.mubr.bf16.gmra.mrb[0].mxu0 %v164
    %v473 = vpop.f32.mrb[0].mxu0
    %v474 = vadd.f32 %v210, %v473
    %v475 = vpop.f32.mrb[0].mxu0
    %v476 = vpop.f32.mrb[0].mxu0
    %v477 = vadd.f32 %v210, %v476
    %v478 = vpop.f32.mrb[0].mxu0
    %479 = vdwg.mxu0
    %480 = vst [vmem:[#allocation3] sm:$0xff] %v377
    %481 = vst [vmem:[#allocation3 + $0x8] sm:$0xff] %v379
    %482 = vst [vmem:[#allocation3 + $0x10] sm:$0xff] %v450
    %483 = vst [vmem:[#allocation3 + $0x18] sm:$0xff] %v381
    %484 = vst [vmem:[#allocation3 + $0x20] sm:$0xff] %v383
    %485 = vst [vmem:[#allocation3 + $0x28] sm:$0xff] %v453
    %486 = vst [vmem:[#allocation3 + $0x30] sm:$0xff] %v387
    %487 = vst [vmem:[#allocation3 + $0x38] sm:$0xff] %v389
    %488 = vst [vmem:[#allocation3 + $0x40] sm:$0xff] %v458
    %489 = vst [vmem:[#allocation3 + $0x48] sm:$0xff] %v391
    %490 = vst [vmem:[#allocation3 + $0x50] sm:$0xff] %v393
    %491 = vst [vmem:[#allocation3 + $0x58] sm:$0xff] %v461
    %492 = vst [vmem:[#allocation3 + $0x60] sm:$0xff] %v397
    %493 = vst [vmem:[#allocation3 + $0x68] sm:$0xff] %v399
    %494 = vst [vmem:[#allocation3 + $0x70] sm:$0xff] %v466
    %495 = vst [vmem:[#allocation3 + $0x78] sm:$0xff] %v401
    %496 = vst [vmem:[#allocation3 + $0x80] sm:$0xff] %v403
    %497 = vst [vmem:[#allocation3 + $0x88] sm:$0xff] %v469
    %498 = vst [vmem:[#allocation3 + $0x90] sm:$0xff] %v407
    %499 = vst [vmem:[#allocation3 + $0x98] sm:$0xff] %v409
    %500 = vst [vmem:[#allocation3 + $0xa0] sm:$0xff] %v474
    %501 = vst [vmem:[#allocation3 + $0xa8] sm:$0xff] %v411
    %502 = vst [vmem:[#allocation3 + $0xb0] sm:$0xff] %v413
    %503 = vst [vmem:[#allocation3 + $0xb8] sm:$0xff] %v477
    %v504 = vld [vmem:[#allocation4] sm:$0xff]
    %v505 = vld [vmem:[#allocation4 + $0x8] sm:$0xf]
    %v506 = vld [vmem:[#allocation4 + $0xc] sm:$0xff]
    %v507 = vld [vmem:[#allocation4 + $0x14] sm:$0xf]
    %v508 = vld [vmem:[#allocation4 + $0x18] sm:$0xff]
    %v509 = vld [vmem:[#allocation4 + $0x20] sm:$0xf]
    %v510 = vld [vmem:[#allocation4 + $0x24] sm:$0xff]
    %v511 = vld [vmem:[#allocation4 + $0x2c] sm:$0xf]
    %v512 = vld [vmem:[#allocation4 + $0x30] sm:$0xff]
    %v513 = vld [vmem:[#allocation4 + $0x38] sm:$0xf]
    %v514 = vld [vmem:[#allocation4 + $0x3c] sm:$0xff]
    %v515 = vld [vmem:[#allocation4 + $0x44] sm:$0xf]
    %v516 = vld [vmem:[#allocation4 + $0x48] sm:$0xff]
    %v517 = vld [vmem:[#allocation4 + $0x50] sm:$0xf]
    %v518 = vld [vmem:[#allocation4 + $0x54] sm:$0xff]
    %v519 = vld [vmem:[#allocation4 + $0x5c] sm:$0xf]
    %v520 = vld [vmem:[#allocation4 + $0x60] sm:$0xff]
    %v521 = vld [vmem:[#allocation4 + $0x68] sm:$0xf]
    %v522 = vld [vmem:[#allocation4 + $0x6c] sm:$0xff]
    %v523 = vld [vmem:[#allocation4 + $0x74] sm:$0xf]
    %v524 = vld [vmem:[#allocation4 + $0x78] sm:$0xff]
    %v525 = vld [vmem:[#allocation4 + $0x80] sm:$0xf]
    %v526 = vld [vmem:[#allocation4 + $0x84] sm:$0xff]
    %v527 = vld [vmem:[#allocation4 + $0x8c] sm:$0xf]
    %v528 = vld [vmem:[#allocation4 + $0x90] sm:$0xff]
    %v529 = vld [vmem:[#allocation4 + $0x98] sm:$0xf]
    %v530 = vld [vmem:[#allocation4 + $0x9c] sm:$0xff]
    %v531 = vld [vmem:[#allocation4 + $0xa4] sm:$0xf]
    %v532 = vld [vmem:[#allocation4 + $0xa8] sm:$0xff]
    %v533 = vld [vmem:[#allocation4 + $0xb0] sm:$0xf]
    %v534 = vld [vmem:[#allocation4 + $0xb4] sm:$0xff]
    %v535 = vld [vmem:[#allocation4 + $0xbc] sm:$0xf]
    %v536 = vld [vmem:[%s6] sm:$0x7]
    %v537 = vld [vmem:[%s2] sm:$0xff]
    %v538 = vld [vmem:[#allocation3] sm:$0xff]
    %v539 = vld [vmem:[#allocation3 + $0x8] sm:$0xff]
    %v540 = vld [vmem:[#allocation3 + $0x10] sm:$0xff]
    %v541 = vpack.c.bf16 %v537, %v537
    %v543 = vlaneseq
    %v544 = vshrl.u32 %v543, 7
    %v545 = vsub.s32 0, %v544
    %v546 = vrot.slane %v536, %v545
    %v547 = vlaneseq
    %v548 = vshrl.u32 %v547, 7
    %v549 = vsub.s32 1, %v548
    %v550 = vrot.slane %v536, %v549
    %v551 = vlaneseq
    %v552 = vshrl.u32 %v551, 7
    %v553 = vsub.s32 2, %v552
    %v554 = vrot.slane %v536, %v553
    %v590 = vunpack.c.l.b16 %v504
    %v591 = vunpack.c.h.b16 %v504
    %v592 = vunpack.c.l.b16 %v505
    %v593 = vunpack.c.l.b16 %v506
    %v594 = vunpack.c.h.b16 %v506
    %v595 = vunpack.c.l.b16 %v507
    %v596 = vunpack.c.l.b16 %v508
    %v597 = vunpack.c.h.b16 %v508
    %v598 = vunpack.c.l.b16 %v509
    %v599 = vunpack.c.l.b16 %v510
    %v600 = vunpack.c.h.b16 %v510
    %v601 = vunpack.c.l.b16 %v511
    %v602 = vunpack.c.l.b16 %v512
    %v603 = vunpack.c.h.b16 %v512
    %v604 = vunpack.c.l.b16 %v513
    %v605 = vunpack.c.l.b16 %v514
    %v606 = vunpack.c.h.b16 %v514
    %v607 = vunpack.c.l.b16 %v515
    %v608 = vunpack.c.l.b16 %v516
    %v609 = vunpack.c.h.b16 %v516
    %v610 = vunpack.c.l.b16 %v517
    %v611 = vunpack.c.l.b16 %v518
    %v612 = vunpack.c.h.b16 %v518
    %v613 = vunpack.c.l.b16 %v519
    %v614 = vunpack.c.l.b16 %v520
    %v615 = vunpack.c.h.b16 %v520
    %v616 = vunpack.c.l.b16 %v521
    %v617 = vunpack.c.l.b16 %v522
    %v618 = vunpack.c.h.b16 %v522
    %v619 = vunpack.c.l.b16 %v523
    %v620 = vunpack.c.l.b16 %v524
    %v621 = vunpack.c.h.b16 %v524
    %v622 = vunpack.c.l.b16 %v525
    %v623 = vunpack.c.l.b16 %v526
    %v624 = vunpack.c.h.b16 %v526
    %v625 = vunpack.c.l.b16 %v527
    %v626 = vunpack.c.l.b16 %v528
    %v627 = vunpack.c.h.b16 %v528
    %v628 = vunpack.c.l.b16 %v529
    %v629 = vunpack.c.l.b16 %v530
    %v630 = vunpack.c.h.b16 %v530
    %v631 = vunpack.c.l.b16 %v531
    %v632 = vunpack.c.l.b16 %v532
    %v633 = vunpack.c.h.b16 %v532
    %v634 = vunpack.c.l.b16 %v533
    %v635 = vunpack.c.l.b16 %v534
    %v636 = vunpack.c.h.b16 %v534
    %v637 = vunpack.c.l.b16 %v535
    %v638 = vpack.c.b16 %v593, %v590
    %v639 = vpack.c.b16 %v594, %v591
    %v640 = vpack.c.b16 %v595, %v592
    %v641 = vpack.c.b16 %v599, %v596
    %v642 = vpack.c.b16 %v600, %v597
    %v643 = vpack.c.b16 %v601, %v598
    %v644 = vpack.c.b16 %v605, %v602
    %v645 = vpack.c.b16 %v606, %v603
    %v646 = vpack.c.b16 %v607, %v604
    %v647 = vpack.c.b16 %v611, %v608
    %v648 = vpack.c.b16 %v612, %v609
    %v649 = vpack.c.b16 %v613, %v610
    %v650 = vpack.c.b16 %v617, %v614
    %v651 = vpack.c.b16 %v618, %v615
    %v652 = vpack.c.b16 %v619, %v616
    %v653 = vpack.c.b16 %v623, %v620
    %v654 = vpack.c.b16 %v624, %v621
    %v655 = vpack.c.b16 %v625, %v622
    %v656 = vpack.c.b16 %v629, %v626
    %v657 = vpack.c.b16 %v630, %v627
    %v658 = vpack.c.b16 %v631, %v628
    %v659 = vpack.c.b16 %v635, %v632
    %v660 = vpack.c.b16 %v636, %v633
    %v661 = vpack.c.b16 %v637, %v634
    %686 = vmatprep.subr.bf16.mxu0 %v639
    %687 = vmatpush1.bf16.msra.mxu0 %v638
    %688 = vmatprep.subr.bf16.mxu0 %v642
    %689 = vmatpush1.bf16.msra.mxu0 %v641
    %690 = vmatprep.subr.bf16.mxu0 %v645
    %691 = vmatpush1.bf16.msra.mxu0 %v644
    %692 = vmatprep.subr.bf16.mxu0 %v648
    %693 = vmatpush1.bf16.msra.mxu0 %v647
    %694 = vmatprep.subr.bf16.mxu0 %v651
    %695 = vmatpush1.bf16.msra.mxu0 %v650
    %696 = vmatprep.subr.bf16.mxu0 %v654
    %697 = vmatpush1.bf16.msra.mxu0 %v653
    %698 = vmatprep.subr.bf16.mxu0 %v657
    %699 = vmatpush1.bf16.msra.mxu0 %v656
    %700 = vmatprep.subr.bf16.mxu0 %v660
    %701 = vmatpush1.bf16.msra.mxu0 %v659
    %702 = vmatprep.subr.bf16.mxu0 0
    %703 = vmatpush1.bf16.msra.mxu0 0
    %704 = vmatprep.subr.bf16.mxu0 0
    %705 = vmatpush1.bf16.msra.mxu0 0
    %706 = vmatprep.subr.bf16.mxu0 0
    %707 = vmatpush1.bf16.msra.mxu0 0
    %708 = vmatprep.subr.bf16.mxu0 0
    %709 = vmatpush1.bf16.msra.mxu0 0
    %710 = vmatprep.subr.bf16.mxu0 0
    %711 = vmatpush1.bf16.msra.mxu0 0
    %712 = vmatprep.subr.bf16.mxu0 0
    %713 = vmatpush1.bf16.msra.mxu0 0
    %714 = vmatprep.subr.bf16.mxu0 0
    %715 = vmatpush1.bf16.msra.mxu0 0
    %716 = vmatprep.subr.bf16.mxu0 0
    %717 = vmatpush1.bf16.msra.mxu0 0
    %718 = vmatprep.mubr.bf16.mxu0 0
    %719 = vmatmul.mubr.bf16.gmra.mrb[0].mxu0 %v541
    %v720 = vpop.f32.mrb[0].mxu0
    %v721 = vadd.f32 %v546, %v720
    %v722 = vpop.f32.mrb[0].mxu0
    %v723 = vadd.f32 %v550, %v722
    %v724 = vpop.f32.mrb[0].mxu0
    %v725 = vpop.f32.mrb[0].mxu0
    %726 = vdwg.mxu0
    %727 = vmatprep.subr.bf16.mxu0 0
    %728 = vmatpush1.bf16.msra.mxu0 %v640
    %729 = vmatprep.subr.bf16.mxu0 0
    %730 = vmatpush1.bf16.msra.mxu0 %v643
    %731 = vmatprep.subr.bf16.mxu0 0
    %732 = vmatpush1.bf16.msra.mxu0 %v646
    %733 = vmatprep.subr.bf16.mxu0 0
    %734 = vmatpush1.bf16.msra.mxu0 %v649
    %735 = vmatprep.subr.bf16.mxu0 0
    %736 = vmatpush1.bf16.msra.mxu0 %v652
    %737 = vmatprep.subr.bf16.mxu0 0
    %738 = vmatpush1.bf16.msra.mxu0 %v655
    %739 = vmatprep.subr.bf16.mxu0 0
    %740 = vmatpush1.bf16.msra.mxu0 %v658
    %741 = vmatprep.subr.bf16.mxu0 0
    %742 = vmatpush1.bf16.msra.mxu0 %v661
    %743 = vmatprep.subr.bf16.mxu0 0
    %744 = vmatpush1.bf16.msra.mxu0 0
    %745 = vmatprep.subr.bf16.mxu0 0
    %746 = vmatpush1.bf16.msra.mxu0 0
    %747 = vmatprep.subr.bf16.mxu0 0
    %748 = vmatpush1.bf16.msra.mxu0 0
    %749 = vmatprep.subr.bf16.mxu0 0
    %750 = vmatpush1.bf16.msra.mxu0 0
    %751 = vmatprep.subr.bf16.mxu0 0
    %752 = vmatpush1.bf16.msra.mxu0 0
    %753 = vmatprep.subr.bf16.mxu0 0
    %754 = vmatpush1.bf16.msra.mxu0 0
    %755 = vmatprep.subr.bf16.mxu0 0
    %756 = vmatpush1.bf16.msra.mxu0 0
    %757 = vmatprep.subr.bf16.mxu0 0
    %758 = vmatpush1.bf16.msra.mxu0 0
    %759 = vmatprep.mubr.bf16.mxu0 0
    %760 = vmatmul.mubr.bf16.gmra.mrb[0].mxu0 %v541
    %v761 = vpop.f32.mrb[0].mxu0
    %v762 = vadd.f32 %v554, %v761
    %v763 = vpop.f32.mrb[0].mxu0
    %v764 = vpop.f32.mrb[0].mxu0
    %v765 = vpop.f32.mrb[0].mxu0
    %766 = vdwg.mxu0
    %v767 = vadd.f32 %v538, %v721
    %v768 = vsub.f32 0.0, %v767
    %v769 = vmul.f32 %v768, 1.442695
    %v770 = vpow.pop %v769
    %v771 = vadd.f32 %v770, 1.0
    %v772 = vrcp.pop %v771
    %v773 = vadd.f32 %v539, %v723
    %v774 = vsub.f32 0.0, %v773
    %v775 = vmul.f32 %v774, 1.442695
    %v776 = vpow.pop %v775
    %v777 = vadd.f32 %v776, 1.0
    %v778 = vrcp.pop %v777
    %v779 = vmul.f32 %v772, %v762
    %v780 = vadd.f32 %v540, %v779
    %v781 = vtanh.pop %v780
    %v782 = vsub.f32 1.0, %v778
    %v783 = vmul.f32 %v782, %v781
    %v784 = vmul.f32 %v778, %v537
    %v785 = vadd.f32 %v783, %v784
    %v786 = vld [vmem:[%s1] sm:$0xff]
    %v787 = vmul.f32 %v786, %v785
    %v788 = vsub.f32 1.0, %v786
    %v789 = vmul.f32 %v788, %v537
    %v790 = vadd.f32 %v787, %v789
    %791 = vst [vmem:[#allocation2] sm:$0xff] %v787
    %v792 = vld [vmem:[#allocation3 + $0x18] sm:$0xff]
    %v793 = vld [vmem:[#allocation3 + $0x20] sm:$0xff]
    %v794 = vld [vmem:[#allocation3 + $0x28] sm:$0xff]
    %v795 = vpack.c.bf16 %v790, %v790
    %796 = vmatprep.subr.bf16.mxu0 %v639
    %797 = vmatpush1.bf16.msra.mxu0 %v638
    %798 = vmatprep.subr.bf16.mxu0 %v642
    %799 = vmatpush1.bf16.msra.mxu0 %v641
    %800 = vmatprep.subr.bf16.mxu0 %v645
    %801 = vmatpush1.bf16.msra.mxu0 %v644
    %802 = vmatprep.subr.bf16.mxu0 %v648
    %803 = vmatpush1.bf16.msra.mxu0 %v647
    %804 = vmatprep.subr.bf16.mxu0 %v651
    %805 = vmatpush1.bf16.msra.mxu0 %v650
    %806 = vmatprep.subr.bf16.mxu0 %v654
    %807 = vmatpush1.bf16.msra.mxu0 %v653
    %808 = vmatprep.subr.bf16.mxu0 %v657
    %809 = vmatpush1.bf16.msra.mxu0 %v656
    %810 = vmatprep.subr.bf16.mxu0 %v660
    %811 = vmatpush1.bf16.msra.mxu0 %v659
    %812 = vmatprep.subr.bf16.mxu0 0
    %813 = vmatpush1.bf16.msra.mxu0 0
    %814 = vmatprep.subr.bf16.mxu0 0
    %815 = vmatpush1.bf16.msra.mxu0 0
    %816 = vmatprep.subr.bf16.mxu0 0
    %817 = vmatpush1.bf16.msra.mxu0 0
    %818 = vmatprep.subr.bf16.mxu0 0
    %819 = vmatpush1.bf16.msra.mxu0 0
    %820 = vmatprep.subr.bf16.mxu0 0
    %821 = vmatpush1.bf16.msra.mxu0 0
    %822 = vmatprep.subr.bf16.mxu0 0
    %823 = vmatpush1.bf16.msra.mxu0 0
    %824 = vmatprep.subr.bf16.mxu0 0
    %825 = vmatpush1.bf16.msra.mxu0 0
    %826 = vmatprep.subr.bf16.mxu0 0
    %827 = vmatpush1.bf16.msra.mxu0 0
    %828 = vmatprep.mubr.bf16.mxu0 0
    %829 = vmatmul.mubr.bf16.gmra.mrb[0].mxu0 %v795
    %v830 = vpop.f32.mrb[0].mxu0
    %v831 = vadd.f32 %v546, %v830
    %v832 = vpop.f32.mrb[0].mxu0
    %v833 = vadd.f32 %v550, %v832
    %v834 = vpop.f32.mrb[0].mxu0
    %v835 = vpop.f32.mrb[0].mxu0
    %836 = vdwg.mxu0
    %837 = vmatprep.subr.bf16.mxu0 0
    %838 = vmatpush1.bf16.msra.mxu0 %v640
    %839 = vmatprep.subr.bf16.mxu0 0
    %840 = vmatpush1.bf16.msra.mxu0 %v643
    %841 = vmatprep.subr.bf16.mxu0 0
    %842 = vmatpush1.bf16.msra.mxu0 %v646
    %843 = vmatprep.subr.bf16.mxu0 0
    %844 = vmatpush1.bf16.msra.mxu0 %v649
    %845 = vmatprep.subr.bf16.mxu0 0
    %846 = vmatpush1.bf16.msra.mxu0 %v652
    %847 = vmatprep.subr.bf16.mxu0 0
    %848 = vmatpush1.bf16.msra.mxu0 %v655
    %849 = vmatprep.subr.bf16.mxu0 0
    %850 = vmatpush1.bf16.msra.mxu0 %v658
    %851 = vmatprep.subr.bf16.mxu0 0
    %852 = vmatpush1.bf16.msra.mxu0 %v661
    %853 = vmatprep.subr.bf16.mxu0 0
    %854 = vmatpush1.bf16.msra.mxu0 0
    %855 = vmatprep.subr.bf16.mxu0 0
    %856 = vmatpush1.bf16.msra.mxu0 0
    %857 = vmatprep.subr.bf16.mxu0 0
    %858 = vmatpush1.bf16.msra.mxu0 0
    %859 = vmatprep.subr.bf16.mxu0 0
    %860 = vmatpush1.bf16.msra.mxu0 0
    %861 = vmatprep.subr.bf16.mxu0 0
    %862 = vmatpush1.bf16.msra.mxu0 0
    %863 = vmatprep.subr.bf16.mxu0 0
    %864 = vmatpush1.bf16.msra.mxu0 0
    %865 = vmatprep.subr.bf16.mxu0 0
    %866 = vmatpush1.bf16.msra.mxu0 0
    %867 = vmatprep.subr.bf16.mxu0 0
    %868 = vmatpush1.bf16.msra.mxu0 0
    %869 = vmatprep.mubr.bf16.mxu0 0
    %870 = vmatmul.mubr.bf16.gmra.mrb[0].mxu0 %v795
    %v871 = vpop.f32.mrb[0].mxu0
    %v872 = vadd.f32 %v554, %v871
    %v873 = vpop.f32.mrb[0].mxu0
    %v874 = vpop.f32.mrb[0].mxu0
    %v875 = vpop.f32.mrb[0].mxu0
    %876 = vdwg.mxu0
    %v877 = vadd.f32 %v792, %v831
    %v878 = vsub.f32 0.0, %v877
    %v879 = vmul.f32 %v878, 1.442695
    %v880 = vpow.pop %v879
    %v881 = vadd.f32 %v880, 1.0
    %v882 = vrcp.pop %v881
    %v883 = vadd.f32 %v793, %v833
    %v884 = vsub.f32 0.0, %v883
    %v885 = vmul.f32 %v884, 1.442695
    %v886 = vpow.pop %v885
    %v887 = vadd.f32 %v886, 1.0
    %v888 = vrcp.pop %v887
    %v889 = vmul.f32 %v882, %v872
    %v890 = vadd.f32 %v794, %v889
    %v891 = vtanh.pop %v890
    %v892 = vsub.f32 1.0, %v888
    %v893 = vmul.f32 %v892, %v891
    %v894 = vmul.f32 %v888, %v790
    %v895 = vadd.f32 %v893, %v894
    %v896 = vld [vmem:[%s1 + $0x8] sm:$0xff]
    %v897 = vmul.f32 %v896, %v895
    %v898 = vsub.f32 1.0, %v896
    %v899 = vmul.f32 %v898, %v790
    %v900 = vadd.f32 %v897, %v899
    %901 = vst [vmem:[#allocation2 + $0x8] sm:$0xff] %v897
    %v902 = vld [vmem:[#allocation3 + $0x30] sm:$0xff]
    %v903 = vld [vmem:[#allocation3 + $0x38] sm:$0xff]
    %v904 = vld [vmem:[#allocation3 + $0x40] sm:$0xff]
    %v905 = vpack.c.bf16 %v900, %v900
    %906 = vmatprep.subr.bf16.mxu0 %v639
    %907 = vmatpush1.bf16.msra.mxu0 %v638
    %908 = vmatprep.subr.bf16.mxu0 %v642
    %909 = vmatpush1.bf16.msra.mxu0 %v641
    %910 = vmatprep.subr.bf16.mxu0 %v645
    %911 = vmatpush1.bf16.msra.mxu0 %v644
    %912 = vmatprep.subr.bf16.mxu0 %v648
    %913 = vmatpush1.bf16.msra.mxu0 %v647
    %914 = vmatprep.subr.bf16.mxu0 %v651
    %915 = vmatpush1.bf16.msra.mxu0 %v650
    %916 = vmatprep.subr.bf16.mxu0 %v654
    %917 = vmatpush1.bf16.msra.mxu0 %v653
    %918 = vmatprep.subr.bf16.mxu0 %v657
    %919 = vmatpush1.bf16.msra.mxu0 %v656
    %920 = vmatprep.subr.bf16.mxu0 %v660
    %921 = vmatpush1.bf16.msra.mxu0 %v659
    %922 = vmatprep.subr.bf16.mxu0 0
    %923 = vmatpush1.bf16.msra.mxu0 0
    %924 = vmatprep.subr.bf16.mxu0 0
    %925 = vmatpush1.bf16.msra.mxu0 0
    %926 = vmatprep.subr.bf16.mxu0 0
    %927 = vmatpush1.bf16.msra.mxu0 0
    %928 = vmatprep.subr.bf16.mxu0 0
    %929 = vmatpush1.bf16.msra.mxu0 0
    %930 = vmatprep.subr.bf16.mxu0 0
    %931 = vmatpush1.bf16.msra.mxu0 0
    %932 = vmatprep.subr.bf16.mxu0 0
    %933 = vmatpush1.bf16.msra.mxu0 0
    %934 = vmatprep.subr.bf16.mxu0 0
    %935 = vmatpush1.bf16.msra.mxu0 0
    %936 = vmatprep.subr.bf16.mxu0 0
    %937 = vmatpush1.bf16.msra.mxu0 0
    %938 = vmatprep.mubr.bf16.mxu0 0
    %939 = vmatmul.mubr.bf16.gmra.mrb[0].mxu0 %v905
    %v940 = vpop.f32.mrb[0].mxu0
    %v941 = vadd.f32 %v546, %v940
    %v942 = vpop.f32.mrb[0].mxu0
    %v943 = vadd.f32 %v550, %v942
    %v944 = vpop.f32.mrb[0].mxu0
    %v945 = vpop.f32.mrb[0].mxu0
    %946 = vdwg.mxu0
    %947 = vmatprep.subr.bf16.mxu0 0
    %948 = vmatpush1.bf16.msra.mxu0 %v640
    %949 = vmatprep.subr.bf16.mxu0 0
    %950 = vmatpush1.bf16.msra.mxu0 %v643
    %951 = vmatprep.subr.bf16.mxu0 0
    %952 = vmatpush1.bf16.msra.mxu0 %v646
    %953 = vmatprep.subr.bf16.mxu0 0
    %954 = vmatpush1.bf16.msra.mxu0 %v649
    %955 = vmatprep.subr.bf16.mxu0 0
    %956 = vmatpush1.bf16.msra.mxu0 %v652
    %957 = vmatprep.subr.bf16.mxu0 0
    %958 = vmatpush1.bf16.msra.mxu0 %v655
    %959 = vmatprep.subr.bf16.mxu0 0
    %960 = vmatpush1.bf16.msra.mxu0 %v658
    %961 = vmatprep.subr.bf16.mxu0 0
    %962 = vmatpush1.bf16.msra.mxu0 %v661
    %963 = vmatprep.subr.bf16.mxu0 0
    %964 = vmatpush1.bf16.msra.mxu0 0
    %965 = vmatprep.subr.bf16.mxu0 0
    %966 = vmatpush1.bf16.msra.mxu0 0
    %967 = vmatprep.subr.bf16.mxu0 0
    %968 = vmatpush1.bf16.msra.mxu0 0
    %969 = vmatprep.subr.bf16.mxu0 0
    %970 = vmatpush1.bf16.msra.mxu0 0
    %971 = vmatprep.subr.bf16.mxu0 0
    %972 = vmatpush1.bf16.msra.mxu0 0
    %973 = vmatprep.subr.bf16.mxu0 0
    %974 = vmatpush1.bf16.msra.mxu0 0
    %975 = vmatprep.subr.bf16.mxu0 0
    %976 = vmatpush1.bf16.msra.mxu0 0
    %977 = vmatprep.subr.bf16.mxu0 0
    %978 = vmatpush1.bf16.msra.mxu0 0
    %979 = vmatprep.mubr.bf16.mxu0 0
    %980 = vmatmul.mubr.bf16.gmra.mrb[0].mxu0 %v905
    %v981 = vpop.f32.mrb[0].mxu0
    %v982 = vadd.f32 %v554, %v981
    %v983 = vpop.f32.mrb[0].mxu0
    %v984 = vpop.f32.mrb[0].mxu0
    %v985 = vpop.f32.mrb[0].mxu0
    %986 = vdwg.mxu0
    %v987 = vadd.f32 %v902, %v941
    %v988 = vsub.f32 0.0, %v987
    %v989 = vmul.f32 %v988, 1.442695
    %v990 = vpow.pop %v989
    %v991 = vadd.f32 %v990, 1.0
    %v992 = vrcp.pop %v991
    %v993 = vadd.f32 %v903, %v943
    %v994 = vsub.f32 0.0, %v993
    %v995 = vmul.f32 %v994, 1.442695
    %v996 = vpow.pop %v995
    %v997 = vadd.f32 %v996, 1.0
    %v998 = vrcp.pop %v997
    %v999 = vmul.f32 %v992, %v982
    %v1000 = vadd.f32 %v904, %v999
    %v1001 = vtanh.pop %v1000
    %v1002 = vsub.f32 1.0, %v998
    %v1003 = vmul.f32 %v1002, %v1001
    %v1004 = vmul.f32 %v998, %v900
    %v1005 = vadd.f32 %v1003, %v1004
    %v1006 = vld [vmem:[%s1 + $0x10] sm:$0xff]
    %v1007 = vmul.f32 %v1006, %v1005
    %v1008 = vsub.f32 1.0, %v1006
    %v1009 = vmul.f32 %v1008, %v900
    %v1010 = vadd.f32 %v1007, %v1009
    %1011 = vst [vmem:[#allocation2 + $0x10] sm:$0xff] %v1007
    %v1012 = vld [vmem:[#allocation3 + $0x48] sm:$0xff]
    %v1013 = vld [vmem:[#allocation3 + $0x50] sm:$0xff]
    %v1014 = vld [vmem:[#allocation3 + $0x58] sm:$0xff]
    %v1015 = vpack.c.bf16 %v1010, %v1010
    %1016 = vmatprep.subr.bf16.mxu0 %v639
    %1017 = vmatpush1.bf16.msra.mxu0 %v638
    %1018 = vmatprep.subr.bf16.mxu0 %v642
    %1019 = vmatpush1.bf16.msra.mxu0 %v641
    %1020 = vmatprep.subr.bf16.mxu0 %v645
    %1021 = vmatpush1.bf16.msra.mxu0 %v644
    %1022 = vmatprep.subr.bf16.mxu0 %v648
    %1023 = vmatpush1.bf16.msra.mxu0 %v647
    %1024 = vmatprep.subr.bf16.mxu0 %v651
    %1025 = vmatpush1.bf16.msra.mxu0 %v650
    %1026 = vmatprep.subr.bf16.mxu0 %v654
    %1027 = vmatpush1.bf16.msra.mxu0 %v653
    %1028 = vmatprep.subr.bf16.mxu0 %v657
    %1029 = vmatpush1.bf16.msra.mxu0 %v656
    %1030 = vmatprep.subr.bf16.mxu0 %v660
    %1031 = vmatpush1.bf16.msra.mxu0 %v659
    %1032 = vmatprep.subr.bf16.mxu0 0
    %1033 = vmatpush1.bf16.msra.mxu0 0
    %1034 = vmatprep.subr.bf16.mxu0 0
    %1035 = vmatpush1.bf16.msra.mxu0 0
    %1036 = vmatprep.subr.bf16.mxu0 0
    %1037 = vmatpush1.bf16.msra.mxu0 0
    %1038 = vmatprep.subr.bf16.mxu0 0
    %1039 = vmatpush1.bf16.msra.mxu0 0
    %1040 = vmatprep.subr.bf16.mxu0 0
    %1041 = vmatpush1.bf16.msra.mxu0 0
    %1042 = vmatprep.subr.bf16.mxu0 0
    %1043 = vmatpush1.bf16.msra.mxu0 0
    %1044 = vmatprep.subr.bf16.mxu0 0
    %1045 = vmatpush1.bf16.msra.mxu0 0
    %1046 = vmatprep.subr.bf16.mxu0 0
    %1047 = vmatpush1.bf16.msra.mxu0 0
    %1048 = vmatprep.mubr.bf16.mxu0 0
    %1049 = vmatmul.mubr.bf16.gmra.mrb[0].mxu0 %v1015
    %v1050 = vpop.f32.mrb[0].mxu0
    %v1051 = vadd.f32 %v546, %v1050
    %v1052 = vpop.f32.mrb[0].mxu0
    %v1053 = vadd.f32 %v550, %v1052
    %v1054 = vpop.f32.mrb[0].mxu0
    %v1055 = vpop.f32.mrb[0].mxu0
    %1056 = vdwg.mxu0
    %1057 = vmatprep.subr.bf16.mxu0 0
    %1058 = vmatpush1.bf16.msra.mxu0 %v640
    %1059 = vmatprep.subr.bf16.mxu0 0
    %1060 = vmatpush1.bf16.msra.mxu0 %v643
    %1061 = vmatprep.subr.bf16.mxu0 0
    %1062 = vmatpush1.bf16.msra.mxu0 %v646
    %1063 = vmatprep.subr.bf16.mxu0 0
    %1064 = vmatpush1.bf16.msra.mxu0 %v649
    %1065 = vmatprep.subr.bf16.mxu0 0
    %1066 = vmatpush1.bf16.msra.mxu0 %v652
    %1067 = vmatprep.subr.bf16.mxu0 0
    %1068 = vmatpush1.bf16.msra.mxu0 %v655
    %1069 = vmatprep.subr.bf16.mxu0 0
    %1070 = vmatpush1.bf16.msra.mxu0 %v658
    %1071 = vmatprep.subr.bf16.mxu0 0
    %1072 = vmatpush1.bf16.msra.mxu0 %v661
    %1073 = vmatprep.subr.bf16.mxu0 0
    %1074 = vmatpush1.bf16.msra.mxu0 0
    %1075 = vmatprep.subr.bf16.mxu0 0
    %1076 = vmatpush1.bf16.msra.mxu0 0
    %1077 = vmatprep.subr.bf16.mxu0 0
    %1078 = vmatpush1.bf16.msra.mxu0 0
    %1079 = vmatprep.subr.bf16.mxu0 0
    %1080 = vmatpush1.bf16.msra.mxu0 0
    %1081 = vmatprep.subr.bf16.mxu0 0
    %1082 = vmatpush1.bf16.msra.mxu0 0
    %1083 = vmatprep.subr.bf16.mxu0 0
    %1084 = vmatpush1.bf16.msra.mxu0 0
    %1085 = vmatprep.subr.bf16.mxu0 0
    %1086 = vmatpush1.bf16.msra.mxu0 0
    %1087 = vmatprep.subr.bf16.mxu0 0
    %1088 = vmatpush1.bf16.msra.mxu0 0
    %1089 = vmatprep.mubr.bf16.mxu0 0
    %1090 = vmatmul.mubr.bf16.gmra.mrb[0].mxu0 %v1015
    %v1091 = vpop.f32.mrb[0].mxu0
    %v1092 = vadd.f32 %v554, %v1091
    %v1093 = vpop.f32.mrb[0].mxu0
    %v1094 = vpop.f32.mrb[0].mxu0
    %v1095 = vpop.f32.mrb[0].mxu0
    %1096 = vdwg.mxu0
    %v1097 = vadd.f32 %v1012, %v1051
    %v1098 = vsub.f32 0.0, %v1097
    %v1099 = vmul.f32 %v1098, 1.442695
    %v1100 = vpow.pop %v1099
    %v1101 = vadd.f32 %v1100, 1.0
    %v1102 = vrcp.pop %v1101
    %v1103 = vadd.f32 %v1013, %v1053
    %v1104 = vsub.f32 0.0, %v1103
    %v1105 = vmul.f32 %v1104, 1.442695
    %v1106 = vpow.pop %v1105
    %v1107 = vadd.f32 %v1106, 1.0
    %v1108 = vrcp.pop %v1107
    %v1109 = vmul.f32 %v1102, %v1092
    %v1110 = vadd.f32 %v1014, %v1109
    %v1111 = vtanh.pop %v1110
    %v1112 = vsub.f32 1.0, %v1108
    %v1113 = vmul.f32 %v1112, %v1111
    %v1114 = vmul.f32 %v1108, %v1010
    %v1115 = vadd.f32 %v1113, %v1114
    %v1116 = vld [vmem:[%s1 + $0x18] sm:$0xff]
    %v1117 = vmul.f32 %v1116, %v1115
    %v1118 = vsub.f32 1.0, %v1116
    %v1119 = vmul.f32 %v1118, %v1010
    %v1120 = vadd.f32 %v1117, %v1119
    %1121 = vst [vmem:[#allocation2 + $0x18] sm:$0xff] %v1117
    %v1122 = vld [vmem:[#allocation3 + $0x60] sm:$0xff]
    %v1123 = vld [vmem:[#allocation3 + $0x68] sm:$0xff]
    %v1124 = vld [vmem:[#allocation3 + $0x70] sm:$0xff]
    %v1125 = vpack.c.bf16 %v1120, %v1120
    %1126 = vmatprep.subr.bf16.mxu0 %v639
    %1127 = vmatpush1.bf16.msra.mxu0 %v638
    %1128 = vmatprep.subr.bf16.mxu0 %v642
    %1129 = vmatpush1.bf16.msra.mxu0 %v641
    %1130 = vmatprep.subr.bf16.mxu0 %v645
    %1131 = vmatpush1.bf16.msra.mxu0 %v644
    %1132 = vmatprep.subr.bf16.mxu0 %v648
    %1133 = vmatpush1.bf16.msra.mxu0 %v647
    %1134 = vmatprep.subr.bf16.mxu0 %v651
    %1135 = vmatpush1.bf16.msra.mxu0 %v650
    %1136 = vmatprep.subr.bf16.mxu0 %v654
    %1137 = vmatpush1.bf16.msra.mxu0 %v653
    %1138 = vmatprep.subr.bf16.mxu0 %v657
    %1139 = vmatpush1.bf16.msra.mxu0 %v656
    %1140 = vmatprep.subr.bf16.mxu0 %v660
    %1141 = vmatpush1.bf16.msra.mxu0 %v659
    %1142 = vmatprep.subr.bf16.mxu0 0
    %1143 = vmatpush1.bf16.msra.mxu0 0
    %1144 = vmatprep.subr.bf16.mxu0 0
    %1145 = vmatpush1.bf16.msra.mxu0 0
    %1146 = vmatprep.subr.bf16.mxu0 0
    %1147 = vmatpush1.bf16.msra.mxu0 0
    %1148 = vmatprep.subr.bf16.mxu0 0
    %1149 = vmatpush1.bf16.msra.mxu0 0
    %1150 = vmatprep.subr.bf16.mxu0 0
    %1151 = vmatpush1.bf16.msra.mxu0 0
    %1152 = vmatprep.subr.bf16.mxu0 0
    %1153 = vmatpush1.bf16.msra.mxu0 0
    %1154 = vmatprep.subr.bf16.mxu0 0
    %1155 = vmatpush1.bf16.msra.mxu0 0
    %1156 = vmatprep.subr.bf16.mxu0 0
    %1157 = vmatpush1.bf16.msra.mxu0 0
    %1158 = vmatprep.mubr.bf16.mxu0 0
    %1159 = vmatmul.mubr.bf16.gmra.mrb[0].mxu0 %v1125
    %v1160 = vpop.f32.mrb[0].mxu0
    %v1161 = vadd.f32 %v546, %v1160
    %v1162 = vpop.f32.mrb[0].mxu0
    %v1163 = vadd.f32 %v550, %v1162
    %v1164 = vpop.f32.mrb[0].mxu0
    %v1165 = vpop.f32.mrb[0].mxu0
    %1166 = vdwg.mxu0
    %1167 = vmatprep.subr.bf16.mxu0 0
    %1168 = vmatpush1.bf16.msra.mxu0 %v640
    %1169 = vmatprep.subr.bf16.mxu0 0
    %1170 = vmatpush1.bf16.msra.mxu0 %v643
    %1171 = vmatprep.subr.bf16.mxu0 0
    %1172 = vmatpush1.bf16.msra.mxu0 %v646
    %1173 = vmatprep.subr.bf16.mxu0 0
    %1174 = vmatpush1.bf16.msra.mxu0 %v649
    %1175 = vmatprep.subr.bf16.mxu0 0
    %1176 = vmatpush1.bf16.msra.mxu0 %v652
    %1177 = vmatprep.subr.bf16.mxu0 0
    %1178 = vmatpush1.bf16.msra.mxu0 %v655
    %1179 = vmatprep.subr.bf16.mxu0 0
    %1180 = vmatpush1.bf16.msra.mxu0 %v658
    %1181 = vmatprep.subr.bf16.mxu0 0
    %1182 = vmatpush1.bf16.msra.mxu0 %v661
    %1183 = vmatprep.subr.bf16.mxu0 0
    %1184 = vmatpush1.bf16.msra.mxu0 0
    %1185 = vmatprep.subr.bf16.mxu0 0
    %1186 = vmatpush1.bf16.msra.mxu0 0
    %1187 = vmatprep.subr.bf16.mxu0 0
    %1188 = vmatpush1.bf16.msra.mxu0 0
    %1189 = vmatprep.subr.bf16.mxu0 0
    %1190 = vmatpush1.bf16.msra.mxu0 0
    %1191 = vmatprep.subr.bf16.mxu0 0
    %1192 = vmatpush1.bf16.msra.mxu0 0
    %1193 = vmatprep.subr.bf16.mxu0 0
    %1194 = vmatpush1.bf16.msra.mxu0 0
    %1195 = vmatprep.subr.bf16.mxu0 0
    %1196 = vmatpush1.bf16.msra.mxu0 0
    %1197 = vmatprep.subr.bf16.mxu0 0
    %1198 = vmatpush1.bf16.msra.mxu0 0
    %1199 = vmatprep.mubr.bf16.mxu0 0
    %1200 = vmatmul.mubr.bf16.gmra.mrb[0].mxu0 %v1125
    %v1201 = vpop.f32.mrb[0].mxu0
    %v1202 = vadd.f32 %v554, %v1201
    %v1203 = vpop.f32.mrb[0].mxu0
    %v1204 = vpop.f32.mrb[0].mxu0
    %v1205 = vpop.f32.mrb[0].mxu0
    %1206 = vdwg.mxu0
    %v1207 = vadd.f32 %v1122, %v1161
    %v1208 = vsub.f32 0.0, %v1207
    %v1209 = vmul.f32 %v1208, 1.442695
    %v1210 = vpow.pop %v1209
    %v1211 = vadd.f32 %v1210, 1.0
    %v1212 = vrcp.pop %v1211
    %v1213 = vadd.f32 %v1123, %v1163
    %v1214 = vsub.f32 0.0, %v1213
    %v1215 = vmul.f32 %v1214, 1.442695
    %v1216 = vpow.pop %v1215
    %v1217 = vadd.f32 %v1216, 1.0
    %v1218 = vrcp.pop %v1217
    %v1219 = vmul.f32 %v1212, %v1202
    %v1220 = vadd.f32 %v1124, %v1219
    %v1221 = vtanh.pop %v1220
    %v1222 = vsub.f32 1.0, %v1218
    %v1223 = vmul.f32 %v1222, %v1221
    %v1224 = vmul.f32 %v1218, %v1120
    %v1225 = vadd.f32 %v1223, %v1224
    %v1226 = vld [vmem:[%s1 + $0x20] sm:$0xff]
    %v1227 = vmul.f32 %v1226, %v1225
    %v1228 = vsub.f32 1.0, %v1226
    %v1229 = vmul.f32 %v1228, %v1120
    %v1230 = vadd.f32 %v1227, %v1229
    %1231 = vst [vmem:[#allocation2 + $0x20] sm:$0xff] %v1227
    %v1232 = vld [vmem:[#allocation3 + $0x78] sm:$0xff]
    %v1233 = vld [vmem:[#allocation3 + $0x80] sm:$0xff]
    %v1234 = vld [vmem:[#allocation3 + $0x88] sm:$0xff]
    %v1235 = vpack.c.bf16 %v1230, %v1230
    %1236 = vmatprep.subr.bf16.mxu0 %v639
    %1237 = vmatpush1.bf16.msra.mxu0 %v638
    %1238 = vmatprep.subr.bf16.mxu0 %v642
    %1239 = vmatpush1.bf16.msra.mxu0 %v641
    %1240 = vmatprep.subr.bf16.mxu0 %v645
    %1241 = vmatpush1.bf16.msra.mxu0 %v644
    %1242 = vmatprep.subr.bf16.mxu0 %v648
    %1243 = vmatpush1.bf16.msra.mxu0 %v647
    %1244 = vmatprep.subr.bf16.mxu0 %v651
    %1245 = vmatpush1.bf16.msra.mxu0 %v650
    %1246 = vmatprep.subr.bf16.mxu0 %v654
    %1247 = vmatpush1.bf16.msra.mxu0 %v653
    %1248 = vmatprep.subr.bf16.mxu0 %v657
    %1249 = vmatpush1.bf16.msra.mxu0 %v656
    %1250 = vmatprep.subr.bf16.mxu0 %v660
    %1251 = vmatpush1.bf16.msra.mxu0 %v659
    %1252 = vmatprep.subr.bf16.mxu0 0
    %1253 = vmatpush1.bf16.msra.mxu0 0
    %1254 = vmatprep.subr.bf16.mxu0 0
    %1255 = vmatpush1.bf16.msra.mxu0 0
    %1256 = vmatprep.subr.bf16.mxu0 0
    %1257 = vmatpush1.bf16.msra.mxu0 0
    %1258 = vmatprep.subr.bf16.mxu0 0
    %1259 = vmatpush1.bf16.msra.mxu0 0
    %1260 = vmatprep.subr.bf16.mxu0 0
    %1261 = vmatpush1.bf16.msra.mxu0 0
    %1262 = vmatprep.subr.bf16.mxu0 0
    %1263 = vmatpush1.bf16.msra.mxu0 0
    %1264 = vmatprep.subr.bf16.mxu0 0
    %1265 = vmatpush1.bf16.msra.mxu0 0
    %1266 = vmatprep.subr.bf16.mxu0 0
    %1267 = vmatpush1.bf16.msra.mxu0 0
    %1268 = vmatprep.mubr.bf16.mxu0 0
    %1269 = vmatmul.mubr.bf16.gmra.mrb[0].mxu0 %v1235
    %v1270 = vpop.f32.mrb[0].mxu0
    %v1271 = vadd.f32 %v546, %v1270
    %v1272 = vpop.f32.mrb[0].mxu0
    %v1273 = vadd.f32 %v550, %v1272
    %v1274 = vpop.f32.mrb[0].mxu0
    %v1275 = vpop.f32.mrb[0].mxu0
    %1276 = vdwg.mxu0
    %1277 = vmatprep.subr.bf16.mxu0 0
    %1278 = vmatpush1.bf16.msra.mxu0 %v640
    %1279 = vmatprep.subr.bf16.mxu0 0
    %1280 = vmatpush1.bf16.msra.mxu0 %v643
    %1281 = vmatprep.subr.bf16.mxu0 0
    %1282 = vmatpush1.bf16.msra.mxu0 %v646
    %1283 = vmatprep.subr.bf16.mxu0 0
    %1284 = vmatpush1.bf16.msra.mxu0 %v649
    %1285 = vmatprep.subr.bf16.mxu0 0
    %1286 = vmatpush1.bf16.msra.mxu0 %v652
    %1287 = vmatprep.subr.bf16.mxu0 0
    %1288 = vmatpush1.bf16.msra.mxu0 %v655
    %1289 = vmatprep.subr.bf16.mxu0 0
    %1290 = vmatpush1.bf16.msra.mxu0 %v658
    %1291 = vmatprep.subr.bf16.mxu0 0
    %1292 = vmatpush1.bf16.msra.mxu0 %v661
    %1293 = vmatprep.subr.bf16.mxu0 0
    %1294 = vmatpush1.bf16.msra.mxu0 0
    %1295 = vmatprep.subr.bf16.mxu0 0
    %1296 = vmatpush1.bf16.msra.mxu0 0
    %1297 = vmatprep.subr.bf16.mxu0 0
    %1298 = vmatpush1.bf16.msra.mxu0 0
    %1299 = vmatprep.subr.bf16.mxu0 0
    %1300 = vmatpush1.bf16.msra.mxu0 0
    %1301 = vmatprep.subr.bf16.mxu0 0
    %1302 = vmatpush1.bf16.msra.mxu0 0
    %1303 = vmatprep.subr.bf16.mxu0 0
    %1304 = vmatpush1.bf16.msra.mxu0 0
    %1305 = vmatprep.subr.bf16.mxu0 0
    %1306 = vmatpush1.bf16.msra.mxu0 0
    %1307 = vmatprep.subr.bf16.mxu0 0
    %1308 = vmatpush1.bf16.msra.mxu0 0
    %1309 = vmatprep.mubr.bf16.mxu0 0
    %1310 = vmatmul.mubr.bf16.gmra.mrb[0].mxu0 %v1235
    %v1311 = vpop.f32.mrb[0].mxu0
    %v1312 = vadd.f32 %v554, %v1311
    %v1313 = vpop.f32.mrb[0].mxu0
    %v1314 = vpop.f32.mrb[0].mxu0
    %v1315 = vpop.f32.mrb[0].mxu0
    %1316 = vdwg.mxu0
    %v1317 = vadd.f32 %v1232, %v1271
    %v1318 = vsub.f32 0.0, %v1317
    %v1319 = vmul.f32 %v1318, 1.442695
    %v1320 = vpow.pop %v1319
    %v1321 = vadd.f32 %v1320, 1.0
    %v1322 = vrcp.pop %v1321
    %v1323 = vadd.f32 %v1233, %v1273
    %v1324 = vsub.f32 0.0, %v1323
    %v1325 = vmul.f32 %v1324, 1.442695
    %v1326 = vpow.pop %v1325
    %v1327 = vadd.f32 %v1326, 1.0
    %v1328 = vrcp.pop %v1327
    %v1329 = vmul.f32 %v1322, %v1312
    %v1330 = vadd.f32 %v1234, %v1329
    %v1331 = vtanh.pop %v1330
    %v1332 = vsub.f32 1.0, %v1328
    %v1333 = vmul.f32 %v1332, %v1331
    %v1334 = vmul.f32 %v1328, %v1230
    %v1335 = vadd.f32 %v1333, %v1334
    %v1336 = vld [vmem:[%s1 + $0x28] sm:$0xff]
    %v1337 = vmul.f32 %v1336, %v1335
    %v1338 = vsub.f32 1.0, %v1336
    %v1339 = vmul.f32 %v1338, %v1230
    %v1340 = vadd.f32 %v1337, %v1339
    %1341 = vst [vmem:[#allocation2 + $0x28] sm:$0xff] %v1337
    %v1342 = vld [vmem:[#allocation3 + $0x90] sm:$0xff]
    %v1343 = vld [vmem:[#allocation3 + $0x98] sm:$0xff]
    %v1344 = vld [vmem:[#allocation3 + $0xa0] sm:$0xff]
    %v1345 = vpack.c.bf16 %v1340, %v1340
    %1346 = vmatprep.subr.bf16.mxu0 %v639
    %1347 = vmatpush1.bf16.msra.mxu0 %v638
    %1348 = vmatprep.subr.bf16.mxu0 %v642
    %1349 = vmatpush1.bf16.msra.mxu0 %v641
    %1350 = vmatprep.subr.bf16.mxu0 %v645
    %1351 = vmatpush1.bf16.msra.mxu0 %v644
    %1352 = vmatprep.subr.bf16.mxu0 %v648
    %1353 = vmatpush1.bf16.msra.mxu0 %v647
    %1354 = vmatprep.subr.bf16.mxu0 %v651
    %1355 = vmatpush1.bf16.msra.mxu0 %v650
    %1356 = vmatprep.subr.bf16.mxu0 %v654
    %1357 = vmatpush1.bf16.msra.mxu0 %v653
    %1358 = vmatprep.subr.bf16.mxu0 %v657
    %1359 = vmatpush1.bf16.msra.mxu0 %v656
    %1360 = vmatprep.subr.bf16.mxu0 %v660
    %1361 = vmatpush1.bf16.msra.mxu0 %v659
    %1362 = vmatprep.subr.bf16.mxu0 0
    %1363 = vmatpush1.bf16.msra.mxu0 0
    %1364 = vmatprep.subr.bf16.mxu0 0
    %1365 = vmatpush1.bf16.msra.mxu0 0
    %1366 = vmatprep.subr.bf16.mxu0 0
    %1367 = vmatpush1.bf16.msra.mxu0 0
    %1368 = vmatprep.subr.bf16.mxu0 0
    %1369 = vmatpush1.bf16.msra.mxu0 0
    %1370 = vmatprep.subr.bf16.mxu0 0
    %1371 = vmatpush1.bf16.msra.mxu0 0
    %1372 = vmatprep.subr.bf16.mxu0 0
    %1373 = vmatpush1.bf16.msra.mxu0 0
    %1374 = vmatprep.subr.bf16.mxu0 0
    %1375 = vmatpush1.bf16.msra.mxu0 0
    %1376 = vmatprep.subr.bf16.mxu0 0
    %1377 = vmatpush1.bf16.msra.mxu0 0
    %1378 = vmatprep.mubr.bf16.mxu0 0
    %1379 = vmatmul.mubr.bf16.gmra.mrb[0].mxu0 %v1345
    %v1380 = vpop.f32.mrb[0].mxu0
    %v1381 = vadd.f32 %v546, %v1380
    %v1382 = vpop.f32.mrb[0].mxu0
    %v1383 = vadd.f32 %v550, %v1382
    %v1384 = vpop.f32.mrb[0].mxu0
    %v1385 = vpop.f32.mrb[0].mxu0
    %1386 = vdwg.mxu0
    %1387 = vmatprep.subr.bf16.mxu0 0
    %1388 = vmatpush1.bf16.msra.mxu0 %v640
    %1389 = vmatprep.subr.bf16.mxu0 0
    %1390 = vmatpush1.bf16.msra.mxu0 %v643
    %1391 = vmatprep.subr.bf16.mxu0 0
    %1392 = vmatpush1.bf16.msra.mxu0 %v646
    %1393 = vmatprep.subr.bf16.mxu0 0
    %1394 = vmatpush1.bf16.msra.mxu0 %v649
    %1395 = vmatprep.subr.bf16.mxu0 0
    %1396 = vmatpush1.bf16.msra.mxu0 %v652
    %1397 = vmatprep.subr.bf16.mxu0 0
    %1398 = vmatpush1.bf16.msra.mxu0 %v655
    %1399 = vmatprep.subr.bf16.mxu0 0
    %1400 = vmatpush1.bf16.msra.mxu0 %v658
    %1401 = vmatprep.subr.bf16.mxu0 0
    %1402 = vmatpush1.bf16.msra.mxu0 %v661
    %1403 = vmatprep.subr.bf16.mxu0 0
    %1404 = vmatpush1.bf16.msra.mxu0 0
    %1405 = vmatprep.subr.bf16.mxu0 0
    %1406 = vmatpush1.bf16.msra.mxu0 0
    %1407 = vmatprep.subr.bf16.mxu0 0
    %1408 = vmatpush1.bf16.msra.mxu0 0
    %1409 = vmatprep.subr.bf16.mxu0 0
    %1410 = vmatpush1.bf16.msra.mxu0 0
    %1411 = vmatprep.subr.bf16.mxu0 0
    %1412 = vmatpush1.bf16.msra.mxu0 0
    %1413 = vmatprep.subr.bf16.mxu0 0
    %1414 = vmatpush1.bf16.msra.mxu0 0
    %1415 = vmatprep.subr.bf16.mxu0 0
    %1416 = vmatpush1.bf16.msra.mxu0 0
    %1417 = vmatprep.subr.bf16.mxu0 0
    %1418 = vmatpush1.bf16.msra.mxu0 0
    %1419 = vmatprep.mubr.bf16.mxu0 0
    %1420 = vmatmul.mubr.bf16.gmra.mrb[0].mxu0 %v1345
    %v1421 = vpop.f32.mrb[0].mxu0
    %v1422 = vadd.f32 %v554, %v1421
    %v1423 = vpop.f32.mrb[0].mxu0
    %v1424 = vpop.f32.mrb[0].mxu0
    %v1425 = vpop.f32.mrb[0].mxu0
    %1426 = vdwg.mxu0
    %v1427 = vadd.f32 %v1342, %v1381
    %v1428 = vsub.f32 0.0, %v1427
    %v1429 = vmul.f32 %v1428, 1.442695
    %v1430 = vpow.pop %v1429
    %v1431 = vadd.f32 %v1430, 1.0
    %v1432 = vrcp.pop %v1431
    %v1433 = vadd.f32 %v1343, %v1383
    %v1434 = vsub.f32 0.0, %v1433
    %v1435 = vmul.f32 %v1434, 1.442695
    %v1436 = vpow.pop %v1435
    %v1437 = vadd.f32 %v1436, 1.0
    %v1438 = vrcp.pop %v1437
    %v1439 = vmul.f32 %v1432, %v1422
    %v1440 = vadd.f32 %v1344, %v1439
    %v1441 = vtanh.pop %v1440
    %v1442 = vsub.f32 1.0, %v1438
    %v1443 = vmul.f32 %v1442, %v1441
    %v1444 = vmul.f32 %v1438, %v1340
    %v1445 = vadd.f32 %v1443, %v1444
    %v1446 = vld [vmem:[%s1 + $0x30] sm:$0xff]
    %v1447 = vmul.f32 %v1446, %v1445
    %v1448 = vsub.f32 1.0, %v1446
    %v1449 = vmul.f32 %v1448, %v1340
    %v1450 = vadd.f32 %v1447, %v1449
    %1451 = vst [vmem:[#allocation2 + $0x30] sm:$0xff] %v1447
    %v1452 = vld [vmem:[#allocation3 + $0xa8] sm:$0xff]
    %v1453 = vld [vmem:[#allocation3 + $0xb0] sm:$0xff]
    %v1454 = vld [vmem:[#allocation3 + $0xb8] sm:$0xff]
    %v1455 = vpack.c.bf16 %v1450, %v1450
    %1456 = vmatprep.subr.bf16.mxu0 %v639
    %1457 = vmatpush1.bf16.msra.mxu0 %v638
    %1458 = vmatprep.subr.bf16.mxu0 %v642
    %1459 = vmatpush1.bf16.msra.mxu0 %v641
    %1460 = vmatprep.subr.bf16.mxu0 %v645
    %1461 = vmatpush1.bf16.msra.mxu0 %v644
    %1462 = vmatprep.subr.bf16.mxu0 %v648
    %1463 = vmatpush1.bf16.msra.mxu0 %v647
    %1464 = vmatprep.subr.bf16.mxu0 %v651
    %1465 = vmatpush1.bf16.msra.mxu0 %v650
    %1466 = vmatprep.subr.bf16.mxu0 %v654
    %1467 = vmatpush1.bf16.msra.mxu0 %v653
    %1468 = vmatprep.subr.bf16.mxu0 %v657
    %1469 = vmatpush1.bf16.msra.mxu0 %v656
    %1470 = vmatprep.subr.bf16.mxu0 %v660
    %1471 = vmatpush1.bf16.msra.mxu0 %v659
    %1472 = vmatprep.subr.bf16.mxu0 0
    %1473 = vmatpush1.bf16.msra.mxu0 0
    %1474 = vmatprep.subr.bf16.mxu0 0
    %1475 = vmatpush1.bf16.msra.mxu0 0
    %1476 = vmatprep.subr.bf16.mxu0 0
    %1477 = vmatpush1.bf16.msra.mxu0 0
    %1478 = vmatprep.subr.bf16.mxu0 0
    %1479 = vmatpush1.bf16.msra.mxu0 0
    %1480 = vmatprep.subr.bf16.mxu0 0
    %1481 = vmatpush1.bf16.msra.mxu0 0
    %1482 = vmatprep.subr.bf16.mxu0 0
    %1483 = vmatpush1.bf16.msra.mxu0 0
    %1484 = vmatprep.subr.bf16.mxu0 0
    %1485 = vmatpush1.bf16.msra.mxu0 0
    %1486 = vmatprep.subr.bf16.mxu0 0
    %1487 = vmatpush1.bf16.msra.mxu0 0
    %1488 = vmatprep.mubr.bf16.mxu0 0
    %1489 = vmatmul.mubr.bf16.gmra.mrb[0].mxu0 %v1455
    %v1490 = vpop.f32.mrb[0].mxu0
    %v1491 = vadd.f32 %v546, %v1490
    %v1492 = vpop.f32.mrb[0].mxu0
    %v1493 = vadd.f32 %v550, %v1492
    %v1494 = vpop.f32.mrb[0].mxu0
    %v1495 = vpop.f32.mrb[0].mxu0
    %1496 = vdwg.mxu0
    %1497 = vmatprep.subr.bf16.mxu0 0
    %1498 = vmatpush1.bf16.msra.mxu0 %v640
    %1499 = vmatprep.subr.bf16.mxu0 0
    %1500 = vmatpush1.bf16.msra.mxu0 %v643
    %1501 = vmatprep.subr.bf16.mxu0 0
    %1502 = vmatpush1.bf16.msra.mxu0 %v646
    %1503 = vmatprep.subr.bf16.mxu0 0
    %1504 = vmatpush1.bf16.msra.mxu0 %v649
    %1505 = vmatprep.subr.bf16.mxu0 0
    %1506 = vmatpush1.bf16.msra.mxu0 %v652
    %1507 = vmatprep.subr.bf16.mxu0 0
    %1508 = vmatpush1.bf16.msra.mxu0 %v655
    %1509 = vmatprep.subr.bf16.mxu0 0
    %1510 = vmatpush1.bf16.msra.mxu0 %v658
    %1511 = vmatprep.subr.bf16.mxu0 0
    %1512 = vmatpush1.bf16.msra.mxu0 %v661
    %1513 = vmatprep.subr.bf16.mxu0 0
    %1514 = vmatpush1.bf16.msra.mxu0 0
    %1515 = vmatprep.subr.bf16.mxu0 0
    %1516 = vmatpush1.bf16.msra.mxu0 0
    %1517 = vmatprep.subr.bf16.mxu0 0
    %1518 = vmatpush1.bf16.msra.mxu0 0
    %1519 = vmatprep.subr.bf16.mxu0 0
    %1520 = vmatpush1.bf16.msra.mxu0 0
    %1521 = vmatprep.subr.bf16.mxu0 0
    %1522 = vmatpush1.bf16.msra.mxu0 0
    %1523 = vmatprep.subr.bf16.mxu0 0
    %1524 = vmatpush1.bf16.msra.mxu0 0
    %1525 = vmatprep.subr.bf16.mxu0 0
    %1526 = vmatpush1.bf16.msra.mxu0 0
    %1527 = vmatprep.subr.bf16.mxu0 0
    %1528 = vmatpush1.bf16.msra.mxu0 0
    %1529 = vmatprep.mubr.bf16.mxu0 0
    %1530 = vmatmul.mubr.bf16.gmra.mrb[0].mxu0 %v1455
    %v1531 = vpop.f32.mrb[0].mxu0
    %v1532 = vadd.f32 %v554, %v1531
    %v1533 = vpop.f32.mrb[0].mxu0
    %v1534 = vpop.f32.mrb[0].mxu0
    %v1535 = vpop.f32.mrb[0].mxu0
    %1536 = vdwg.mxu0
    %v1537 = vadd.f32 %v1452, %v1491
    %v1538 = vsub.f32 0.0, %v1537
    %v1539 = vmul.f32 %v1538, 1.442695
    %v1540 = vpow.pop %v1539
    %v1541 = vadd.f32 %v1540, 1.0
    %v1542 = vrcp.pop %v1541
    %v1543 = vadd.f32 %v1453, %v1493
    %v1544 = vsub.f32 0.0, %v1543
    %v1545 = vmul.f32 %v1544, 1.442695
    %v1546 = vpow.pop %v1545
    %v1547 = vadd.f32 %v1546, 1.0
    %v1548 = vrcp.pop %v1547
    %v1549 = vmul.f32 %v1542, %v1532
    %v1550 = vadd.f32 %v1454, %v1549
    %v1551 = vtanh.pop %v1550
    %v1552 = vsub.f32 1.0, %v1548
    %v1553 = vmul.f32 %v1552, %v1551
    %v1554 = vmul.f32 %v1548, %v1450
    %v1555 = vadd.f32 %v1553, %v1554
    %v1556 = vld [vmem:[%s1 + $0x38] sm:$0xff]
    %v1557 = vmul.f32 %v1556, %v1555
    %v1558 = vsub.f32 1.0, %v1556
    %v1559 = vmul.f32 %v1558, %v1450
    %v1560 = vadd.f32 %v1557, %v1559
    %1561 = vst [vmem:[#allocation2 + $0x38] sm:$0xff] %v1557
    %1562 = vst [vmem:[%s14] sm:$0xff] %v1560
    %v1563 = vld [vmem:[#allocation2] sm:$0xff]
    %v1564 = vld [vmem:[#allocation2 + $0x8] sm:$0xff]
    %v1565 = vld [vmem:[#allocation2 + $0x10] sm:$0xff]
    %v1566 = vld [vmem:[#allocation2 + $0x18] sm:$0xff]
    %v1567 = vld [vmem:[#allocation2 + $0x20] sm:$0xff]
    %v1568 = vld [vmem:[#allocation2 + $0x28] sm:$0xff]
    %v1569 = vld [vmem:[#allocation2 + $0x30] sm:$0xff]
    %v1570 = vld [vmem:[#allocation2 + $0x38] sm:$0xff]
    %v1571 = vpack.c.bf16 %v1564, %v1563
    %v1572 = vpack.c.bf16 %v1566, %v1565
    %v1573 = vpack.c.bf16 %v1568, %v1567
    %v1574 = vpack.c.bf16 %v1570, %v1569
    %v1575 = vld [vmem:[#allocation7] sm:$0xff]
    %v1576 = vld [vmem:[#allocation7 + $0x8] sm:$0xf]
    %v1577 = vld [vmem:[#allocation7 + $0xc] sm:$0xff]
    %v1578 = vld [vmem:[#allocation7 + $0x14] sm:$0xf]
    %v1579 = vld [vmem:[#allocation7 + $0x18] sm:$0xff]
    %v1580 = vld [vmem:[#allocation7 + $0x20] sm:$0xf]
    %v1581 = vld [vmem:[#allocation7 + $0x24] sm:$0xff]
    %v1582 = vld [vmem:[#allocation7 + $0x2c] sm:$0xf]
    %v1583 = vld [vmem:[#allocation7 + $0x30] sm:$0xff]
    %v1584 = vld [vmem:[#allocation7 + $0x38] sm:$0xf]
    %v1585 = vld [vmem:[#allocation7 + $0x3c] sm:$0xff]
    %v1586 = vld [vmem:[#allocation7 + $0x44] sm:$0xf]
    %v1587 = vld [vmem:[#allocation7 + $0x48] sm:$0xff]
    %v1588 = vld [vmem:[#allocation7 + $0x50] sm:$0xf]
    %v1589 = vld [vmem:[#allocation7 + $0x54] sm:$0xff]
    %v1590 = vld [vmem:[#allocation7 + $0x5c] sm:$0xf]
    %v1591 = vld [vmem:[#allocation7 + $0x60] sm:$0xff]
    %v1592 = vld [vmem:[#allocation7 + $0x68] sm:$0xf]
    %v1593 = vld [vmem:[#allocation7 + $0x6c] sm:$0xff]
    %v1594 = vld [vmem:[#allocation7 + $0x74] sm:$0xf]
    %v1595 = vld [vmem:[#allocation7 + $0x78] sm:$0xff]
    %v1596 = vld [vmem:[#allocation7 + $0x80] sm:$0xf]
    %v1597 = vld [vmem:[#allocation7 + $0x84] sm:$0xff]
    %v1598 = vld [vmem:[#allocation7 + $0x8c] sm:$0xf]
    %v1599 = vld [vmem:[#allocation7 + $0x90] sm:$0xff]
    %v1600 = vld [vmem:[#allocation7 + $0x98] sm:$0xf]
    %v1601 = vld [vmem:[#allocation7 + $0x9c] sm:$0xff]
    %v1602 = vld [vmem:[#allocation7 + $0xa4] sm:$0xf]
    %v1603 = vld [vmem:[#allocation7 + $0xa8] sm:$0xff]
    %v1604 = vld [vmem:[#allocation7 + $0xb0] sm:$0xf]
    %v1605 = vld [vmem:[#allocation7 + $0xb4] sm:$0xff]
    %v1606 = vld [vmem:[#allocation7 + $0xbc] sm:$0xf]
    %v1607 = vld [vmem:[%s8] sm:$0x7]
    %v1609 = vlaneseq
    %v1610 = vshrl.u32 %v1609, 7
    %v1611 = vsub.s32 0, %v1610
    %v1612 = vrot.slane %v1607, %v1611
    %v1613 = vlaneseq
    %v1614 = vshrl.u32 %v1613, 7
    %v1615 = vsub.s32 1, %v1614
    %v1616 = vrot.slane %v1607, %v1615
    %v1617 = vlaneseq
    %v1618 = vshrl.u32 %v1617, 7
    %v1619 = vsub.s32 2, %v1618
    %v1620 = vrot.slane %v1607, %v1619
    %v1656 = vunpack.c.l.b16 %v1575
    %v1657 = vunpack.c.h.b16 %v1575
    %v1658 = vunpack.c.l.b16 %v1576
    %v1659 = vunpack.c.l.b16 %v1577
    %v1660 = vunpack.c.h.b16 %v1577
    %v1661 = vunpack.c.l.b16 %v1578
    %v1662 = vunpack.c.l.b16 %v1579
    %v1663 = vunpack.c.h.b16 %v1579
    %v1664 = vunpack.c.l.b16 %v1580
    %v1665 = vunpack.c.l.b16 %v1581
    %v1666 = vunpack.c.h.b16 %v1581
    %v1667 = vunpack.c.l.b16 %v1582
    %v1668 = vunpack.c.l.b16 %v1583
    %v1669 = vunpack.c.h.b16 %v1583
    %v1670 = vunpack.c.l.b16 %v1584
    %v1671 = vunpack.c.l.b16 %v1585
    %v1672 = vunpack.c.h.b16 %v1585
    %v1673 = vunpack.c.l.b16 %v1586
    %v1674 = vunpack.c.l.b16 %v1587
    %v1675 = vunpack.c.h.b16 %v1587
    %v1676 = vunpack.c.l.b16 %v1588
    %v1677 = vunpack.c.l.b16 %v1589
    %v1678 = vunpack.c.h.b16 %v1589
    %v1679 = vunpack.c.l.b16 %v1590
    %v1680 = vunpack.c.l.b16 %v1591
    %v1681 = vunpack.c.h.b16 %v1591
    %v1682 = vunpack.c.l.b16 %v1592
    %v1683 = vunpack.c.l.b16 %v1593
    %v1684 = vunpack.c.h.b16 %v1593
    %v1685 = vunpack.c.l.b16 %v1594
    %v1686 = vunpack.c.l.b16 %v1595
    %v1687 = vunpack.c.h.b16 %v1595
    %v1688 = vunpack.c.l.b16 %v1596
    %v1689 = vunpack.c.l.b16 %v1597
    %v1690 = vunpack.c.h.b16 %v1597
    %v1691 = vunpack.c.l.b16 %v1598
    %v1692 = vunpack.c.l.b16 %v1599
    %v1693 = vunpack.c.h.b16 %v1599
    %v1694 = vunpack.c.l.b16 %v1600
    %v1695 = vunpack.c.l.b16 %v1601
    %v1696 = vunpack.c.h.b16 %v1601
    %v1697 = vunpack.c.l.b16 %v1602
    %v1698 = vunpack.c.l.b16 %v1603
    %v1699 = vunpack.c.h.b16 %v1603
    %v1700 = vunpack.c.l.b16 %v1604
    %v1701 = vunpack.c.l.b16 %v1605
    %v1702 = vunpack.c.h.b16 %v1605
    %v1703 = vunpack.c.l.b16 %v1606
    %v1704 = vpack.c.b16 %v1659, %v1656
    %v1705 = vpack.c.b16 %v1660, %v1657
    %v1706 = vpack.c.b16 %v1661, %v1658
    %v1707 = vpack.c.b16 %v1665, %v1662
    %v1708 = vpack.c.b16 %v1666, %v1663
    %v1709 = vpack.c.b16 %v1667, %v1664
    %v1710 = vpack.c.b16 %v1671, %v1668
    %v1711 = vpack.c.b16 %v1672, %v1669
    %v1712 = vpack.c.b16 %v1673, %v1670
    %v1713 = vpack.c.b16 %v1677, %v1674
    %v1714 = vpack.c.b16 %v1678, %v1675
    %v1715 = vpack.c.b16 %v1679, %v1676
    %v1716 = vpack.c.b16 %v1683, %v1680
    %v1717 = vpack.c.b16 %v1684, %v1681
    %v1718 = vpack.c.b16 %v1685, %v1682
    %v1719 = vpack.c.b16 %v1689, %v1686
    %v1720 = vpack.c.b16 %v1690, %v1687
    %v1721 = vpack.c.b16 %v1691, %v1688
    %v1722 = vpack.c.b16 %v1695, %v1692
    %v1723 = vpack.c.b16 %v1696, %v1693
    %v1724 = vpack.c.b16 %v1697, %v1694
    %v1725 = vpack.c.b16 %v1701, %v1698
    %v1726 = vpack.c.b16 %v1702, %v1699
    %v1727 = vpack.c.b16 %v1703, %v1700
    %1752 = vmatprep.subr.bf16.mxu0 %v1705
    %1753 = vmatpush1.bf16.msra.mxu0 %v1704
    %1754 = vmatprep.subr.bf16.mxu0 %v1708
    %1755 = vmatpush1.bf16.msra.mxu0 %v1707
    %1756 = vmatprep.subr.bf16.mxu0 %v1711
    %1757 = vmatpush1.bf16.msra.mxu0 %v1710
    %1758 = vmatprep.subr.bf16.mxu0 %v1714
    %1759 = vmatpush1.bf16.msra.mxu0 %v1713
    %1760 = vmatprep.subr.bf16.mxu0 %v1717
    %1761 = vmatpush1.bf16.msra.mxu0 %v1716
    %1762 = vmatprep.subr.bf16.mxu0 %v1720
    %1763 = vmatpush1.bf16.msra.mxu0 %v1719
    %1764 = vmatprep.subr.bf16.mxu0 %v1723
    %1765 = vmatpush1.bf16.msra.mxu0 %v1722
    %1766 = vmatprep.subr.bf16.mxu0 %v1726
    %1767 = vmatpush1.bf16.msra.mxu0 %v1725
    %1768 = vmatprep.subr.bf16.mxu0 0
    %1769 = vmatpush1.bf16.msra.mxu0 0
    %1770 = vmatprep.subr.bf16.mxu0 0
    %1771 = vmatpush1.bf16.msra.mxu0 0
    %1772 = vmatprep.subr.bf16.mxu0 0
    %1773 = vmatpush1.bf16.msra.mxu0 0
    %1774 = vmatprep.subr.bf16.mxu0 0
    %1775 = vmatpush1.bf16.msra.mxu0 0
    %1776 = vmatprep.subr.bf16.mxu0 0
    %1777 = vmatpush1.bf16.msra.mxu0 0
    %1778 = vmatprep.subr.bf16.mxu0 0
    %1779 = vmatpush1.bf16.msra.mxu0 0
    %1780 = vmatprep.subr.bf16.mxu0 0
    %1781 = vmatpush1.bf16.msra.mxu0 0
    %1782 = vmatprep.subr.bf16.mxu0 0
    %1783 = vmatpush1.bf16.msra.mxu0 0
    %1784 = vmatprep.mubr.bf16.mxu0 0
    %1785 = vmatmul.mubr.bf16.gmra.mrb[0].mxu0 %v1571
    %v1786 = vpop.f32.mrb[0].mxu0
    %v1787 = vadd.f32 %v1612, %v1786
    %v1788 = vpop.f32.mrb[0].mxu0
    %v1789 = vadd.f32 %v1616, %v1788
    %v1790 = vpop.f32.mrb[0].mxu0
    %v1791 = vadd.f32 %v1612, %v1790
    %v1792 = vpop.f32.mrb[0].mxu0
    %v1793 = vadd.f32 %v1616, %v1792
    %1794 = vmatprep.mubr.bf16.mxu0 0
    %1795 = vmatmul.mubr.bf16.gmra.mrb[0].mxu0 %v1572
    %v1796 = vpop.f32.mrb[0].mxu0
    %v1797 = vadd.f32 %v1612, %v1796
    %v1798 = vpop.f32.mrb[0].mxu0
    %v1799 = vadd.f32 %v1616, %v1798
    %v1800 = vpop.f32.mrb[0].mxu0
    %v1801 = vadd.f32 %v1612, %v1800
    %v1802 = vpop.f32.mrb[0].mxu0
    %v1803 = vadd.f32 %v1616, %v1802
    %1804 = vmatprep.mubr.bf16.mxu0 0
    %1805 = vmatmul.mubr.bf16.gmra.mrb[0].mxu0 %v1573
    %v1806 = vpop.f32.mrb[0].mxu0
    %v1807 = vadd.f32 %v1612, %v1806
    %v1808 = vpop.f32.mrb[0].mxu0
    %v1809 = vadd.f32 %v1616, %v1808
    %v1810 = vpop.f32.mrb[0].mxu0
    %v1811 = vadd.f32 %v1612, %v1810
    %v1812 = vpop.f32.mrb[0].mxu0
    %v1813 = vadd.f32 %v1616, %v1812
    %1814 = vmatprep.mubr.bf16.mxu0 0
    %1815 = vmatmul.mubr.bf16.gmra.mrb[0].mxu0 %v1574
    %v1816 = vpop.f32.mrb[0].mxu0
    %v1817 = vadd.f32 %v1612, %v1816
    %v1818 = vpop.f32.mrb[0].mxu0
    %v1819 = vadd.f32 %v1616, %v1818
    %v1820 = vpop.f32.mrb[0].mxu0
    %v1821 = vadd.f32 %v1612, %v1820
    %v1822 = vpop.f32.mrb[0].mxu0
    %v1823 = vadd.f32 %v1616, %v1822
    %1824 = vdwg.mxu0
    %1825 = vmatprep.subr.bf16.mxu0 0
    %1826 = vmatpush1.bf16.msra.mxu0 %v1706
    %1827 = vmatprep.subr.bf16.mxu0 0
    %1828 = vmatpush1.bf16.msra.mxu0 %v1709
    %1829 = vmatprep.subr.bf16.mxu0 0
    %1830 = vmatpush1.bf16.msra.mxu0 %v1712
    %1831 = vmatprep.subr.bf16.mxu0 0
    %1832 = vmatpush1.bf16.msra.mxu0 %v1715
    %1833 = vmatprep.subr.bf16.mxu0 0
    %1834 = vmatpush1.bf16.msra.mxu0 %v1718
    %1835 = vmatprep.subr.bf16.mxu0 0
    %1836 = vmatpush1.bf16.msra.mxu0 %v1721
    %1837 = vmatprep.subr.bf16.mxu0 0
    %1838 = vmatpush1.bf16.msra.mxu0 %v1724
    %1839 = vmatprep.subr.bf16.mxu0 0
    %1840 = vmatpush1.bf16.msra.mxu0 %v1727
    %1841 = vmatprep.subr.bf16.mxu0 0
    %1842 = vmatpush1.bf16.msra.mxu0 0
    %1843 = vmatprep.subr.bf16.mxu0 0
    %1844 = vmatpush1.bf16.msra.mxu0 0
    %1845 = vmatprep.subr.bf16.mxu0 0
    %1846 = vmatpush1.bf16.msra.mxu0 0
    %1847 = vmatprep.subr.bf16.mxu0 0
    %1848 = vmatpush1.bf16.msra.mxu0 0
    %1849 = vmatprep.subr.bf16.mxu0 0
    %1850 = vmatpush1.bf16.msra.mxu0 0
    %1851 = vmatprep.subr.bf16.mxu0 0
    %1852 = vmatpush1.bf16.msra.mxu0 0
    %1853 = vmatprep.subr.bf16.mxu0 0
    %1854 = vmatpush1.bf16.msra.mxu0 0
    %1855 = vmatprep.subr.bf16.mxu0 0
    %1856 = vmatpush1.bf16.msra.mxu0 0
    %1857 = vmatprep.mubr.bf16.mxu0 0
    %1858 = vmatmul.mubr.bf16.gmra.mrb[0].mxu0 %v1571
    %v1859 = vpop.f32.mrb[0].mxu0
    %v1860 = vadd.f32 %v1620, %v1859
    %v1861 = vpop.f32.mrb[0].mxu0
    %v1862 = vpop.f32.mrb[0].mxu0
    %v1863 = vadd.f32 %v1620, %v1862
    %v1864 = vpop.f32.mrb[0].mxu0
    %1865 = vmatprep.mubr.bf16.mxu0 0
    %1866 = vmatmul.mubr.bf16.gmra.mrb[0].mxu0 %v1572
    %v1867 = vpop.f32.mrb[0].mxu0
    %v1868 = vadd.f32 %v1620, %v1867
    %v1869 = vpop.f32.mrb[0].mxu0
    %v1870 = vpop.f32.mrb[0].mxu0
    %v1871 = vadd.f32 %v1620, %v1870
    %v1872 = vpop.f32.mrb[0].mxu0
    %1873 = vmatprep.mubr.bf16.mxu0 0
    %1874 = vmatmul.mubr.bf16.gmra.mrb[0].mxu0 %v1573
    %v1875 = vpop.f32.mrb[0].mxu0
    %v1876 = vadd.f32 %v1620, %v1875
    %v1877 = vpop.f32.mrb[0].mxu0
    %v1878 = vpop.f32.mrb[0].mxu0
    %v1879 = vadd.f32 %v1620, %v1878
    %v1880 = vpop.f32.mrb[0].mxu0
    %1881 = vmatprep.mubr.bf16.mxu0 0
    %1882 = vmatmul.mubr.bf16.gmra.mrb[0].mxu0 %v1574
    %v1883 = vpop.f32.mrb[0].mxu0
    %v1884 = vadd.f32 %v1620, %v1883
    %v1885 = vpop.f32.mrb[0].mxu0
    %v1886 = vpop.f32.mrb[0].mxu0
    %v1887 = vadd.f32 %v1620, %v1886
    %v1888 = vpop.f32.mrb[0].mxu0
    %1889 = vdwg.mxu0
    %1890 = vst [vmem:[#allocation3] sm:$0xff] %v1787
    %1891 = vst [vmem:[#allocation3 + $0x8] sm:$0xff] %v1789
    %1892 = vst [vmem:[#allocation3 + $0x10] sm:$0xff] %v1860
    %1893 = vst [vmem:[#allocation3 + $0x18] sm:$0xff] %v1791
    %1894 = vst [vmem:[#allocation3 + $0x20] sm:$0xff] %v1793
    %1895 = vst [vmem:[#allocation3 + $0x28] sm:$0xff] %v1863
    %1896 = vst [vmem:[#allocation3 + $0x30] sm:$0xff] %v1797
    %1897 = vst [vmem:[#allocation3 + $0x38] sm:$0xff] %v1799
    %1898 = vst [vmem:[#allocation3 + $0x40] sm:$0xff] %v1868
    %1899 = vst [vmem:[#allocation3 + $0x48] sm:$0xff] %v1801
    %1900 = vst [vmem:[#allocation3 + $0x50] sm:$0xff] %v1803
    %1901 = vst [vmem:[#allocation3 + $0x58] sm:$0xff] %v1871
    %1902 = vst [vmem:[#allocation3 + $0x60] sm:$0xff] %v1807
    %1903 = vst [vmem:[#allocation3 + $0x68] sm:$0xff] %v1809
    %1904 = vst [vmem:[#allocation3 + $0x70] sm:$0xff] %v1876
    %1905 = vst [vmem:[#allocation3 + $0x78] sm:$0xff] %v1811
    %1906 = vst [vmem:[#allocation3 + $0x80] sm:$0xff] %v1813
    %1907 = vst [vmem:[#allocation3 + $0x88] sm:$0xff] %v1879
    %1908 = vst [vmem:[#allocation3 + $0x90] sm:$0xff] %v1817
    %1909 = vst [vmem:[#allocation3 + $0x98] sm:$0xff] %v1819
    %1910 = vst [vmem:[#allocation3 + $0xa0] sm:$0xff] %v1884
    %1911 = vst [vmem:[#allocation3 + $0xa8] sm:$0xff] %v1821
    %1912 = vst [vmem:[#allocation3 + $0xb0] sm:$0xff] %v1823
    %1913 = vst [vmem:[#allocation3 + $0xb8] sm:$0xff] %v1887
    %v1914 = vld [vmem:[#allocation9] sm:$0xff]
    %v1915 = vld [vmem:[#allocation9 + $0x8] sm:$0xf]
    %v1916 = vld [vmem:[#allocation9 + $0xc] sm:$0xff]
    %v1917 = vld [vmem:[#allocation9 + $0x14] sm:$0xf]
    %v1918 = vld [vmem:[#allocation9 + $0x18] sm:$0xff]
    %v1919 = vld [vmem:[#allocation9 + $0x20] sm:$0xf]
    %v1920 = vld [vmem:[#allocation9 + $0x24] sm:$0xff]
    %v1921 = vld [vmem:[#allocation9 + $0x2c] sm:$0xf]
    %v1922 = vld [vmem:[#allocation9 + $0x30] sm:$0xff]
    %v1923 = vld [vmem:[#allocation9 + $0x38] sm:$0xf]
    %v1924 = vld [vmem:[#allocation9 + $0x3c] sm:$0xff]
    %v1925 = vld [vmem:[#allocation9 + $0x44] sm:$0xf]
    %v1926 = vld [vmem:[#allocation9 + $0x48] sm:$0xff]
    %v1927 = vld [vmem:[#allocation9 + $0x50] sm:$0xf]
    %v1928 = vld [vmem:[#allocation9 + $0x54] sm:$0xff]
    %v1929 = vld [vmem:[#allocation9 + $0x5c] sm:$0xf]
    %v1930 = vld [vmem:[#allocation9 + $0x60] sm:$0xff]
    %v1931 = vld [vmem:[#allocation9 + $0x68] sm:$0xf]
    %v1932 = vld [vmem:[#allocation9 + $0x6c] sm:$0xff]
    %v1933 = vld [vmem:[#allocation9 + $0x74] sm:$0xf]
    %v1934 = vld [vmem:[#allocation9 + $0x78] sm:$0xff]
    %v1935 = vld [vmem:[#allocation9 + $0x80] sm:$0xf]
    %v1936 = vld [vmem:[#allocation9 + $0x84] sm:$0xff]
    %v1937 = vld [vmem:[#allocation9 + $0x8c] sm:$0xf]
    %v1938 = vld [vmem:[#allocation9 + $0x90] sm:$0xff]
    %v1939 = vld [vmem:[#allocation9 + $0x98] sm:$0xf]
    %v1940 = vld [vmem:[#allocation9 + $0x9c] sm:$0xff]
    %v1941 = vld [vmem:[#allocation9 + $0xa4] sm:$0xf]
    %v1942 = vld [vmem:[#allocation9 + $0xa8] sm:$0xff]
    %v1943 = vld [vmem:[#allocation9 + $0xb0] sm:$0xf]
    %v1944 = vld [vmem:[#allocation9 + $0xb4] sm:$0xff]
    %v1945 = vld [vmem:[#allocation9 + $0xbc] sm:$0xf]
    %v1946 = vld [vmem:[%s10] sm:$0x7]
    %v1947 = vld [vmem:[%s2 + $0x8] sm:$0xff]
    %v1948 = vld [vmem:[#allocation3] sm:$0xff]
    %v1949 = vld [vmem:[#allocation3 + $0x8] sm:$0xff]
    %v1950 = vld [vmem:[#allocation3 + $0x10] sm:$0xff]
    %v1951 = vpack.c.bf16 %v1947, %v1947
    %v1953 = vlaneseq
    %v1954 = vshrl.u32 %v1953, 7
    %v1955 = vsub.s32 0, %v1954
    %v1956 = vrot.slane %v1946, %v1955
    %v1957 = vlaneseq
    %v1958 = vshrl.u32 %v1957, 7
    %v1959 = vsub.s32 1, %v1958
    %v1960 = vrot.slane %v1946, %v1959
    %v1961 = vlaneseq
    %v1962 = vshrl.u32 %v1961, 7
    %v1963 = vsub.s32 2, %v1962
    %v1964 = vrot.slane %v1946, %v1963
    %v2000 = vunpack.c.l.b16 %v1914
    %v2001 = vunpack.c.h.b16 %v1914
    %v2002 = vunpack.c.l.b16 %v1915
    %v2003 = vunpack.c.l.b16 %v1916
    %v2004 = vunpack.c.h.b16 %v1916
    %v2005 = vunpack.c.l.b16 %v1917
    %v2006 = vunpack.c.l.b16 %v1918
    %v2007 = vunpack.c.h.b16 %v1918
    %v2008 = vunpack.c.l.b16 %v1919
    %v2009 = vunpack.c.l.b16 %v1920
    %v2010 = vunpack.c.h.b16 %v1920
    %v2011 = vunpack.c.l.b16 %v1921
    %v2012 = vunpack.c.l.b16 %v1922
    %v2013 = vunpack.c.h.b16 %v1922
    %v2014 = vunpack.c.l.b16 %v1923
    %v2015 = vunpack.c.l.b16 %v1924
    %v2016 = vunpack.c.h.b16 %v1924
    %v2017 = vunpack.c.l.b16 %v1925
    %v2018 = vunpack.c.l.b16 %v1926
    %v2019 = vunpack.c.h.b16 %v1926
    %v2020 = vunpack.c.l.b16 %v1927
    %v2021 = vunpack.c.l.b16 %v1928
    %v2022 = vunpack.c.h.b16 %v1928
    %v2023 = vunpack.c.l.b16 %v1929
    %v2024 = vunpack.c.l.b16 %v1930
    %v2025 = vunpack.c.h.b16 %v1930
    %v2026 = vunpack.c.l.b16 %v1931
    %v2027 = vunpack.c.l.b16 %v1932
    %v2028 = vunpack.c.h.b16 %v1932
    %v2029 = vunpack.c.l.b16 %v1933
    %v2030 = vunpack.c.l.b16 %v1934
    %v2031 = vunpack.c.h.b16 %v1934
    %v2032 = vunpack.c.l.b16 %v1935
    %v2033 = vunpack.c.l.b16 %v1936
    %v2034 = vunpack.c.h.b16 %v1936
    %v2035 = vunpack.c.l.b16 %v1937
    %v2036 = vunpack.c.l.b16 %v1938
    %v2037 = vunpack.c.h.b16 %v1938
    %v2038 = vunpack.c.l.b16 %v1939
    %v2039 = vunpack.c.l.b16 %v1940
    %v2040 = vunpack.c.h.b16 %v1940
    %v2041 = vunpack.c.l.b16 %v1941
    %v2042 = vunpack.c.l.b16 %v1942
    %v2043 = vunpack.c.h.b16 %v1942
    %v2044 = vunpack.c.l.b16 %v1943
    %v2045 = vunpack.c.l.b16 %v1944
    %v2046 = vunpack.c.h.b16 %v1944
    %v2047 = vunpack.c.l.b16 %v1945
    %v2048 = vpack.c.b16 %v2003, %v2000
    %v2049 = vpack.c.b16 %v2004, %v2001
    %v2050 = vpack.c.b16 %v2005, %v2002
    %v2051 = vpack.c.b16 %v2009, %v2006
    %v2052 = vpack.c.b16 %v2010, %v2007
    %v2053 = vpack.c.b16 %v2011, %v2008
    %v2054 = vpack.c.b16 %v2015, %v2012
    %v2055 = vpack.c.b16 %v2016, %v2013
    %v2056 = vpack.c.b16 %v2017, %v2014
    %v2057 = vpack.c.b16 %v2021, %v2018
    %v2058 = vpack.c.b16 %v2022, %v2019
    %v2059 = vpack.c.b16 %v2023, %v2020
    %v2060 = vpack.c.b16 %v2027, %v2024
    %v2061 = vpack.c.b16 %v2028, %v2025
    %v2062 = vpack.c.b16 %v2029, %v2026
    %v2063 = vpack.c.b16 %v2033, %v2030
    %v2064 = vpack.c.b16 %v2034, %v2031
    %v2065 = vpack.c.b16 %v2035, %v2032
    %v2066 = vpack.c.b16 %v2039, %v2036
    %v2067 = vpack.c.b16 %v2040, %v2037
    %v2068 = vpack.c.b16 %v2041, %v2038
    %v2069 = vpack.c.b16 %v2045, %v2042
    %v2070 = vpack.c.b16 %v2046, %v2043
    %v2071 = vpack.c.b16 %v2047, %v2044
    %2096 = vmatprep.subr.bf16.mxu0 %v2049
    %2097 = vmatpush1.bf16.msra.mxu0 %v2048
    %2098 = vmatprep.subr.bf16.mxu0 %v2052
    %2099 = vmatpush1.bf16.msra.mxu0 %v2051
    %2100 = vmatprep.subr.bf16.mxu0 %v2055
    %2101 = vmatpush1.bf16.msra.mxu0 %v2054
    %2102 = vmatprep.subr.bf16.mxu0 %v2058
    %2103 = vmatpush1.bf16.msra.mxu0 %v2057
    %2104 = vmatprep.subr.bf16.mxu0 %v2061
    %2105 = vmatpush1.bf16.msra.mxu0 %v2060
    %2106 = vmatprep.subr.bf16.mxu0 %v2064
    %2107 = vmatpush1.bf16.msra.mxu0 %v2063
    %2108 = vmatprep.subr.bf16.mxu0 %v2067
    %2109 = vmatpush1.bf16.msra.mxu0 %v2066
    %2110 = vmatprep.subr.bf16.mxu0 %v2070
    %2111 = vmatpush1.bf16.msra.mxu0 %v2069
    %2112 = vmatprep.subr.bf16.mxu0 0
    %2113 = vmatpush1.bf16.msra.mxu0 0
    %2114 = vmatprep.subr.bf16.mxu0 0
    %2115 = vmatpush1.bf16.msra.mxu0 0
    %2116 = vmatprep.subr.bf16.mxu0 0
    %2117 = vmatpush1.bf16.msra.mxu0 0
    %2118 = vmatprep.subr.bf16.mxu0 0
    %2119 = vmatpush1.bf16.msra.mxu0 0
    %2120 = vmatprep.subr.bf16.mxu0 0
    %2121 = vmatpush1.bf16.msra.mxu0 0
    %2122 = vmatprep.subr.bf16.mxu0 0
    %2123 = vmatpush1.bf16.msra.mxu0 0
    %2124 = vmatprep.subr.bf16.mxu0 0
    %2125 = vmatpush1.bf16.msra.mxu0 0
    %2126 = vmatprep.subr.bf16.mxu0 0
    %2127 = vmatpush1.bf16.msra.mxu0 0
    %2128 = vmatprep.mubr.bf16.mxu0 0
    %2129 = vmatmul.mubr.bf16.gmra.mrb[0].mxu0 %v1951
    %v2130 = vpop.f32.mrb[0].mxu0
    %v2131 = vadd.f32 %v1956, %v2130
    %v2132 = vpop.f32.mrb[0].mxu0
    %v2133 = vadd.f32 %v1960, %v2132
    %v2134 = vpop.f32.mrb[0].mxu0
    %v2135 = vpop.f32.mrb[0].mxu0
    %2136 = vdwg.mxu0
    %2137 = vmatprep.subr.bf16.mxu0 0
    %2138 = vmatpush1.bf16.msra.mxu0 %v2050
    %2139 = vmatprep.subr.bf16.mxu0 0
    %2140 = vmatpush1.bf16.msra.mxu0 %v2053
    %2141 = vmatprep.subr.bf16.mxu0 0
    %2142 = vmatpush1.bf16.msra.mxu0 %v2056
    %2143 = vmatprep.subr.bf16.mxu0 0
    %2144 = vmatpush1.bf16.msra.mxu0 %v2059
    %2145 = vmatprep.subr.bf16.mxu0 0
    %2146 = vmatpush1.bf16.msra.mxu0 %v2062
    %2147 = vmatprep.subr.bf16.mxu0 0
    %2148 = vmatpush1.bf16.msra.mxu0 %v2065
    %2149 = vmatprep.subr.bf16.mxu0 0
    %2150 = vmatpush1.bf16.msra.mxu0 %v2068
    %2151 = vmatprep.subr.bf16.mxu0 0
    %2152 = vmatpush1.bf16.msra.mxu0 %v2071
    %2153 = vmatprep.subr.bf16.mxu0 0
    %2154 = vmatpush1.bf16.msra.mxu0 0
    %2155 = vmatprep.subr.bf16.mxu0 0
    %2156 = vmatpush1.bf16.msra.mxu0 0
    %2157 = vmatprep.subr.bf16.mxu0 0
    %2158 = vmatpush1.bf16.msra.mxu0 0
    %2159 = vmatprep.subr.bf16.mxu0 0
    %2160 = vmatpush1.bf16.msra.mxu0 0
    %2161 = vmatprep.subr.bf16.mxu0 0
    %2162 = vmatpush1.bf16.msra.mxu0 0
    %2163 = vmatprep.subr.bf16.mxu0 0
    %2164 = vmatpush1.bf16.msra.mxu0 0
    %2165 = vmatprep.subr.bf16.mxu0 0
    %2166 = vmatpush1.bf16.msra.mxu0 0
    %2167 = vmatprep.subr.bf16.mxu0 0
    %2168 = vmatpush1.bf16.msra.mxu0 0
    %2169 = vmatprep.mubr.bf16.mxu0 0
    %2170 = vmatmul.mubr.bf16.gmra.mrb[0].mxu0 %v1951
    %v2171 = vpop.f32.mrb[0].mxu0
    %v2172 = vadd.f32 %v1964, %v2171
    %v2173 = vpop.f32.mrb[0].mxu0
    %v2174 = vpop.f32.mrb[0].mxu0
    %v2175 = vpop.f32.mrb[0].mxu0
    %2176 = vdwg.mxu0
    %v2177 = vadd.f32 %v1948, %v2131
    %v2178 = vsub.f32 0.0, %v2177
    %v2179 = vmul.f32 %v2178, 1.442695
    %v2180 = vpow.pop %v2179
    %v2181 = vadd.f32 %v2180, 1.0
    %v2182 = vrcp.pop %v2181
    %v2183 = vadd.f32 %v1949, %v2133
    %v2184 = vsub.f32 0.0, %v2183
    %v2185 = vmul.f32 %v2184, 1.442695
    %v2186 = vpow.pop %v2185
    %v2187 = vadd.f32 %v2186, 1.0
    %v2188 = vrcp.pop %v2187
    %v2189 = vmul.f32 %v2182, %v2172
    %v2190 = vadd.f32 %v1950, %v2189
    %v2191 = vtanh.pop %v2190
    %v2192 = vsub.f32 1.0, %v2188
    %v2193 = vmul.f32 %v2192, %v2191
    %v2194 = vmul.f32 %v2188, %v1947
    %v2195 = vadd.f32 %v2193, %v2194
    %v2196 = vld [vmem:[%s1] sm:$0xff]
    %v2197 = vmul.f32 %v2196, %v2195
    %v2198 = vsub.f32 1.0, %v2196
    %v2199 = vmul.f32 %v2198, %v1947
    %v2200 = vadd.f32 %v2197, %v2199
    %2201 = vst [vmem:[#allocation2] sm:$0xff] %v2197
    %v2202 = vld [vmem:[#allocation3 + $0x18] sm:$0xff]
    %v2203 = vld [vmem:[#allocation3 + $0x20] sm:$0xff]
    %v2204 = vld [vmem:[#allocation3 + $0x28] sm:$0xff]
    %v2205 = vpack.c.bf16 %v2200, %v2200
    %2206 = vmatprep.subr.bf16.mxu0 %v2049
    %2207 = vmatpush1.bf16.msra.mxu0 %v2048
    %2208 = vmatprep.subr.bf16.mxu0 %v2052
    %2209 = vmatpush1.bf16.msra.mxu0 %v2051
    %2210 = vmatprep.subr.bf16.mxu0 %v2055
    %2211 = vmatpush1.bf16.msra.mxu0 %v2054
    %2212 = vmatprep.subr.bf16.mxu0 %v2058
    %2213 = vmatpush1.bf16.msra.mxu0 %v2057
    %2214 = vmatprep.subr.bf16.mxu0 %v2061
    %2215 = vmatpush1.bf16.msra.mxu0 %v2060
    %2216 = vmatprep.subr.bf16.mxu0 %v2064
    %2217 = vmatpush1.bf16.msra.mxu0 %v2063
    %2218 = vmatprep.subr.bf16.mxu0 %v2067
    %2219 = vmatpush1.bf16.msra.mxu0 %v2066
    %2220 = vmatprep.subr.bf16.mxu0 %v2070
    %2221 = vmatpush1.bf16.msra.mxu0 %v2069
    %2222 = vmatprep.subr.bf16.mxu0 0
    %2223 = vmatpush1.bf16.msra.mxu0 0
    %2224 = vmatprep.subr.bf16.mxu0 0
    %2225 = vmatpush1.bf16.msra.mxu0 0
    %2226 = vmatprep.subr.bf16.mxu0 0
    %2227 = vmatpush1.bf16.msra.mxu0 0
    %2228 = vmatprep.subr.bf16.mxu0 0
    %2229 = vmatpush1.bf16.msra.mxu0 0
    %2230 = vmatprep.subr.bf16.mxu0 0
    %2231 = vmatpush1.bf16.msra.mxu0 0
    %2232 = vmatprep.subr.bf16.mxu0 0
    %2233 = vmatpush1.bf16.msra.mxu0 0
    %2234 = vmatprep.subr.bf16.mxu0 0
    %2235 = vmatpush1.bf16.msra.mxu0 0
    %2236 = vmatprep.subr.bf16.mxu0 0
    %2237 = vmatpush1.bf16.msra.mxu0 0
    %2238 = vmatprep.mubr.bf16.mxu0 0
    %2239 = vmatmul.mubr.bf16.gmra.mrb[0].mxu0 %v2205
    %v2240 = vpop.f32.mrb[0].mxu0
    %v2241 = vadd.f32 %v1956, %v2240
    %v2242 = vpop.f32.mrb[0].mxu0
    %v2243 = vadd.f32 %v1960, %v2242
    %v2244 = vpop.f32.mrb[0].mxu0
    %v2245 = vpop.f32.mrb[0].mxu0
    %2246 = vdwg.mxu0
    %2247 = vmatprep.subr.bf16.mxu0 0
    %2248 = vmatpush1.bf16.msra.mxu0 %v2050
    %2249 = vmatprep.subr.bf16.mxu0 0
    %2250 = vmatpush1.bf16.msra.mxu0 %v2053
    %2251 = vmatprep.subr.bf16.mxu0 0
    %2252 = vmatpush1.bf16.msra.mxu0 %v2056
    %2253 = vmatprep.subr.bf16.mxu0 0
    %2254 = vmatpush1.bf16.msra.mxu0 %v2059
    %2255 = vmatprep.subr.bf16.mxu0 0
    %2256 = vmatpush1.bf16.msra.mxu0 %v2062
    %2257 = vmatprep.subr.bf16.mxu0 0
    %2258 = vmatpush1.bf16.msra.mxu0 %v2065
    %2259 = vmatprep.subr.bf16.mxu0 0
    %2260 = vmatpush1.bf16.msra.mxu0 %v2068
    %2261 = vmatprep.subr.bf16.mxu0 0
    %2262 = vmatpush1.bf16.msra.mxu0 %v2071
    %2263 = vmatprep.subr.bf16.mxu0 0
    %2264 = vmatpush1.bf16.msra.mxu0 0
    %2265 = vmatprep.subr.bf16.mxu0 0
    %2266 = vmatpush1.bf16.msra.mxu0 0
    %2267 = vmatprep.subr.bf16.mxu0 0
    %2268 = vmatpush1.bf16.msra.mxu0 0
    %2269 = vmatprep.subr.bf16.mxu0 0
    %2270 = vmatpush1.bf16.msra.mxu0 0
    %2271 = vmatprep.subr.bf16.mxu0 0
    %2272 = vmatpush1.bf16.msra.mxu0 0
    %2273 = vmatprep.subr.bf16.mxu0 0
    %2274 = vmatpush1.bf16.msra.mxu0 0
    %2275 = vmatprep.subr.bf16.mxu0 0
    %2276 = vmatpush1.bf16.msra.mxu0 0
    %2277 = vmatprep.subr.bf16.mxu0 0
    %2278 = vmatpush1.bf16.msra.mxu0 0
    %2279 = vmatprep.mubr.bf16.mxu0 0
    %2280 = vmatmul.mubr.bf16.gmra.mrb[0].mxu0 %v2205
    %v2281 = vpop.f32.mrb[0].mxu0
    %v2282 = vadd.f32 %v1964, %v2281
    %v2283 = vpop.f32.mrb[0].mxu0
    %v2284 = vpop.f32.mrb[0].mxu0
    %v2285 = vpop.f32.mrb[0].mxu0
    %2286 = vdwg.mxu0
    %v2287 = vadd.f32 %v2202, %v2241
    %v2288 = vsub.f32 0.0, %v2287
    %v2289 = vmul.f32 %v2288, 1.442695
    %v2290 = vpow.pop %v2289
    %v2291 = vadd.f32 %v2290, 1.0
    %v2292 = vrcp.pop %v2291
    %v2293 = vadd.f32 %v2203, %v2243
    %v2294 = vsub.f32 0.0, %v2293
    %v2295 = vmul.f32 %v2294, 1.442695
    %v2296 = vpow.pop %v2295
    %v2297 = vadd.f32 %v2296, 1.0
    %v2298 = vrcp.pop %v2297
    %v2299 = vmul.f32 %v2292, %v2282
    %v2300 = vadd.f32 %v2204, %v2299
    %v2301 = vtanh.pop %v2300
    %v2302 = vsub.f32 1.0, %v2298
    %v2303 = vmul.f32 %v2302, %v2301
    %v2304 = vmul.f32 %v2298, %v2200
    %v2305 = vadd.f32 %v2303, %v2304
    %v2306 = vld [vmem:[%s1 + $0x8] sm:$0xff]
    %v2307 = vmul.f32 %v2306, %v2305
    %v2308 = vsub.f32 1.0, %v2306
    %v2309 = vmul.f32 %v2308, %v2200
    %v2310 = vadd.f32 %v2307, %v2309
    %2311 = vst [vmem:[#allocation2 + $0x8] sm:$0xff] %v2307
    %v2312 = vld [vmem:[#allocation3 + $0x30] sm:$0xff]
    %v2313 = vld [vmem:[#allocation3 + $0x38] sm:$0xff]
    %v2314 = vld [vmem:[#allocation3 + $0x40] sm:$0xff]
    %v2315 = vpack.c.bf16 %v2310, %v2310
    %2316 = vmatprep.subr.bf16.mxu0 %v2049
    %2317 = vmatpush1.bf16.msra.mxu0 %v2048
    %2318 = vmatprep.subr.bf16.mxu0 %v2052
    %2319 = vmatpush1.bf16.msra.mxu0 %v2051
    %2320 = vmatprep.subr.bf16.mxu0 %v2055
    %2321 = vmatpush1.bf16.msra.mxu0 %v2054
    %2322 = vmatprep.subr.bf16.mxu0 %v2058
    %2323 = vmatpush1.bf16.msra.mxu0 %v2057
    %2324 = vmatprep.subr.bf16.mxu0 %v2061
    %2325 = vmatpush1.bf16.msra.mxu0 %v2060
    %2326 = vmatprep.subr.bf16.mxu0 %v2064
    %2327 = vmatpush1.bf16.msra.mxu0 %v2063
    %2328 = vmatprep.subr.bf16.mxu0 %v2067
    %2329 = vmatpush1.bf16.msra.mxu0 %v2066
    %2330 = vmatprep.subr.bf16.mxu0 %v2070
    %2331 = vmatpush1.bf16.msra.mxu0 %v2069
    %2332 = vmatprep.subr.bf16.mxu0 0
    %2333 = vmatpush1.bf16.msra.mxu0 0
    %2334 = vmatprep.subr.bf16.mxu0 0
    %2335 = vmatpush1.bf16.msra.mxu0 0
    %2336 = vmatprep.subr.bf16.mxu0 0
    %2337 = vmatpush1.bf16.msra.mxu0 0
    %2338 = vmatprep.subr.bf16.mxu0 0
    %2339 = vmatpush1.bf16.msra.mxu0 0
    %2340 = vmatprep.subr.bf16.mxu0 0
    %2341 = vmatpush1.bf16.msra.mxu0 0
    %2342 = vmatprep.subr.bf16.mxu0 0
    %2343 = vmatpush1.bf16.msra.mxu0 0
    %2344 = vmatprep.subr.bf16.mxu0 0
    %2345 = vmatpush1.bf16.msra.mxu0 0
    %2346 = vmatprep.subr.bf16.mxu0 0
    %2347 = vmatpush1.bf16.msra.mxu0 0
    %2348 = vmatprep.mubr.bf16.mxu0 0
    %2349 = vmatmul.mubr.bf16.gmra.mrb[0].mxu0 %v2315
    %v2350 = vpop.f32.mrb[0].mxu0
    %v2351 = vadd.f32 %v1956, %v2350
    %v2352 = vpop.f32.mrb[0].mxu0
    %v2353 = vadd.f32 %v1960, %v2352
    %v2354 = vpop.f32.mrb[0].mxu0
    %v2355 = vpop.f32.mrb[0].mxu0
    %2356 = vdwg.mxu0
    %2357 = vmatprep.subr.bf16.mxu0 0
    %2358 = vmatpush1.bf16.msra.mxu0 %v2050
    %2359 = vmatprep.subr.bf16.mxu0 0
    %2360 = vmatpush1.bf16.msra.mxu0 %v2053
    %2361 = vmatprep.subr.bf16.mxu0 0
    %2362 = vmatpush1.bf16.msra.mxu0 %v2056
    %2363 = vmatprep.subr.bf16.mxu0 0
    %2364 = vmatpush1.bf16.msra.mxu0 %v2059
    %2365 = vmatprep.subr.bf16.mxu0 0
    %2366 = vmatpush1.bf16.msra.mxu0 %v2062
    %2367 = vmatprep.subr.bf16.mxu0 0
    %2368 = vmatpush1.bf16.msra.mxu0 %v2065
    %2369 = vmatprep.subr.bf16.mxu0 0
    %2370 = vmatpush1.bf16.msra.mxu0 %v2068
    %2371 = vmatprep.subr.bf16.mxu0 0
    %2372 = vmatpush1.bf16.msra.mxu0 %v2071
    %2373 = vmatprep.subr.bf16.mxu0 0
    %2374 = vmatpush1.bf16.msra.mxu0 0
    %2375 = vmatprep.subr.bf16.mxu0 0
    %2376 = vmatpush1.bf16.msra.mxu0 0
    %2377 = vmatprep.subr.bf16.mxu0 0
    %2378 = vmatpush1.bf16.msra.mxu0 0
    %2379 = vmatprep.subr.bf16.mxu0 0
    %2380 = vmatpush1.bf16.msra.mxu0 0
    %2381 = vmatprep.subr.bf16.mxu0 0
    %2382 = vmatpush1.bf16.msra.mxu0 0
    %2383 = vmatprep.subr.bf16.mxu0 0
    %2384 = vmatpush1.bf16.msra.mxu0 0
    %2385 = vmatprep.subr.bf16.mxu0 0
    %2386 = vmatpush1.bf16.msra.mxu0 0
    %2387 = vmatprep.subr.bf16.mxu0 0
    %2388 = vmatpush1.bf16.msra.mxu0 0
    %2389 = vmatprep.mubr.bf16.mxu0 0
    %2390 = vmatmul.mubr.bf16.gmra.mrb[0].mxu0 %v2315
    %v2391 = vpop.f32.mrb[0].mxu0
    %v2392 = vadd.f32 %v1964, %v2391
    %v2393 = vpop.f32.mrb[0].mxu0
    %v2394 = vpop.f32.mrb[0].mxu0
    %v2395 = vpop.f32.mrb[0].mxu0
    %2396 = vdwg.mxu0
    %v2397 = vadd.f32 %v2312, %v2351
    %v2398 = vsub.f32 0.0, %v2397
    %v2399 = vmul.f32 %v2398, 1.442695
    %v2400 = vpow.pop %v2399
    %v2401 = vadd.f32 %v2400, 1.0
    %v2402 = vrcp.pop %v2401
    %v2403 = vadd.f32 %v2313, %v2353
    %v2404 = vsub.f32 0.0, %v2403
    %v2405 = vmul.f32 %v2404, 1.442695
    %v2406 = vpow.pop %v2405
    %v2407 = vadd.f32 %v2406, 1.0
    %v2408 = vrcp.pop %v2407
    %v2409 = vmul.f32 %v2402, %v2392
    %v2410 = vadd.f32 %v2314, %v2409
    %v2411 = vtanh.pop %v2410
    %v2412 = vsub.f32 1.0, %v2408
    %v2413 = vmul.f32 %v2412, %v2411
    %v2414 = vmul.f32 %v2408, %v2310
    %v2415 = vadd.f32 %v2413, %v2414
    %v2416 = vld [vmem:[%s1 + $0x10] sm:$0xff]
    %v2417 = vmul.f32 %v2416, %v2415
    %v2418 = vsub.f32 1.0, %v2416
    %v2419 = vmul.f32 %v2418, %v2310
    %v2420 = vadd.f32 %v2417, %v2419
    %2421 = vst [vmem:[#allocation2 + $0x10] sm:$0xff] %v2417
    %v2422 = vld [vmem:[#allocation3 + $0x48] sm:$0xff]
    %v2423 = vld [vmem:[#allocation3 + $0x50] sm:$0xff]
    %v2424 = vld [vmem:[#allocation3 + $0x58] sm:$0xff]
    %v2425 = vpack.c.bf16 %v2420, %v2420
    %2426 = vmatprep.subr.bf16.mxu0 %v2049
    %2427 = vmatpush1.bf16.msra.mxu0 %v2048
    %2428 = vmatprep.subr.bf16.mxu0 %v2052
    %2429 = vmatpush1.bf16.msra.mxu0 %v2051
    %2430 = vmatprep.subr.bf16.mxu0 %v2055
    %2431 = vmatpush1.bf16.msra.mxu0 %v2054
    %2432 = vmatprep.subr.bf16.mxu0 %v2058
    %2433 = vmatpush1.bf16.msra.mxu0 %v2057
    %2434 = vmatprep.subr.bf16.mxu0 %v2061
    %2435 = vmatpush1.bf16.msra.mxu0 %v2060
    %2436 = vmatprep.subr.bf16.mxu0 %v2064
    %2437 = vmatpush1.bf16.msra.mxu0 %v2063
    %2438 = vmatprep.subr.bf16.mxu0 %v2067
    %2439 = vmatpush1.bf16.msra.mxu0 %v2066
    %2440 = vmatprep.subr.bf16.mxu0 %v2070
    %2441 = vmatpush1.bf16.msra.mxu0 %v2069
    %2442 = vmatprep.subr.bf16.mxu0 0
    %2443 = vmatpush1.bf16.msra.mxu0 0
    %2444 = vmatprep.subr.bf16.mxu0 0
    %2445 = vmatpush1.bf16.msra.mxu0 0
    %2446 = vmatprep.subr.bf16.mxu0 0
    %2447 = vmatpush1.bf16.msra.mxu0 0
    %2448 = vmatprep.subr.bf16.mxu0 0
    %2449 = vmatpush1.bf16.msra.mxu0 0
    %2450 = vmatprep.subr.bf16.mxu0 0
    %2451 = vmatpush1.bf16.msra.mxu0 0
    %2452 = vmatprep.subr.bf16.mxu0 0
    %2453 = vmatpush1.bf16.msra.mxu0 0
    %2454 = vmatprep.subr.bf16.mxu0 0
    %2455 = vmatpush1.bf16.msra.mxu0 0
    %2456 = vmatprep.subr.bf16.mxu0 0
    %2457 = vmatpush1.bf16.msra.mxu0 0
    %2458 = vmatprep.mubr.bf16.mxu0 0
    %2459 = vmatmul.mubr.bf16.gmra.mrb[0].mxu0 %v2425
    %v2460 = vpop.f32.mrb[0].mxu0
    %v2461 = vadd.f32 %v1956, %v2460
    %v2462 = vpop.f32.mrb[0].mxu0
    %v2463 = vadd.f32 %v1960, %v2462
    %v2464 = vpop.f32.mrb[0].mxu0
    %v2465 = vpop.f32.mrb[0].mxu0
    %2466 = vdwg.mxu0
    %2467 = vmatprep.subr.bf16.mxu0 0
    %2468 = vmatpush1.bf16.msra.mxu0 %v2050
    %2469 = vmatprep.subr.bf16.mxu0 0
    %2470 = vmatpush1.bf16.msra.mxu0 %v2053
    %2471 = vmatprep.subr.bf16.mxu0 0
    %2472 = vmatpush1.bf16.msra.mxu0 %v2056
    %2473 = vmatprep.subr.bf16.mxu0 0
    %2474 = vmatpush1.bf16.msra.mxu0 %v2059
    %2475 = vmatprep.subr.bf16.mxu0 0
    %2476 = vmatpush1.bf16.msra.mxu0 %v2062
    %2477 = vmatprep.subr.bf16.mxu0 0
    %2478 = vmatpush1.bf16.msra.mxu0 %v2065
    %2479 = vmatprep.subr.bf16.mxu0 0
    %2480 = vmatpush1.bf16.msra.mxu0 %v2068
    %2481 = vmatprep.subr.bf16.mxu0 0
    %2482 = vmatpush1.bf16.msra.mxu0 %v2071
    %2483 = vmatprep.subr.bf16.mxu0 0
    %2484 = vmatpush1.bf16.msra.mxu0 0
    %2485 = vmatprep.subr.bf16.mxu0 0
    %2486 = vmatpush1.bf16.msra.mxu0 0
    %2487 = vmatprep.subr.bf16.mxu0 0
    %2488 = vmatpush1.bf16.msra.mxu0 0
    %2489 = vmatprep.subr.bf16.mxu0 0
    %2490 = vmatpush1.bf16.msra.mxu0 0
    %2491 = vmatprep.subr.bf16.mxu0 0
    %2492 = vmatpush1.bf16.msra.mxu0 0
    %2493 = vmatprep.subr.bf16.mxu0 0
    %2494 = vmatpush1.bf16.msra.mxu0 0
    %2495 = vmatprep.subr.bf16.mxu0 0
    %2496 = vmatpush1.bf16.msra.mxu0 0
    %2497 = vmatprep.subr.bf16.mxu0 0
    %2498 = vmatpush1.bf16.msra.mxu0 0
    %2499 = vmatprep.mubr.bf16.mxu0 0
    %2500 = vmatmul.mubr.bf16.gmra.mrb[0].mxu0 %v2425
    %v2501 = vpop.f32.mrb[0].mxu0
    %v2502 = vadd.f32 %v1964, %v2501
    %v2503 = vpop.f32.mrb[0].mxu0
    %v2504 = vpop.f32.mrb[0].mxu0
    %v2505 = vpop.f32.mrb[0].mxu0
    %2506 = vdwg.mxu0
    %v2507 = vadd.f32 %v2422, %v2461
    %v2508 = vsub.f32 0.0, %v2507
    %v2509 = vmul.f32 %v2508, 1.442695
    %v2510 = vpow.pop %v2509
    %v2511 = vadd.f32 %v2510, 1.0
    %v2512 = vrcp.pop %v2511
    %v2513 = vadd.f32 %v2423, %v2463
    %v2514 = vsub.f32 0.0, %v2513
    %v2515 = vmul.f32 %v2514, 1.442695
    %v2516 = vpow.pop %v2515
    %v2517 = vadd.f32 %v2516, 1.0
    %v2518 = vrcp.pop %v2517
    %v2519 = vmul.f32 %v2512, %v2502
    %v2520 = vadd.f32 %v2424, %v2519
    %v2521 = vtanh.pop %v2520
    %v2522 = vsub.f32 1.0, %v2518
    %v2523 = vmul.f32 %v2522, %v2521
    %v2524 = vmul.f32 %v2518, %v2420
    %v2525 = vadd.f32 %v2523, %v2524
    %v2526 = vld [vmem:[%s1 + $0x18] sm:$0xff]
    %v2527 = vmul.f32 %v2526, %v2525
    %v2528 = vsub.f32 1.0, %v2526
    %v2529 = vmul.f32 %v2528, %v2420
    %v2530 = vadd.f32 %v2527, %v2529
    %2531 = vst [vmem:[#allocation2 + $0x18] sm:$0xff] %v2527
    %v2532 = vld [vmem:[#allocation3 + $0x60] sm:$0xff]
    %v2533 = vld [vmem:[#allocation3 + $0x68] sm:$0xff]
    %v2534 = vld [vmem:[#allocation3 + $0x70] sm:$0xff]
    %v2535 = vpack.c.bf16 %v2530, %v2530
    %2536 = vmatprep.subr.bf16.mxu0 %v2049
    %2537 = vmatpush1.bf16.msra.mxu0 %v2048
    %2538 = vmatprep.subr.bf16.mxu0 %v2052
    %2539 = vmatpush1.bf16.msra.mxu0 %v2051
    %2540 = vmatprep.subr.bf16.mxu0 %v2055
    %2541 = vmatpush1.bf16.msra.mxu0 %v2054
    %2542 = vmatprep.subr.bf16.mxu0 %v2058
    %2543 = vmatpush1.bf16.msra.mxu0 %v2057
    %2544 = vmatprep.subr.bf16.mxu0 %v2061
    %2545 = vmatpush1.bf16.msra.mxu0 %v2060
    %2546 = vmatprep.subr.bf16.mxu0 %v2064
    %2547 = vmatpush1.bf16.msra.mxu0 %v2063
    %2548 = vmatprep.subr.bf16.mxu0 %v2067
    %2549 = vmatpush1.bf16.msra.mxu0 %v2066
    %2550 = vmatprep.subr.bf16.mxu0 %v2070
    %2551 = vmatpush1.bf16.msra.mxu0 %v2069
    %2552 = vmatprep.subr.bf16.mxu0 0
    %2553 = vmatpush1.bf16.msra.mxu0 0
    %2554 = vmatprep.subr.bf16.mxu0 0
    %2555 = vmatpush1.bf16.msra.mxu0 0
    %2556 = vmatprep.subr.bf16.mxu0 0
    %2557 = vmatpush1.bf16.msra.mxu0 0
    %2558 = vmatprep.subr.bf16.mxu0 0
    %2559 = vmatpush1.bf16.msra.mxu0 0
    %2560 = vmatprep.subr.bf16.mxu0 0
    %2561 = vmatpush1.bf16.msra.mxu0 0
    %2562 = vmatprep.subr.bf16.mxu0 0
    %2563 = vmatpush1.bf16.msra.mxu0 0
    %2564 = vmatprep.subr.bf16.mxu0 0
    %2565 = vmatpush1.bf16.msra.mxu0 0
    %2566 = vmatprep.subr.bf16.mxu0 0
    %2567 = vmatpush1.bf16.msra.mxu0 0
    %2568 = vmatprep.mubr.bf16.mxu0 0
    %2569 = vmatmul.mubr.bf16.gmra.mrb[0].mxu0 %v2535
    %v2570 = vpop.f32.mrb[0].mxu0
    %v2571 = vadd.f32 %v1956, %v2570
    %v2572 = vpop.f32.mrb[0].mxu0
    %v2573 = vadd.f32 %v1960, %v2572
    %v2574 = vpop.f32.mrb[0].mxu0
    %v2575 = vpop.f32.mrb[0].mxu0
    %2576 = vdwg.mxu0
    %2577 = vmatprep.subr.bf16.mxu0 0
    %2578 = vmatpush1.bf16.msra.mxu0 %v2050
    %2579 = vmatprep.subr.bf16.mxu0 0
    %2580 = vmatpush1.bf16.msra.mxu0 %v2053
    %2581 = vmatprep.subr.bf16.mxu0 0
    %2582 = vmatpush1.bf16.msra.mxu0 %v2056
    %2583 = vmatprep.subr.bf16.mxu0 0
    %2584 = vmatpush1.bf16.msra.mxu0 %v2059
    %2585 = vmatprep.subr.bf16.mxu0 0
    %2586 = vmatpush1.bf16.msra.mxu0 %v2062
    %2587 = vmatprep.subr.bf16.mxu0 0
    %2588 = vmatpush1.bf16.msra.mxu0 %v2065
    %2589 = vmatprep.subr.bf16.mxu0 0
    %2590 = vmatpush1.bf16.msra.mxu0 %v2068
    %2591 = vmatprep.subr.bf16.mxu0 0
    %2592 = vmatpush1.bf16.msra.mxu0 %v2071
    %2593 = vmatprep.subr.bf16.mxu0 0
    %2594 = vmatpush1.bf16.msra.mxu0 0
    %2595 = vmatprep.subr.bf16.mxu0 0
    %2596 = vmatpush1.bf16.msra.mxu0 0
    %2597 = vmatprep.subr.bf16.mxu0 0
    %2598 = vmatpush1.bf16.msra.mxu0 0
    %2599 = vmatprep.subr.bf16.mxu0 0
    %2600 = vmatpush1.bf16.msra.mxu0 0
    %2601 = vmatprep.subr.bf16.mxu0 0
    %2602 = vmatpush1.bf16.msra.mxu0 0
    %2603 = vmatprep.subr.bf16.mxu0 0
    %2604 = vmatpush1.bf16.msra.mxu0 0
    %2605 = vmatprep.subr.bf16.mxu0 0
    %2606 = vmatpush1.bf16.msra.mxu0 0
    %2607 = vmatprep.subr.bf16.mxu0 0
    %2608 = vmatpush1.bf16.msra.mxu0 0
    %2609 = vmatprep.mubr.bf16.mxu0 0
    %2610 = vmatmul.mubr.bf16.gmra.mrb[0].mxu0 %v2535
    %v2611 = vpop.f32.mrb[0].mxu0
    %v2612 = vadd.f32 %v1964, %v2611
    %v2613 = vpop.f32.mrb[0].mxu0
    %v2614 = vpop.f32.mrb[0].mxu0
    %v2615 = vpop.f32.mrb[0].mxu0
    %2616 = vdwg.mxu0
    %v2617 = vadd.f32 %v2532, %v2571
    %v2618 = vsub.f32 0.0, %v2617
    %v2619 = vmul.f32 %v2618, 1.442695
    %v2620 = vpow.pop %v2619
    %v2621 = vadd.f32 %v2620, 1.0
    %v2622 = vrcp.pop %v2621
    %v2623 = vadd.f32 %v2533, %v2573
    %v2624 = vsub.f32 0.0, %v2623
    %v2625 = vmul.f32 %v2624, 1.442695
    %v2626 = vpow.pop %v2625
    %v2627 = vadd.f32 %v2626, 1.0
    %v2628 = vrcp.pop %v2627
    %v2629 = vmul.f32 %v2622, %v2612
    %v2630 = vadd.f32 %v2534, %v2629
    %v2631 = vtanh.pop %v2630
    %v2632 = vsub.f32 1.0, %v2628
    %v2633 = vmul.f32 %v2632, %v2631
    %v2634 = vmul.f32 %v2628, %v2530
    %v2635 = vadd.f32 %v2633, %v2634
    %v2636 = vld [vmem:[%s1 + $0x20] sm:$0xff]
    %v2637 = vmul.f32 %v2636, %v2635
    %v2638 = vsub.f32 1.0, %v2636
    %v2639 = vmul.f32 %v2638, %v2530
    %v2640 = vadd.f32 %v2637, %v2639
    %2641 = vst [vmem:[#allocation2 + $0x20] sm:$0xff] %v2637
    %v2642 = vld [vmem:[#allocation3 + $0x78] sm:$0xff]
    %v2643 = vld [vmem:[#allocation3 + $0x80] sm:$0xff]
    %v2644 = vld [vmem:[#allocation3 + $0x88] sm:$0xff]
    %v2645 = vpack.c.bf16 %v2640, %v2640
    %2646 = vmatprep.subr.bf16.mxu0 %v2049
    %2647 = vmatpush1.bf16.msra.mxu0 %v2048
    %2648 = vmatprep.subr.bf16.mxu0 %v2052
    %2649 = vmatpush1.bf16.msra.mxu0 %v2051
    %2650 = vmatprep.subr.bf16.mxu0 %v2055
    %2651 = vmatpush1.bf16.msra.mxu0 %v2054
    %2652 = vmatprep.subr.bf16.mxu0 %v2058
    %2653 = vmatpush1.bf16.msra.mxu0 %v2057
    %2654 = vmatprep.subr.bf16.mxu0 %v2061
    %2655 = vmatpush1.bf16.msra.mxu0 %v2060
    %2656 = vmatprep.subr.bf16.mxu0 %v2064
    %2657 = vmatpush1.bf16.msra.mxu0 %v2063
    %2658 = vmatprep.subr.bf16.mxu0 %v2067
    %2659 = vmatpush1.bf16.msra.mxu0 %v2066
    %2660 = vmatprep.subr.bf16.mxu0 %v2070
    %2661 = vmatpush1.bf16.msra.mxu0 %v2069
    %2662 = vmatprep.subr.bf16.mxu0 0
    %2663 = vmatpush1.bf16.msra.mxu0 0
    %2664 = vmatprep.subr.bf16.mxu0 0
    %2665 = vmatpush1.bf16.msra.mxu0 0
    %2666 = vmatprep.subr.bf16.mxu0 0
    %2667 = vmatpush1.bf16.msra.mxu0 0
    %2668 = vmatprep.subr.bf16.mxu0 0
    %2669 = vmatpush1.bf16.msra.mxu0 0
    %2670 = vmatprep.subr.bf16.mxu0 0
    %2671 = vmatpush1.bf16.msra.mxu0 0
    %2672 = vmatprep.subr.bf16.mxu0 0
    %2673 = vmatpush1.bf16.msra.mxu0 0
    %2674 = vmatprep.subr.bf16.mxu0 0
    %2675 = vmatpush1.bf16.msra.mxu0 0
    %2676 = vmatprep.subr.bf16.mxu0 0
    %2677 = vmatpush1.bf16.msra.mxu0 0
    %2678 = vmatprep.mubr.bf16.mxu0 0
    %2679 = vmatmul.mubr.bf16.gmra.mrb[0].mxu0 %v2645
    %v2680 = vpop.f32.mrb[0].mxu0
    %v2681 = vadd.f32 %v1956, %v2680
    %v2682 = vpop.f32.mrb[0].mxu0
    %v2683 = vadd.f32 %v1960, %v2682
    %v2684 = vpop.f32.mrb[0].mxu0
    %v2685 = vpop.f32.mrb[0].mxu0
    %2686 = vdwg.mxu0
    %2687 = vmatprep.subr.bf16.mxu0 0
    %2688 = vmatpush1.bf16.msra.mxu0 %v2050
    %2689 = vmatprep.subr.bf16.mxu0 0
    %2690 = vmatpush1.bf16.msra.mxu0 %v2053
    %2691 = vmatprep.subr.bf16.mxu0 0
    %2692 = vmatpush1.bf16.msra.mxu0 %v2056
    %2693 = vmatprep.subr.bf16.mxu0 0
    %2694 = vmatpush1.bf16.msra.mxu0 %v2059
    %2695 = vmatprep.subr.bf16.mxu0 0
    %2696 = vmatpush1.bf16.msra.mxu0 %v2062
    %2697 = vmatprep.subr.bf16.mxu0 0
    %2698 = vmatpush1.bf16.msra.mxu0 %v2065
    %2699 = vmatprep.subr.bf16.mxu0 0
    %2700 = vmatpush1.bf16.msra.mxu0 %v2068
    %2701 = vmatprep.subr.bf16.mxu0 0
    %2702 = vmatpush1.bf16.msra.mxu0 %v2071
    %2703 = vmatprep.subr.bf16.mxu0 0
    %2704 = vmatpush1.bf16.msra.mxu0 0
    %2705 = vmatprep.subr.bf16.mxu0 0
    %2706 = vmatpush1.bf16.msra.mxu0 0
    %2707 = vmatprep.subr.bf16.mxu0 0
    %2708 = vmatpush1.bf16.msra.mxu0 0
    %2709 = vmatprep.subr.bf16.mxu0 0
    %2710 = vmatpush1.bf16.msra.mxu0 0
    %2711 = vmatprep.subr.bf16.mxu0 0
    %2712 = vmatpush1.bf16.msra.mxu0 0
    %2713 = vmatprep.subr.bf16.mxu0 0
    %2714 = vmatpush1.bf16.msra.mxu0 0
    %2715 = vmatprep.subr.bf16.mxu0 0
    %2716 = vmatpush1.bf16.msra.mxu0 0
    %2717 = vmatprep.subr.bf16.mxu0 0
    %2718 = vmatpush1.bf16.msra.mxu0 0
    %2719 = vmatprep.mubr.bf16.mxu0 0
    %2720 = vmatmul.mubr.bf16.gmra.mrb[0].mxu0 %v2645
    %v2721 = vpop.f32.mrb[0].mxu0
    %v2722 = vadd.f32 %v1964, %v2721
    %v2723 = vpop.f32.mrb[0].mxu0
    %v2724 = vpop.f32.mrb[0].mxu0
    %v2725 = vpop.f32.mrb[0].mxu0
    %2726 = vdwg.mxu0
    %v2727 = vadd.f32 %v2642, %v2681
    %v2728 = vsub.f32 0.0, %v2727
    %v2729 = vmul.f32 %v2728, 1.442695
    %v2730 = vpow.pop %v2729
    %v2731 = vadd.f32 %v2730, 1.0
    %v2732 = vrcp.pop %v2731
    %v2733 = vadd.f32 %v2643, %v2683
    %v2734 = vsub.f32 0.0, %v2733
    %v2735 = vmul.f32 %v2734, 1.442695
    %v2736 = vpow.pop %v2735
    %v2737 = vadd.f32 %v2736, 1.0
    %v2738 = vrcp.pop %v2737
    %v2739 = vmul.f32 %v2732, %v2722
    %v2740 = vadd.f32 %v2644, %v2739
    %v2741 = vtanh.pop %v2740
    %v2742 = vsub.f32 1.0, %v2738
    %v2743 = vmul.f32 %v2742, %v2741
    %v2744 = vmul.f32 %v2738, %v2640
    %v2745 = vadd.f32 %v2743, %v2744
    %v2746 = vld [vmem:[%s1 + $0x28] sm:$0xff]
    %v2747 = vmul.f32 %v2746, %v2745
    %v2748 = vsub.f32 1.0, %v2746
    %v2749 = vmul.f32 %v2748, %v2640
    %v2750 = vadd.f32 %v2747, %v2749
    %2751 = vst [vmem:[#allocation2 + $0x28] sm:$0xff] %v2747
    %v2752 = vld [vmem:[#allocation3 + $0x90] sm:$0xff]
    %v2753 = vld [vmem:[#allocation3 + $0x98] sm:$0xff]
    %v2754 = vld [vmem:[#allocation3 + $0xa0] sm:$0xff]
    %v2755 = vpack.c.bf16 %v2750, %v2750
    %2756 = vmatprep.subr.bf16.mxu0 %v2049
    %2757 = vmatpush1.bf16.msra.mxu0 %v2048
    %2758 = vmatprep.subr.bf16.mxu0 %v2052
    %2759 = vmatpush1.bf16.msra.mxu0 %v2051
    %2760 = vmatprep.subr.bf16.mxu0 %v2055
    %2761 = vmatpush1.bf16.msra.mxu0 %v2054
    %2762 = vmatprep.subr.bf16.mxu0 %v2058
    %2763 = vmatpush1.bf16.msra.mxu0 %v2057
    %2764 = vmatprep.subr.bf16.mxu0 %v2061
    %2765 = vmatpush1.bf16.msra.mxu0 %v2060
    %2766 = vmatprep.subr.bf16.mxu0 %v2064
    %2767 = vmatpush1.bf16.msra.mxu0 %v2063
    %2768 = vmatprep.subr.bf16.mxu0 %v2067
    %2769 = vmatpush1.bf16.msra.mxu0 %v2066
    %2770 = vmatprep.subr.bf16.mxu0 %v2070
    %2771 = vmatpush1.bf16.msra.mxu0 %v2069
    %2772 = vmatprep.subr.bf16.mxu0 0
    %2773 = vmatpush1.bf16.msra.mxu0 0
    %2774 = vmatprep.subr.bf16.mxu0 0
    %2775 = vmatpush1.bf16.msra.mxu0 0
    %2776 = vmatprep.subr.bf16.mxu0 0
    %2777 = vmatpush1.bf16.msra.mxu0 0
    %2778 = vmatprep.subr.bf16.mxu0 0
    %2779 = vmatpush1.bf16.msra.mxu0 0
    %2780 = vmatprep.subr.bf16.mxu0 0
    %2781 = vmatpush1.bf16.msra.mxu0 0
    %2782 = vmatprep.subr.bf16.mxu0 0
    %2783 = vmatpush1.bf16.msra.mxu0 0
    %2784 = vmatprep.subr.bf16.mxu0 0
    %2785 = vmatpush1.bf16.msra.mxu0 0
    %2786 = vmatprep.subr.bf16.mxu0 0
    %2787 = vmatpush1.bf16.msra.mxu0 0
    %2788 = vmatprep.mubr.bf16.mxu0 0
    %2789 = vmatmul.mubr.bf16.gmra.mrb[0].mxu0 %v2755
    %v2790 = vpop.f32.mrb[0].mxu0
    %v2791 = vadd.f32 %v1956, %v2790
    %v2792 = vpop.f32.mrb[0].mxu0
    %v2793 = vadd.f32 %v1960, %v2792
    %v2794 = vpop.f32.mrb[0].mxu0
    %v2795 = vpop.f32.mrb[0].mxu0
    %2796 = vdwg.mxu0
    %2797 = vmatprep.subr.bf16.mxu0 0
    %2798 = vmatpush1.bf16.msra.mxu0 %v2050
    %2799 = vmatprep.subr.bf16.mxu0 0
    %2800 = vmatpush1.bf16.msra.mxu0 %v2053
    %2801 = vmatprep.subr.bf16.mxu0 0
    %2802 = vmatpush1.bf16.msra.mxu0 %v2056
    %2803 = vmatprep.subr.bf16.mxu0 0
    %2804 = vmatpush1.bf16.msra.mxu0 %v2059
    %2805 = vmatprep.subr.bf16.mxu0 0
    %2806 = vmatpush1.bf16.msra.mxu0 %v2062
    %2807 = vmatprep.subr.bf16.mxu0 0
    %2808 = vmatpush1.bf16.msra.mxu0 %v2065
    %2809 = vmatprep.subr.bf16.mxu0 0
    %2810 = vmatpush1.bf16.msra.mxu0 %v2068
    %2811 = vmatprep.subr.bf16.mxu0 0
    %2812 = vmatpush1.bf16.msra.mxu0 %v2071
    %2813 = vmatprep.subr.bf16.mxu0 0
    %2814 = vmatpush1.bf16.msra.mxu0 0
    %2815 = vmatprep.subr.bf16.mxu0 0
    %2816 = vmatpush1.bf16.msra.mxu0 0
    %2817 = vmatprep.subr.bf16.mxu0 0
    %2818 = vmatpush1.bf16.msra.mxu0 0
    %2819 = vmatprep.subr.bf16.mxu0 0
    %2820 = vmatpush1.bf16.msra.mxu0 0
    %2821 = vmatprep.subr.bf16.mxu0 0
    %2822 = vmatpush1.bf16.msra.mxu0 0
    %2823 = vmatprep.subr.bf16.mxu0 0
    %2824 = vmatpush1.bf16.msra.mxu0 0
    %2825 = vmatprep.subr.bf16.mxu0 0
    %2826 = vmatpush1.bf16.msra.mxu0 0
    %2827 = vmatprep.subr.bf16.mxu0 0
    %2828 = vmatpush1.bf16.msra.mxu0 0
    %2829 = vmatprep.mubr.bf16.mxu0 0
    %2830 = vmatmul.mubr.bf16.gmra.mrb[0].mxu0 %v2755
    %v2831 = vpop.f32.mrb[0].mxu0
    %v2832 = vadd.f32 %v1964, %v2831
    %v2833 = vpop.f32.mrb[0].mxu0
    %v2834 = vpop.f32.mrb[0].mxu0
    %v2835 = vpop.f32.mrb[0].mxu0
    %2836 = vdwg.mxu0
    %v2837 = vadd.f32 %v2752, %v2791
    %v2838 = vsub.f32 0.0, %v2837
    %v2839 = vmul.f32 %v2838, 1.442695
    %v2840 = vpow.pop %v2839
    %v2841 = vadd.f32 %v2840, 1.0
    %v2842 = vrcp.pop %v2841
    %v2843 = vadd.f32 %v2753, %v2793
    %v2844 = vsub.f32 0.0, %v2843
    %v2845 = vmul.f32 %v2844, 1.442695
    %v2846 = vpow.pop %v2845
    %v2847 = vadd.f32 %v2846, 1.0
    %v2848 = vrcp.pop %v2847
    %v2849 = vmul.f32 %v2842, %v2832
    %v2850 = vadd.f32 %v2754, %v2849
    %v2851 = vtanh.pop %v2850
    %v2852 = vsub.f32 1.0, %v2848
    %v2853 = vmul.f32 %v2852, %v2851
    %v2854 = vmul.f32 %v2848, %v2750
    %v2855 = vadd.f32 %v2853, %v2854
    %v2856 = vld [vmem:[%s1 + $0x30] sm:$0xff]
    %v2857 = vmul.f32 %v2856, %v2855
    %v2858 = vsub.f32 1.0, %v2856
    %v2859 = vmul.f32 %v2858, %v2750
    %v2860 = vadd.f32 %v2857, %v2859
    %2861 = vst [vmem:[#allocation2 + $0x30] sm:$0xff] %v2857
    %v2862 = vld [vmem:[#allocation3 + $0xa8] sm:$0xff]
    %v2863 = vld [vmem:[#allocation3 + $0xb0] sm:$0xff]
    %v2864 = vld [vmem:[#allocation3 + $0xb8] sm:$0xff]
    %v2865 = vpack.c.bf16 %v2860, %v2860
    %2866 = vmatprep.subr.bf16.mxu0 %v2049
    %2867 = vmatpush1.bf16.msra.mxu0 %v2048
    %2868 = vmatprep.subr.bf16.mxu0 %v2052
    %2869 = vmatpush1.bf16.msra.mxu0 %v2051
    %2870 = vmatprep.subr.bf16.mxu0 %v2055
    %2871 = vmatpush1.bf16.msra.mxu0 %v2054
    %2872 = vmatprep.subr.bf16.mxu0 %v2058
    %2873 = vmatpush1.bf16.msra.mxu0 %v2057
    %2874 = vmatprep.subr.bf16.mxu0 %v2061
    %2875 = vmatpush1.bf16.msra.mxu0 %v2060
    %2876 = vmatprep.subr.bf16.mxu0 %v2064
    %2877 = vmatpush1.bf16.msra.mxu0 %v2063
    %2878 = vmatprep.subr.bf16.mxu0 %v2067
    %2879 = vmatpush1.bf16.msra.mxu0 %v2066
    %2880 = vmatprep.subr.bf16.mxu0 %v2070
    %2881 = vmatpush1.bf16.msra.mxu0 %v2069
    %2882 = vmatprep.subr.bf16.mxu0 0
    %2883 = vmatpush1.bf16.msra.mxu0 0
    %2884 = vmatprep.subr.bf16.mxu0 0
    %2885 = vmatpush1.bf16.msra.mxu0 0
    %2886 = vmatprep.subr.bf16.mxu0 0
    %2887 = vmatpush1.bf16.msra.mxu0 0
    %2888 = vmatprep.subr.bf16.mxu0 0
    %2889 = vmatpush1.bf16.msra.mxu0 0
    %2890 = vmatprep.subr.bf16.mxu0 0
    %2891 = vmatpush1.bf16.msra.mxu0 0
    %2892 = vmatprep.subr.bf16.mxu0 0
    %2893 = vmatpush1.bf16.msra.mxu0 0
    %2894 = vmatprep.subr.bf16.mxu0 0
    %2895 = vmatpush1.bf16.msra.mxu0 0
    %2896 = vmatprep.subr.bf16.mxu0 0
    %2897 = vmatpush1.bf16.msra.mxu0 0
    %2898 = vmatprep.mubr.bf16.mxu0 0
    %2899 = vmatmul.mubr.bf16.gmra.mrb[0].mxu0 %v2865
    %v2900 = vpop.f32.mrb[0].mxu0
    %v2901 = vadd.f32 %v1956, %v2900
    %v2902 = vpop.f32.mrb[0].mxu0
    %v2903 = vadd.f32 %v1960, %v2902
    %v2904 = vpop.f32.mrb[0].mxu0
    %v2905 = vpop.f32.mrb[0].mxu0
    %2906 = vdwg.mxu0
    %2907 = vmatprep.subr.bf16.mxu0 0
    %2908 = vmatpush1.bf16.msra.mxu0 %v2050
    %2909 = vmatprep.subr.bf16.mxu0 0
    %2910 = vmatpush1.bf16.msra.mxu0 %v2053
    %2911 = vmatprep.subr.bf16.mxu0 0
    %2912 = vmatpush1.bf16.msra.mxu0 %v2056
    %2913 = vmatprep.subr.bf16.mxu0 0
    %2914 = vmatpush1.bf16.msra.mxu0 %v2059
    %2915 = vmatprep.subr.bf16.mxu0 0
    %2916 = vmatpush1.bf16.msra.mxu0 %v2062
    %2917 = vmatprep.subr.bf16.mxu0 0
    %2918 = vmatpush1.bf16.msra.mxu0 %v2065
    %2919 = vmatprep.subr.bf16.mxu0 0
    %2920 = vmatpush1.bf16.msra.mxu0 %v2068
    %2921 = vmatprep.subr.bf16.mxu0 0
    %2922 = vmatpush1.bf16.msra.mxu0 %v2071
    %2923 = vmatprep.subr.bf16.mxu0 0
    %2924 = vmatpush1.bf16.msra.mxu0 0
    %2925 = vmatprep.subr.bf16.mxu0 0
    %2926 = vmatpush1.bf16.msra.mxu0 0
    %2927 = vmatprep.subr.bf16.mxu0 0
    %2928 = vmatpush1.bf16.msra.mxu0 0
    %2929 = vmatprep.subr.bf16.mxu0 0
    %2930 = vmatpush1.bf16.msra.mxu0 0
    %2931 = vmatprep.subr.bf16.mxu0 0
    %2932 = vmatpush1.bf16.msra.mxu0 0
    %2933 = vmatprep.subr.bf16.mxu0 0
    %2934 = vmatpush1.bf16.msra.mxu0 0
    %2935 = vmatprep.subr.bf16.mxu0 0
    %2936 = vmatpush1.bf16.msra.mxu0 0
    %2937 = vmatprep.subr.bf16.mxu0 0
    %2938 = vmatpush1.bf16.msra.mxu0 0
    %2939 = vmatprep.mubr.bf16.mxu0 0
    %2940 = vmatmul.mubr.bf16.gmra.mrb[0].mxu0 %v2865
    %v2941 = vpop.f32.mrb[0].mxu0
    %v2942 = vadd.f32 %v1964, %v2941
    %v2943 = vpop.f32.mrb[0].mxu0
    %v2944 = vpop.f32.mrb[0].mxu0
    %v2945 = vpop.f32.mrb[0].mxu0
    %2946 = vdwg.mxu0
    %v2947 = vadd.f32 %v2862, %v2901
    %v2948 = vsub.f32 0.0, %v2947
    %v2949 = vmul.f32 %v2948, 1.442695
    %v2950 = vpow.pop %v2949
    %v2951 = vadd.f32 %v2950, 1.0
    %v2952 = vrcp.pop %v2951
    %v2953 = vadd.f32 %v2863, %v2903
    %v2954 = vsub.f32 0.0, %v2953
    %v2955 = vmul.f32 %v2954, 1.442695
    %v2956 = vpow.pop %v2955
    %v2957 = vadd.f32 %v2956, 1.0
    %v2958 = vrcp.pop %v2957
    %v2959 = vmul.f32 %v2952, %v2942
    %v2960 = vadd.f32 %v2864, %v2959
    %v2961 = vtanh.pop %v2960
    %v2962 = vsub.f32 1.0, %v2958
    %v2963 = vmul.f32 %v2962, %v2961
    %v2964 = vmul.f32 %v2958, %v2860
    %v2965 = vadd.f32 %v2963, %v2964
    %v2966 = vld [vmem:[%s1 + $0x38] sm:$0xff]
    %v2967 = vmul.f32 %v2966, %v2965
    %v2968 = vsub.f32 1.0, %v2966
    %v2969 = vmul.f32 %v2968, %v2860
    %v2970 = vadd.f32 %v2967, %v2969
    %2971 = vst [vmem:[#allocation2 + $0x38] sm:$0xff] %v2967
    %2972 = vst [vmem:[%s14 + $0x8] sm:$0xff] %v2970
    %v2973 = vld [vmem:[#allocation2] sm:$0xff]
    %v2974 = vld [vmem:[#allocation2 + $0x8] sm:$0xff]
    %v2975 = vld [vmem:[#allocation2 + $0x10] sm:$0xff]
    %v2976 = vld [vmem:[#allocation2 + $0x18] sm:$0xff]
    %v2977 = vld [vmem:[#allocation2 + $0x20] sm:$0xff]
    %v2978 = vld [vmem:[#allocation2 + $0x28] sm:$0xff]
    %v2979 = vld [vmem:[#allocation2 + $0x30] sm:$0xff]
    %v2980 = vld [vmem:[#allocation2 + $0x38] sm:$0xff]
    %v2981 = vpack.c.bf16 %v2974, %v2973
    %v2982 = vpack.c.bf16 %v2976, %v2975
    %v2983 = vpack.c.bf16 %v2978, %v2977
    %v2984 = vpack.c.bf16 %v2980, %v2979
    %v2985 = vld [vmem:[#allocation10] sm:$0xf]
    %v2986 = vld [vmem:[#allocation10 + $0x4] sm:$0xf]
    %v2987 = vld [vmem:[#allocation10 + $0x8] sm:$0xf]
    %v2988 = vld [vmem:[#allocation10 + $0xc] sm:$0xf]
    %v2989 = vld [vmem:[#allocation10 + $0x10] sm:$0xf]
    %v2990 = vld [vmem:[#allocation10 + $0x14] sm:$0xf]
    %v2991 = vld [vmem:[#allocation10 + $0x18] sm:$0xf]
    %v2992 = vld [vmem:[#allocation10 + $0x1c] sm:$0xf]
    %v2993 = vld [vmem:[#allocation10 + $0x20] sm:$0xf]
    %v2994 = vld [vmem:[#allocation10 + $0x24] sm:$0xf]
    %v2995 = vld [vmem:[#allocation10 + $0x28] sm:$0xf]
    %v2996 = vld [vmem:[#allocation10 + $0x2c] sm:$0xf]
    %v2997 = vld [vmem:[#allocation10 + $0x30] sm:$0xf]
    %v2998 = vld [vmem:[#allocation10 + $0x34] sm:$0xf]
    %v2999 = vld [vmem:[#allocation10 + $0x38] sm:$0xf]
    %v3000 = vld [vmem:[#allocation10 + $0x3c] sm:$0xf]
    %v3001 = vld [vmem:[%s12] sm:$0x1]
    %v3003 = vlaneseq
    %v3004 = vshrl.u32 %v3003, 7
    %v3005 = vsub.s32 0, %v3004
    %v3006 = vrot.slane %v3001, %v3005
    %v3024 = vunpack.c.l.b16 %v2985
    %v3025 = vunpack.c.l.b16 %v2986
    %v3026 = vunpack.c.l.b16 %v2987
    %v3027 = vunpack.c.l.b16 %v2988
    %v3028 = vunpack.c.l.b16 %v2989
    %v3029 = vunpack.c.l.b16 %v2990
    %v3030 = vunpack.c.l.b16 %v2991
    %v3031 = vunpack.c.l.b16 %v2992
    %v3032 = vunpack.c.l.b16 %v2993
    %v3033 = vunpack.c.l.b16 %v2994
    %v3034 = vunpack.c.l.b16 %v2995
    %v3035 = vunpack.c.l.b16 %v2996
    %v3036 = vunpack.c.l.b16 %v2997
    %v3037 = vunpack.c.l.b16 %v2998
    %v3038 = vunpack.c.l.b16 %v2999
    %v3039 = vunpack.c.l.b16 %v3000
    %v3040 = vpack.c.b16 %v3025, %v3024
    %v3041 = vpack.c.b16 %v3027, %v3026
    %v3042 = vpack.c.b16 %v3029, %v3028
    %v3043 = vpack.c.b16 %v3031, %v3030
    %v3044 = vpack.c.b16 %v3033, %v3032
    %v3045 = vpack.c.b16 %v3035, %v3034
    %v3046 = vpack.c.b16 %v3037, %v3036
    %v3047 = vpack.c.b16 %v3039, %v3038
    %3056 = vmatprep.subr.bf16.mxu0 0
    %3057 = vmatpush1.bf16.msra.mxu0 %v3040
    %3058 = vmatprep.subr.bf16.mxu0 0
    %3059 = vmatpush1.bf16.msra.mxu0 %v3041
    %3060 = vmatprep.subr.bf16.mxu0 0
    %3061 = vmatpush1.bf16.msra.mxu0 %v3042
    %3062 = vmatprep.subr.bf16.mxu0 0
    %3063 = vmatpush1.bf16.msra.mxu0 %v3043
    %3064 = vmatprep.subr.bf16.mxu0 0
    %3065 = vmatpush1.bf16.msra.mxu0 %v3044
    %3066 = vmatprep.subr.bf16.mxu0 0
    %3067 = vmatpush1.bf16.msra.mxu0 %v3045
    %3068 = vmatprep.subr.bf16.mxu0 0
    %3069 = vmatpush1.bf16.msra.mxu0 %v3046
    %3070 = vmatprep.subr.bf16.mxu0 0
    %3071 = vmatpush1.bf16.msra.mxu0 %v3047
    %3072 = vmatprep.subr.bf16.mxu0 0
    %3073 = vmatpush1.bf16.msra.mxu0 0
    %3074 = vmatprep.subr.bf16.mxu0 0
    %3075 = vmatpush1.bf16.msra.mxu0 0
    %3076 = vmatprep.subr.bf16.mxu0 0
    %3077 = vmatpush1.bf16.msra.mxu0 0
    %3078 = vmatprep.subr.bf16.mxu0 0
    %3079 = vmatpush1.bf16.msra.mxu0 0
    %3080 = vmatprep.subr.bf16.mxu0 0
    %3081 = vmatpush1.bf16.msra.mxu0 0
    %3082 = vmatprep.subr.bf16.mxu0 0
    %3083 = vmatpush1.bf16.msra.mxu0 0
    %3084 = vmatprep.subr.bf16.mxu0 0
    %3085 = vmatpush1.bf16.msra.mxu0 0
    %3086 = vmatprep.subr.bf16.mxu0 0
    %3087 = vmatpush1.bf16.msra.mxu0 0
    %3088 = vmatprep.mubr.bf16.mxu0 0
    %3089 = vmatmul.mubr.bf16.gmra.mrb[0].mxu0 %v2981
    %v3090 = vpop.f32.mrb[0].mxu0
    %v3091 = vadd.f32 %v3006, %v3090
    %v3092 = vpop.f32.mrb[0].mxu0
    %v3093 = vpop.f32.mrb[0].mxu0
    %v3094 = vadd.f32 %v3006, %v3093
    %v3095 = vpop.f32.mrb[0].mxu0
    %3096 = vmatprep.mubr.bf16.mxu0 0
    %3097 = vmatmul.mubr.bf16.gmra.mrb[0].mxu0 %v2982
    %v3098 = vpop.f32.mrb[0].mxu0
    %v3099 = vadd.f32 %v3006, %v3098
    %v3100 = vpop.f32.mrb[0].mxu0
    %v3101 = vpop.f32.mrb[0].mxu0
    %v3102 = vadd.f32 %v3006, %v3101
    %v3103 = vpop.f32.mrb[0].mxu0
    %3104 = vmatprep.mubr.bf16.mxu0 0
    %3105 = vmatmul.mubr.bf16.gmra.mrb[0].mxu0 %v2983
    %v3106 = vpop.f32.mrb[0].mxu0
    %v3107 = vadd.f32 %v3006, %v3106
    %v3108 = vpop.f32.mrb[0].mxu0
    %v3109 = vpop.f32.mrb[0].mxu0
    %v3110 = vadd.f32 %v3006, %v3109
    %v3111 = vpop.f32.mrb[0].mxu0
    %3112 = vmatprep.mubr.bf16.mxu0 0
    %3113 = vmatmul.mubr.bf16.gmra.mrb[0].mxu0 %v2984
    %v3114 = vpop.f32.mrb[0].mxu0
    %v3115 = vadd.f32 %v3006, %v3114
    %v3116 = vpop.f32.mrb[0].mxu0
    %v3117 = vpop.f32.mrb[0].mxu0
    %v3118 = vadd.f32 %v3006, %v3117
    %v3119 = vpop.f32.mrb[0].mxu0
    %3120 = vdwg.mxu0
    %3121 = vst [vmem:[#allocation12] sm:$0xff] %v3091
    %3122 = vst [vmem:[#allocation12 + $0x8] sm:$0xff] %v3094
    %3123 = vst [vmem:[#allocation12 + $0x10] sm:$0xff] %v3099
    %3124 = vst [vmem:[#allocation12 + $0x18] sm:$0xff] %v3102
    %3125 = vst [vmem:[#allocation12 + $0x20] sm:$0xff] %v3107
    %3126 = vst [vmem:[#allocation12 + $0x28] sm:$0xff] %v3110
    %3127 = vst [vmem:[#allocation12 + $0x30] sm:$0xff] %v3115
    %3128 = vst [vmem:[#allocation12 + $0x38] sm:$0xff] %v3118
    // Predicated region
    $region70: #{_forward.1} parent=1 // pred_check
      _
    $region71: #{_forward.1} parent=1 // pred_check_branch
      %3130 = sbr.rel (0) target = $region73
    $region72: #{_forward.1} parent=1 // pred_region
      %s3132 = ssub.s32 1024, 1024
      %3133 = vsyncadd [#allocation6], %s3132
      %s3134 = sshll.u32 [#allocation12], 4
      %s3135 = int_to_ptr.vmem [resolvable:$true] %s3134
      %3140 = dma.vmem_to_hbm [thread:$0]  %s3135, 1024, %s13, [#allocation6], 128, 128, 8
    $region73: #{_forward.1} parent=1 // pred_fallthru
      _
    // Predicated region
    $region74: #{_forward.1} parent=1 // pred_check
      _
    $region75: #{_forward.1} parent=1 // pred_check_branch
      %3142 = sbr.rel (0) target = $region77
    $region76: #{_forward.1} parent=1 // pred_region
      _
    $region77: #{_forward.1} parent=1 // pred_fallthru
      _
    // Predicated region
    $region78: #{_forward.1} parent=1 // pred_check
      _
    $region79: #{_forward.1} parent=1 // pred_check_branch
      %3144 = sbr.rel (0) target = $region81
    $region80: #{_forward.1} parent=1 // pred_region
      %3145 = dma.done [#allocation6], 1024
    $region81: #{_forward.1} parent=1 // pred_fallthru
      _
    // Predicated region
    $region82: #{_forward.1} parent=1 // pred_check
      _
    $region83: #{_forward.1} parent=1 // pred_check_branch
      %3147 = sbr.rel (0) target = $region85
    $region84: #{_forward.1} parent=1 // pred_region
      _
    $region85: #{_forward.1} parent=1 // pred_fallthru
      _
    %3148 = vsyncpa [#allocation5], 1
    %3149 = vsyncpa [#allocation8], 1
    %3150 = vsyncpa [#allocation11], 1
    %3151 = vsyncpa [#allocation6], 1

</llo_original>
